<compile_context>
chip_gen: v6e
topology: v6e:2x2x1
jax: 0.10.0
libtpu: 0.0.40
codegen_flags: <defaults>
</compile_context>

<pallas_src>
import jax
import jax.numpy as jnp
from jax import lax
from jax.experimental import pallas as pl
from jax.experimental.pallas import tpu as pltpu

REG_MAX = 16
EPS = 1e-7
LANES = 128
CHUNK_ROWS = 16            # one packed bf16 vreg / two f32 vregs per slice
MAX_TILE_ROWS = 128        # 128 * 128 = 16384 anchors per grid step


def _rotated_bbox_loss_kernel(cnt_ref, pd_ref, pb_ref, tba_ref, wf_ref, out_ref):
    reg_max = pd_ref.shape[1]
    tr = pd_ref.shape[2]
    n_chunks = tr // CHUNK_ROWS
    tile = pl.program_id(0)

    @pl.when(cnt_ref[tile] == 0)
    def _():
        # Whole tile is background / padding: partial sums are zero.
        out_ref[...] = jnp.zeros_like(out_ref)

    @pl.when(cnt_ref[tile] > 0)
    def _():
        max_d = float(reg_max - 1) - 0.01

        def chunk_body(c, carry):
            liou_acc, ldfl_acc = carry
            r0 = pl.multiple_of(c * CHUNK_ROWS, CHUNK_ROWS)
            sl = pl.ds(r0, CHUNK_ROWS)

            fg = wf_ref[1, sl, :]                    # (16, 128)
            valid = fg > 0.5
            w = wf_ref[0, sl, :]                     # precomputed target_scores.sum(-1)

            px = pb_ref[0, sl, :]; py = pb_ref[1, sl, :]
            pw = pb_ref[2, sl, :]; ph = pb_ref[3, sl, :]; pr = pb_ref[4, sl, :]
            tx = tba_ref[0, sl, :]; ty = tba_ref[1, sl, :]
            tw = tba_ref[2, sl, :]; th = tba_ref[3, sl, :]; ta = tba_ref[4, sl, :]
            ax = tba_ref[5, sl, :]; ay = tba_ref[6, sl, :]

            # -------------------- probiou (rotated prob. IoU) ----------------
            def cov(bw, bh, ang):
                a = bw * bw * (1.0 / 12.0)
                b = bh * bh * (1.0 / 12.0)
                cc = jnp.cos(ang)
                ss = jnp.sin(ang)
                return (a * cc * cc + b * ss * ss,
                        a * ss * ss + b * cc * cc,
                        (a - b) * cc * ss)

            a1, b1, c1 = cov(pw, ph, pr)
            a2, b2, c2 = cov(tw, th, ta)
            sa, sb, sc = a1 + a2, b1 + b2, c1 + c2
            dx = px - tx
            dy = py - ty
            den = sa * sb - sc * sc
            inv_den = pl.reciprocal(den + EPS, approx=True)     # shared for t1/t2
            t1 = (sa * dy * dy + sb * dx * dx) * (0.25 * inv_den)
            t2 = (sc * (-dx) * dy) * (0.5 * inv_den)
            det1 = jnp.maximum(a1 * b1 - c1 * c1, 0.0)
            det2 = jnp.maximum(a2 * b2 - c2 * c2, 0.0)
            # exact divide inside the log (approx-recip error shows up here)
            t3 = 0.5 * jnp.log(den / (4.0 * jnp.sqrt(det1 * det2) + EPS) + EPS)
            bd = jnp.clip(t1 + t2 + t3, EPS, 100.0)
            hd = jnp.sqrt(1.0 - jnp.exp(-bd) + EPS)
            iou = 1.0 - hd
            # NaN-safe masking of background / padded anchors
            liou_acc = liou_acc + jnp.where(valid, (1.0 - iou) * w, 0.0)

            # ------------------------------ DFL -------------------------------
            hw = tw * 0.5
            hh = th * 0.5
            tgts = (ax - (tx - hw),      # left
                    ay - (ty - hh),      # top
                    (tx + hw) - ax,      # right
                    (ty + hh) - ay)      # bottom
            dfl = jnp.zeros_like(w)
            for s in range(4):                        # per-side: tiny live set
                tgt = jnp.clip(tgts[s], 0.0, max_d)
                # streaming max over bins, loading bf16 straight from the ref
                m = pd_ref[s, 0, sl, :].astype(jnp.float32)
                for k in range(1, reg_max):
                    m = jnp.maximum(m, pd_ref[s, k, sl, :].astype(jnp.float32))
                se = jnp.zeros_like(m)
                sel = jnp.zeros_like(m)
                for k in range(reg_max):
                    pk = pd_ref[s, k, sl, :].astype(jnp.float32)
                    se = se + jnp.exp(pk - m)
                    # triangular weight == wl at bin tl, wr at bin tl+1, else 0
                    wk = jnp.maximum(0.0, 1.0 - jnp.abs(tgt - float(k)))
                    sel = sel + pk * wk
                dfl = dfl + (jnp.log(se) + m - sel)   # == ce_l*wl + ce_r*wr
            dfl = dfl * 0.25                          # mean over the 4 ltrb sides
            ldfl_acc = ldfl_acc + jnp.where(valid, dfl * w, 0.0)
            return liou_acc, ldfl_acc

        zero = jnp.zeros((CHUNK_ROWS, LANES), jnp.float32)
        liou, ldfl = lax.fori_loop(0, n_chunks, chunk_body, (zero, zero))
        out_ref[0, 0] = liou
        out_ref[0, 1] = ldfl


def rotated_bbox_loss(pred_dist, pred_bboxes, anchor_points, target_bboxes,
                      target_scores, target_scores_sum, fg_mask, reg_max=REG_MAX):
    """Layout plumbing (flatten/pad/transpose) + pallas_call + final reduce."""
    B, A, _ = pred_bboxes.shape
    N = B * A
    R = -(-N // LANES)                                         # rows of 128 anchors
    TR = min(MAX_TILE_ROWS, -(-R // CHUNK_ROWS) * CHUNK_ROWS)  # sublane rows / tile
    R_pad = -(-R // TR) * TR
    N_pad = R_pad * LANES
    n_tiles = R_pad // TR

    def to_cm(x):   # (B, A, C) -> (C, R_pad, 128), zero padded on the anchor axis
        c = x.shape[-1]
        xt = jnp.transpose(x.reshape(N, c), (1, 0))
        xt = jnp.pad(xt, ((0, 0), (0, N_pad - N)))
        return xt.reshape(c, R_pad, LANES)

    def to_rows(x):  # (B, A) -> (R_pad, 128)
        xf = jnp.pad(x.reshape(N), (0, N_pad - N))
        return xf.reshape(R_pad, LANES)

    # pred_dist stays in its input dtype (e.g. bf16): halves its HBM->VMEM traffic.
    # TODO(synk): have the head emit (4, reg_max, N) directly to drop this transpose.
    pdt = jnp.transpose(pred_dist.reshape(N, 4, reg_max), (1, 2, 0))
    pdt = jnp.pad(pdt, ((0, 0), (0, 0), (0, N_pad - N))).reshape(4, reg_max, R_pad, LANES)

    pb = to_cm(pred_bboxes.astype(jnp.float32))
    tba = to_cm(jnp.concatenate(
        [target_bboxes.astype(jnp.float32),
         jnp.broadcast_to(anchor_points[None].astype(jnp.float32), (B, A, 2))],
        axis=-1))                                              # (7, R_pad, 128)
    weight = target_scores.astype(jnp.float32).sum(-1)         # hoisted out of kernel
    wf = jnp.stack([to_rows(weight), to_rows(fg_mask.astype(jnp.float32))], axis=0)

    # per-tile foreground counts (SMEM scalar prefetch, gates the kernel body)
    cnt = wf[1].reshape(n_tiles, TR * LANES).sum(axis=-1).astype(jnp.int32)

    parts = pl.pallas_call(
        _rotated_bbox_loss_kernel,
        out_shape=jax.ShapeDtypeStruct((n_tiles, 2, CHUNK_ROWS, LANES), jnp.float32),
        grid_spec=pltpu.PrefetchScalarGridSpec(
            num_scalar_prefetch=1,
            grid=(n_tiles,),
            in_specs=[
                pl.BlockSpec((4, reg_max, TR, LANES), lambda i, c: (0, 0, i, 0)),
                pl.BlockSpec((5, TR, LANES), lambda i, c: (0, i, 0)),
                pl.BlockSpec((7, TR, LANES), lambda i, c: (0, i, 0)),
                pl.BlockSpec((2, TR, LANES), lambda i, c: (0, i, 0)),
            ],
            out_specs=pl.BlockSpec((1, 2, CHUNK_ROWS, LANES),
                                   lambda i, c: (i, 0, 0, 0)),
        ),
        compiler_params=pltpu.CompilerParams(
            dimension_semantics=("parallel",),
            vmem_limit_bytes=16 * 1024 * 1024),
    )(cnt, pdt, pb, tba, wf)

    tss = jnp.asarray(target_scores_sum, jnp.float32)
    return jnp.sum(parts[:, 0]) / tss, jnp.sum(parts[:, 1]) / tss


def _reference(pred_dist, pred_bboxes, anchor_points, target_bboxes,
               target_scores, tss, fg_mask, reg_max=REG_MAX):
    """Pure-JAX reference mirroring the torch semantics (mask instead of gather)."""
    eps = 1e-7
    fg = fg_mask.astype(jnp.float32)
    weight = target_scores.sum(-1)

    def cov(b):
        a = b[..., 2] ** 2 / 12.0
        bb = b[..., 3] ** 2 / 12.0
        r = b[..., 4]
        c, s = jnp.cos(r), jnp.sin(r)
        return a * c * c + bb * s * s, a * s * s + bb * c * c, (a - bb) * c * s

    a1, b1, c1 = cov(pred_bboxes)
    a2, b2, c2 = cov(target_bboxes)
    x1, y1 = pred_bboxes[..., 0], pred_bboxes[..., 1]
    x2, y2 = target_bboxes[..., 0], target_bboxes[..., 1]
    den = (a1 + a2) * (b1 + b2) - (c1 + c2) ** 2
    t1 = ((a1 + a2) * (y1 - y2) ** 2 + (b1 + b2) * (x1 - x2) ** 2) / (den + eps) * 0.25
    t2 = ((c1 + c2) * (x2 - x1) * (y1 - y2)) / (den + eps) * 0.5
    t3 = jnp.log(den / (4 * jnp.sqrt(jnp.clip(a1 * b1 - c1 ** 2, 0)
                                     * jnp.clip(a2 * b2 - c2 ** 2, 0)) + eps) + eps) * 0.5
    bd = jnp.clip(t1 + t2 + t3, eps, 100.0)
    iou = 1.0 - jnp.sqrt(1.0 - jnp.exp(-bd) + eps)
    loss_iou = jnp.sum((1.0 - iou) * weight * fg) / tss

    xy, wh = target_bboxes[..., :2], target_bboxes[..., 2:4]
    ltrb = jnp.concatenate([anchor_points - (xy - wh / 2),
                            (xy + wh / 2) - anchor_points], -1)
    tgt = jnp.clip(ltrb, 0.0, reg_max - 1 - 0.01)
    tl = jnp.floor(tgt)
    wl = tl + 1 - tgt
    wr = 1 - wl
    pd = pred_dist.astype(jnp.float32).reshape(*tgt.shape, reg_max)
    logp = jax.nn.log_softmax(pd, axis=-1)
    tli = tl.astype(jnp.int32)[..., None]
    ce_l = -jnp.take_along_axis(logp, tli, -1)[..., 0]
    ce_r = -jnp.take_along_axis(logp, tli + 1, -1)[..., 0]
    dfl = jnp.mean(ce_l * wl + ce_r * wr, -1)
    loss_dfl = jnp.sum(dfl * weight * fg) / tss
    return loss_iou, loss_dfl


if __name__ == "__main__":
    key = jax.random.PRNGKey(0)
    B, A, NC = 2, 128, 4           # batch=2, 128 anchors (16x8 grid), 4 classes
    k1, k2, k3, k4 = jax.random.split(key, 4)

    # anchor grid (feature-map coordinates)
    ax = (jnp.arange(A) % 16).astype(jnp.float32) + 0.5
    ay = (jnp.arange(A) // 16).astype(jnp.float32) + 0.5
    anchor_points = jnp.stack([ax, ay], axis=-1)                       # (A, 2)

    # rotated boxes: (x, y, w, h, angle)
    def make_boxes(kc, kw, ka):
        ctr = anchor_points[None] + jax.random.uniform(kc, (B, A, 2), minval=-0.5, maxval=0.5)
        wh = jax.random.uniform(kw, (B, A, 2), minval=2.0, maxval=10.0)
        ang = jax.random.uniform(ka, (B, A, 1), minval=-0.7, maxval=0.7)
        return jnp.concatenate([ctr, wh, ang], axis=-1)

    ks = jax.random.split(k1, 6)
    pred_bboxes = make_boxes(ks[0], ks[1], ks[2])                       # (B, A, 5)
    target_bboxes = make_boxes(ks[3], ks[4], ks[5])                     # (B, A, 5)

    # pred_dist kept in bf16 across the pallas_call boundary (upcast per-slice inside)
    pred_dist = jax.random.normal(k2, (B, A, 4 * REG_MAX), jnp.float32).astype(jnp.bfloat16)
    target_scores = jax.random.uniform(k3, (B, A, NC), jnp.float32)
    fg_mask = jax.random.bernoulli(k4, 0.5, (B, A))
    target_scores_sum = jnp.maximum(target_scores.sum(), 1.0)

    liou, ldfl = jax.jit(rotated_bbox_loss)(
        pred_dist, pred_bboxes, anchor_points, target_bboxes,
        target_scores, target_scores_sum, fg_mask)
    jax.block_until_ready((liou, ldfl))

    r_iou, r_dfl = _reference(pred_dist, pred_bboxes, anchor_points, target_bboxes,
                              target_scores, target_scores_sum, fg_mask)
    assert jnp.allclose(liou, r_iou, rtol=2e-3, atol=1e-3), (liou, r_iou)
    assert jnp.allclose(ldfl, r_dfl, rtol=2e-3, atol=1e-3), (ldfl, r_dfl)
    print("KERNEL_OK")
</pallas_src>

<mosaic_0001>
module attributes {stable_mosaic.version = 11 : i64} {
  func.func @_rotated_bbox_loss_kernel(%arg0: i32, %arg1: memref<1xi32, #tpu.memory_space<smem>>, %arg2: memref<4x16x16x128xbf16, #tpu.memory_space<vmem>>, %arg3: memref<5x16x128xf32, #tpu.memory_space<vmem>>, %arg4: memref<7x16x128xf32, #tpu.memory_space<vmem>>, %arg5: memref<2x16x128xf32, #tpu.memory_space<vmem>>, %arg6: memref<1x2x16x128xf32, #tpu.memory_space<vmem>>) attributes {dimension_semantics = [#tpu.dimension_semantics<parallel>], iteration_bounds = array<i64: 1>, scalar_prefetch = 1 : i64, scratch_operands = 0 : i64, tpu.core_type = #tpu.core_type<tc>, window_params = [{transform_indices = @transform_0, window_bounds = array<i64: 4, 16, 16, 128>}, {transform_indices = @transform_1, window_bounds = array<i64: 5, 16, 128>}, {transform_indices = @transform_2, window_bounds = array<i64: 7, 16, 128>}, {transform_indices = @transform_3, window_bounds = array<i64: 2, 16, 128>}, {transform_indices = @transform_4, window_bounds = array<i64: 1, 2, 16, 128>}]} {
    %0 = arith.index_cast %arg0 : i32 to index
    %1 = memref.load %arg1[%0] : memref<1xi32, #tpu.memory_space<smem>>
    %c0_i32 = arith.constant 0 : i32
    %2 = arith.cmpi eq, %1, %c0_i32 : i32
    %3 = arith.extui %2 : i1 to i32
    %c0_i32_0 = arith.constant 0 : i32
    %4 = arith.cmpi ne, %3, %c0_i32_0 : i32
    scf.if %4 {
      %cst = arith.constant 0.000000e+00 : f32
      %10 = vector.broadcast %cst : f32 to vector<1x2x16x128xf32>
      %c0 = arith.constant 0 : index
      %c0_3 = arith.constant 0 : index
      %c0_4 = arith.constant 0 : index
      %c0_5 = arith.constant 0 : index
      %11 = vector.load %arg6[%c0, %c0_3, %c0_4, %c0_5] : memref<1x2x16x128xf32, #tpu.memory_space<vmem>>, vector<1x2x16x128xf32>
      tpu.vector_store %arg6[%c0, %c0_3, %c0_4, %c0_5], %10 {strides = array<i32>} : memref<1x2x16x128xf32, #tpu.memory_space<vmem>>, vector<1x2x16x128xf32>,
    } else {
    }
    %5 = arith.index_cast %arg0 : i32 to index
    %6 = memref.load %arg1[%5] : memref<1xi32, #tpu.memory_space<smem>>
    %c0_i32_1 = arith.constant 0 : i32
    %7 = arith.cmpi sgt, %6, %c0_i32_1 : i32
    %8 = arith.extui %7 : i1 to i32
    %c0_i32_2 = arith.constant 0 : i32
    %9 = arith.cmpi ne, %8, %c0_i32_2 : i32
    scf.if %9 {
      %cst = arith.constant 0.000000e+00 : f32
      %10 = vector.broadcast %cst : f32 to vector<16x128xf32>
      %c0_i32_3 = arith.constant 0 : i32
      %c16_i32 = arith.constant 16 : i32
      %11 = arith.muli %c0_i32_3, %c16_i32 : i32
      %12 = tpu.assume_multiple %11, 16 : i32
      %c1 = arith.constant 1 : index
      %13 = arith.index_cast %12 : i32 to index
      %c0 = arith.constant 0 : index
      %14 = vector.load %arg5[%c1, %13, %c0] : memref<2x16x128xf32, #tpu.memory_space<vmem>>, vector<1x16x128xf32>
      %15 = vector.shape_cast %14 : vector<1x16x128xf32> to vector<16x128xf32>
      %cst_4 = arith.constant 5.000000e-01 : f32
      %16 = vector.broadcast %cst_4 : f32 to vector<16x128xf32>
      %17 = arith.cmpf ogt, %15, %16 : vector<16x128xf32>
      %c0_5 = arith.constant 0 : index
      %18 = arith.index_cast %12 : i32 to index
      %c0_6 = arith.constant 0 : index
      %19 = vector.load %arg5[%c0_5, %18, %c0_6] : memref<2x16x128xf32, #tpu.memory_space<vmem>>, vector<1x16x128xf32>
      %20 = vector.shape_cast %19 : vector<1x16x128xf32> to vector<16x128xf32>
      %c0_7 = arith.constant 0 : index
      %21 = arith.index_cast %12 : i32 to index
      %c0_8 = arith.constant 0 : index
      %22 = vector.load %arg3[%c0_7, %21, %c0_8] : memref<5x16x128xf32, #tpu.memory_space<vmem>>, vector<1x16x128xf32>
      %23 = vector.shape_cast %22 : vector<1x16x128xf32> to vector<16x128xf32>
      %c1_9 = arith.constant 1 : index
      %24 = arith.index_cast %12 : i32 to index
      %c0_10 = arith.constant 0 : index
      %25 = vector.load %arg3[%c1_9, %24, %c0_10] : memref<5x16x128xf32, #tpu.memory_space<vmem>>, vector<1x16x128xf32>
      %26 = vector.shape_cast %25 : vector<1x16x128xf32> to vector<16x128xf32>
      %c2 = arith.constant 2 : index
      %27 = arith.index_cast %12 : i32 to index
      %c0_11 = arith.constant 0 : index
      %28 = vector.load %arg3[%c2, %27, %c0_11] : memref<5x16x128xf32, #tpu.memory_space<vmem>>, vector<1x16x128xf32>
      %29 = vector.shape_cast %28 : vector<1x16x128xf32> to vector<16x128xf32>
      %c3 = arith.constant 3 : index
      %30 = arith.index_cast %12 : i32 to index
      %c0_12 = arith.constant 0 : index
      %31 = vector.load %arg3[%c3, %30, %c0_12] : memref<5x16x128xf32, #tpu.memory_space<vmem>>, vector<1x16x128xf32>
      %32 = vector.shape_cast %31 : vector<1x16x128xf32> to vector<16x128xf32>
      %c4 = arith.constant 4 : index
      %33 = arith.index_cast %12 : i32 to index
      %c0_13 = arith.constant 0 : index
      %34 = vector.load %arg3[%c4, %33, %c0_13] : memref<5x16x128xf32, #tpu.memory_space<vmem>>, vector<1x16x128xf32>
      %35 = vector.shape_cast %34 : vector<1x16x128xf32> to vector<16x128xf32>
      %c0_14 = arith.constant 0 : index
      %36 = arith.index_cast %12 : i32 to index
      %c0_15 = arith.constant 0 : index
      %37 = vector.load %arg4[%c0_14, %36, %c0_15] : memref<7x16x128xf32, #tpu.memory_space<vmem>>, vector<1x16x128xf32>
      %38 = vector.shape_cast %37 : vector<1x16x128xf32> to vector<16x128xf32>
      %c1_16 = arith.constant 1 : index
      %39 = arith.index_cast %12 : i32 to index
      %c0_17 = arith.constant 0 : index
      %40 = vector.load %arg4[%c1_16, %39, %c0_17] : memref<7x16x128xf32, #tpu.memory_space<vmem>>, vector<1x16x128xf32>
      %41 = vector.shape_cast %40 : vector<1x16x128xf32> to vector<16x128xf32>
      %c2_18 = arith.constant 2 : index
      %42 = arith.index_cast %12 : i32 to index
      %c0_19 = arith.constant 0 : index
      %43 = vector.load %arg4[%c2_18, %42, %c0_19] : memref<7x16x128xf32, #tpu.memory_space<vmem>>, vector<1x16x128xf32>
      %44 = vector.shape_cast %43 : vector<1x16x128xf32> to vector<16x128xf32>
      %c3_20 = arith.constant 3 : index
      %45 = arith.index_cast %12 : i32 to index
      %c0_21 = arith.constant 0 : index
      %46 = vector.load %arg4[%c3_20, %45, %c0_21] : memref<7x16x128xf32, #tpu.memory_space<vmem>>, vector<1x16x128xf32>
      %47 = vector.shape_cast %46 : vector<1x16x128xf32> to vector<16x128xf32>
      %c4_22 = arith.constant 4 : index
      %48 = arith.index_cast %12 : i32 to index
      %c0_23 = arith.constant 0 : index
      %49 = vector.load %arg4[%c4_22, %48, %c0_23] : memref<7x16x128xf32, #tpu.memory_space<vmem>>, vector<1x16x128xf32>
      %50 = vector.shape_cast %49 : vector<1x16x128xf32> to vector<16x128xf32>
      %c5 = arith.constant 5 : index
      %51 = arith.index_cast %12 : i32 to index
      %c0_24 = arith.constant 0 : index
      %52 = vector.load %arg4[%c5, %51, %c0_24] : memref<7x16x128xf32, #tpu.memory_space<vmem>>, vector<1x16x128xf32>
      %53 = vector.shape_cast %52 : vector<1x16x128xf32> to vector<16x128xf32>
      %c6 = arith.constant 6 : index
      %54 = arith.index_cast %12 : i32 to index
      %c0_25 = arith.constant 0 : index
      %55 = vector.load %arg4[%c6, %54, %c0_25] : memref<7x16x128xf32, #tpu.memory_space<vmem>>, vector<1x16x128xf32>
      %56 = vector.shape_cast %55 : vector<1x16x128xf32> to vector<16x128xf32>
      %57 = arith.mulf %29, %29 : vector<16x128xf32>
      %cst_26 = arith.constant 0.0833333358 : f32
      %58 = vector.broadcast %cst_26 : f32 to vector<16x128xf32>
      %59 = arith.mulf %57, %58 : vector<16x128xf32>
      %60 = arith.mulf %32, %32 : vector<16x128xf32>
      %cst_27 = arith.constant 0.0833333358 : f32
      %61 = vector.broadcast %cst_27 : f32 to vector<16x128xf32>
      %62 = arith.mulf %60, %61 : vector<16x128xf32>
      %63 = math.cos %35 : vector<16x128xf32>
      %64 = math.sin %35 : vector<16x128xf32>
      %65 = arith.mulf %59, %63 : vector<16x128xf32>
      %66 = arith.mulf %65, %63 : vector<16x128xf32>
      %67 = arith.mulf %62, %64 : vector<16x128xf32>
      %68 = arith.mulf %67, %64 : vector<16x128xf32>
      %69 = arith.addf %66, %68 : vector<16x128xf32>
      %70 = arith.mulf %59, %64 : vector<16x128xf32>
      %71 = arith.mulf %70, %64 : vector<16x128xf32>
      %72 = arith.mulf %62, %63 : vector<16x128xf32>
      %73 = arith.mulf %72, %63 : vector<16x128xf32>
      %74 = arith.addf %71, %73 : vector<16x128xf32>
      %75 = arith.subf %59, %62 : vector<16x128xf32>
      %76 = arith.mulf %75, %63 : vector<16x128xf32>
      %77 = arith.mulf %76, %64 : vector<16x128xf32>
      %78 = arith.mulf %44, %44 : vector<16x128xf32>
      %cst_28 = arith.constant 0.0833333358 : f32
      %79 = vector.broadcast %cst_28 : f32 to vector<16x128xf32>
      %80 = arith.mulf %78, %79 : vector<16x128xf32>
      %81 = arith.mulf %47, %47 : vector<16x128xf32>
      %cst_29 = arith.constant 0.0833333358 : f32
      %82 = vector.broadcast %cst_29 : f32 to vector<16x128xf32>
      %83 = arith.mulf %81, %82 : vector<16x128xf32>
      %84 = math.cos %50 : vector<16x128xf32>
      %85 = math.sin %50 : vector<16x128xf32>
      %86 = arith.mulf %80, %84 : vector<16x128xf32>
      %87 = arith.mulf %86, %84 : vector<16x128xf32>
      %88 = arith.mulf %83, %85 : vector<16x128xf32>
      %89 = arith.mulf %88, %85 : vector<16x128xf32>
      %90 = arith.addf %87, %89 : vector<16x128xf32>
      %91 = arith.mulf %80, %85 : vector<16x128xf32>
      %92 = arith.mulf %91, %85 : vector<16x128xf32>
      %93 = arith.mulf %83, %84 : vector<16x128xf32>
      %94 = arith.mulf %93, %84 : vector<16x128xf32>
      %95 = arith.addf %92, %94 : vector<16x128xf32>
      %96 = arith.subf %80, %83 : vector<16x128xf32>
      %97 = arith.mulf %96, %84 : vector<16x128xf32>
      %98 = arith.mulf %97, %85 : vector<16x128xf32>
      %99 = arith.addf %69, %90 : vector<16x128xf32>
      %100 = arith.addf %74, %95 : vector<16x128xf32>
      %101 = arith.addf %77, %98 : vector<16x128xf32>
      %102 = arith.subf %23, %38 : vector<16x128xf32>
      %103 = arith.subf %26, %41 : vector<16x128xf32>
      %104 = arith.mulf %99, %100 : vector<16x128xf32>
      %105 = arith.mulf %101, %101 : vector<16x128xf32>
      %106 = arith.subf %104, %105 : vector<16x128xf32>
      %cst_30 = arith.constant 1.000000e-07 : f32
      %107 = vector.broadcast %cst_30 : f32 to vector<16x128xf32>
      %108 = arith.addf %106, %107 : vector<16x128xf32>
      %109 = tpu.reciprocal %108 {approx = true} : vector<16x128xf32> -> vector<16x128xf32>
      %110 = arith.mulf %99, %103 : vector<16x128xf32>
      %111 = arith.mulf %110, %103 : vector<16x128xf32>
      %112 = arith.mulf %100, %102 : vector<16x128xf32>
      %113 = arith.mulf %112, %102 : vector<16x128xf32>
      %114 = arith.addf %111, %113 : vector<16x128xf32>
      %cst_31 = arith.constant 2.500000e-01 : f32
      %115 = vector.broadcast %cst_31 : f32 to vector<16x128xf32>
      %116 = arith.mulf %115, %109 : vector<16x128xf32>
      %117 = arith.mulf %114, %116 : vector<16x128xf32>
      %cst_32 = arith.constant 0.000000e+00 : f32
      %118 = vector.broadcast %cst_32 : f32 to vector<16x128xf32>
      %119 = arith.subf %118, %102 : vector<16x128xf32>
      %120 = arith.mulf %101, %119 : vector<16x128xf32>
      %121 = arith.mulf %120, %103 : vector<16x128xf32>
      %cst_33 = arith.constant 5.000000e-01 : f32
      %122 = vector.broadcast %cst_33 : f32 to vector<16x128xf32>
      %123 = arith.mulf %122, %109 : vector<16x128xf32>
      %124 = arith.mulf %121, %123 : vector<16x128xf32>
      %125 = arith.mulf %69, %74 : vector<16x128xf32>
      %126 = arith.mulf %77, %77 : vector<16x128xf32>
      %127 = arith.subf %125, %126 : vector<16x128xf32>
      %cst_34 = arith.constant 0.000000e+00 : f32
      %128 = vector.broadcast %cst_34 : f32 to vector<16x128xf32>
      %129 = arith.maximumf %127, %128 : vector<16x128xf32>
      %130 = arith.mulf %90, %95 : vector<16x128xf32>
      %131 = arith.mulf %98, %98 : vector<16x128xf32>
      %132 = arith.subf %130, %131 : vector<16x128xf32>
      %cst_35 = arith.constant 0.000000e+00 : f32
      %133 = vector.broadcast %cst_35 : f32 to vector<16x128xf32>
      %134 = arith.maximumf %132, %133 : vector<16x128xf32>
      %135 = arith.mulf %129, %134 : vector<16x128xf32>
      %136 = math.sqrt %135 : vector<16x128xf32>
      %cst_36 = arith.constant 4.000000e+00 : f32
      %137 = vector.broadcast %cst_36 : f32 to vector<16x128xf32>
      %138 = arith.mulf %137, %136 : vector<16x128xf32>
      %cst_37 = arith.constant 1.000000e-07 : f32
      %139 = vector.broadcast %cst_37 : f32 to vector<16x128xf32>
      %140 = arith.addf %138, %139 : vector<16x128xf32>
      %141 = arith.divf %106, %140 : vector<16x128xf32>
      %cst_38 = arith.constant 1.000000e-07 : f32
      %142 = vector.broadcast %cst_38 : f32 to vector<16x128xf32>
      %143 = arith.addf %141, %142 : vector<16x128xf32>
      %144 = math.log %143 : vector<16x128xf32>
      %cst_39 = arith.constant 5.000000e-01 : f32
      %145 = vector.broadcast %cst_39 : f32 to vector<16x128xf32>
      %146 = arith.mulf %145, %144 : vector<16x128xf32>
      %147 = arith.addf %117, %124 : vector<16x128xf32>
      %148 = arith.addf %147, %146 : vector<16x128xf32>
      %cst_40 = arith.constant 1.000000e-07 : f32
      %cst_41 = arith.constant 1.000000e+02 : f32
      %149 = vector.broadcast %cst_40 : f32 to vector<16x128xf32>
      %150 = arith.maximumf %149, %148 : vector<16x128xf32>
      %151 = vector.broadcast %cst_41 : f32 to vector<16x128xf32>
      %152 = arith.minimumf %151, %150 : vector<16x128xf32>
      %cst_42 = arith.constant 0.000000e+00 : f32
      %153 = vector.broadcast %cst_42 : f32 to vector<16x128xf32>
      %154 = arith.subf %153, %152 : vector<16x128xf32>
      %155 = math.exp %154 : vector<16x128xf32>
      %cst_43 = arith.constant 1.000000e+00 : f32
      %156 = vector.broadcast %cst_43 : f32 to vector<16x128xf32>
      %157 = arith.subf %156, %155 : vector<16x128xf32>
      %cst_44 = arith.constant 1.000000e-07 : f32
      %158 = vector.broadcast %cst_44 : f32 to vector<16x128xf32>
      %159 = arith.addf %157, %158 : vector<16x128xf32>
      %160 = math.sqrt %159 : vector<16x128xf32>
      %cst_45 = arith.constant 1.000000e+00 : f32
      %161 = vector.broadcast %cst_45 : f32 to vector<16x128xf32>
      %162 = arith.subf %161, %160 : vector<16x128xf32>
      %cst_46 = arith.constant 1.000000e+00 : f32
      %163 = vector.broadcast %cst_46 : f32 to vector<16x128xf32>
      %164 = arith.subf %163, %162 : vector<16x128xf32>
      %165 = arith.mulf %164, %20 : vector<16x128xf32>
      %cst_47 = arith.constant 0.000000e+00 : f32
      %166 = vector.broadcast %cst_47 : f32 to vector<16x128xf32>
      %167 = arith.select %17, %165, %166 : vector<16x128xi1>, vector<16x128xf32>
      %168 = arith.addf %10, %167 : vector<16x128xf32>
      %cst_48 = arith.constant 5.000000e-01 : f32
      %169 = vector.broadcast %cst_48 : f32 to vector<16x128xf32>
      %170 = arith.mulf %44, %169 : vector<16x128xf32>
      %cst_49 = arith.constant 5.000000e-01 : f32
      %171 = vector.broadcast %cst_49 : f32 to vector<16x128xf32>
      %172 = arith.mulf %47, %171 : vector<16x128xf32>
      %173 = arith.subf %38, %170 : vector<16x128xf32>
      %174 = arith.subf %53, %173 : vector<16x128xf32>
      %175 = arith.subf %41, %172 : vector<16x128xf32>
      %176 = arith.subf %56, %175 : vector<16x128xf32>
      %177 = arith.addf %38, %170 : vector<16x128xf32>
      %178 = arith.subf %177, %53 : vector<16x128xf32>
      %179 = arith.addf %41, %172 : vector<16x128xf32>
      %180 = arith.subf %179, %56 : vector<16x128xf32>
      %cst_50 = arith.constant 0.000000e+00 : f32
      %181 = vector.broadcast %cst_50 : f32 to vector<16x128xf32>
      %cst_51 = arith.constant 0.000000e+00 : f32
      %cst_52 = arith.constant 1.499000e+01 : f32
      %182 = vector.broadcast %cst_51 : f32 to vector<16x128xf32>
      %183 = arith.maximumf %182, %174 : vector<16x128xf32>
      %184 = vector.broadcast %cst_52 : f32 to vector<16x128xf32>
      %185 = arith.minimumf %184, %183 : vector<16x128xf32>
      %c0_53 = arith.constant 0 : index
      %c0_54 = arith.constant 0 : index
      %186 = arith.index_cast %12 : i32 to index
      %c0_55 = arith.constant 0 : index
      %187 = vector.load %arg2[%c0_53, %c0_54, %186, %c0_55] : memref<4x16x16x128xbf16, #tpu.memory_space<vmem>>, vector<1x1x16x128xbf16>
      %188 = vector.shape_cast %187 : vector<1x1x16x128xbf16> to vector<16x128xbf16>
      %189 = arith.extf %188 : vector<16x128xbf16> to vector<16x128xf32>
      %c0_56 = arith.constant 0 : index
      %c1_57 = arith.constant 1 : index
      %190 = arith.index_cast %12 : i32 to index
      %c0_58 = arith.constant 0 : index
      %191 = vector.load %arg2[%c0_56, %c1_57, %190, %c0_58] : memref<4x16x16x128xbf16, #tpu.memory_space<vmem>>, vector<1x1x16x128xbf16>
      %192 = vector.shape_cast %191 : vector<1x1x16x128xbf16> to vector<16x128xbf16>
      %193 = arith.extf %192 : vector<16x128xbf16> to vector<16x128xf32>
      %194 = arith.maximumf %189, %193 : vector<16x128xf32>
      %c0_59 = arith.constant 0 : index
      %c2_60 = arith.constant 2 : index
      %195 = arith.index_cast %12 : i32 to index
      %c0_61 = arith.constant 0 : index
      %196 = vector.load %arg2[%c0_59, %c2_60, %195, %c0_61] : memref<4x16x16x128xbf16, #tpu.memory_space<vmem>>, vector<1x1x16x128xbf16>
      %197 = vector.shape_cast %196 : vector<1x1x16x128xbf16> to vector<16x128xbf16>
      %198 = arith.extf %197 : vector<16x128xbf16> to vector<16x128xf32>
      %199 = arith.maximumf %194, %198 : vector<16x128xf32>
      %c0_62 = arith.constant 0 : index
      %c3_63 = arith.constant 3 : index
      %200 = arith.index_cast %12 : i32 to index
      %c0_64 = arith.constant 0 : index
      %201 = vector.load %arg2[%c0_62, %c3_63, %200, %c0_64] : memref<4x16x16x128xbf16, #tpu.memory_space<vmem>>, vector<1x1x16x128xbf16>
      %202 = vector.shape_cast %201 : vector<1x1x16x128xbf16> to vector<16x128xbf16>
      %203 = arith.extf %202 : vector<16x128xbf16> to vector<16x128xf32>
      %204 = arith.maximumf %199, %203 : vector<16x128xf32>
      %c0_65 = arith.constant 0 : index
      %c4_66 = arith.constant 4 : index
      %205 = arith.index_cast %12 : i32 to index
      %c0_67 = arith.constant 0 : index
      %206 = vector.load %arg2[%c0_65, %c4_66, %205, %c0_67] : memref<4x16x16x128xbf16, #tpu.memory_space<vmem>>, vector<1x1x16x128xbf16>
      %207 = vector.shape_cast %206 : vector<1x1x16x128xbf16> to vector<16x128xbf16>
      %208 = arith.extf %207 : vector<16x128xbf16> to vector<16x128xf32>
      %209 = arith.maximumf %204, %208 : vector<16x128xf32>
      %c0_68 = arith.constant 0 : index
      %c5_69 = arith.constant 5 : index
      %210 = arith.index_cast %12 : i32 to index
      %c0_70 = arith.constant 0 : index
      %211 = vector.load %arg2[%c0_68, %c5_69, %210, %c0_70] : memref<4x16x16x128xbf16, #tpu.memory_space<vmem>>, vector<1x1x16x128xbf16>
      %212 = vector.shape_cast %211 : vector<1x1x16x128xbf16> to vector<16x128xbf16>
      %213 = arith.extf %212 : vector<16x128xbf16> to vector<16x128xf32>
      %214 = arith.maximumf %209, %213 : vector<16x128xf32>
      %c0_71 = arith.constant 0 : index
      %c6_72 = arith.constant 6 : index
      %215 = arith.index_cast %12 : i32 to index
      %c0_73 = arith.constant 0 : index
      %216 = vector.load %arg2[%c0_71, %c6_72, %215, %c0_73] : memref<4x16x16x128xbf16, #tpu.memory_space<vmem>>, vector<1x1x16x128xbf16>
      %217 = vector.shape_cast %216 : vector<1x1x16x128xbf16> to vector<16x128xbf16>
      %218 = arith.extf %217 : vector<16x128xbf16> to vector<16x128xf32>
      %219 = arith.maximumf %214, %218 : vector<16x128xf32>
      %c0_74 = arith.constant 0 : index
      %c7 = arith.constant 7 : index
      %220 = arith.index_cast %12 : i32 to index
      %c0_75 = arith.constant 0 : index
      %221 = vector.load %arg2[%c0_74, %c7, %220, %c0_75] : memref<4x16x16x128xbf16, #tpu.memory_space<vmem>>, vector<1x1x16x128xbf16>
      %222 = vector.shape_cast %221 : vector<1x1x16x128xbf16> to vector<16x128xbf16>
      %223 = arith.extf %222 : vector<16x128xbf16> to vector<16x128xf32>
      %224 = arith.maximumf %219, %223 : vector<16x128xf32>
      %c0_76 = arith.constant 0 : index
      %c8 = arith.constant 8 : index
      %225 = arith.index_cast %12 : i32 to index
      %c0_77 = arith.constant 0 : index
      %226 = vector.load %arg2[%c0_76, %c8, %225, %c0_77] : memref<4x16x16x128xbf16, #tpu.memory_space<vmem>>, vector<1x1x16x128xbf16>
      %227 = vector.shape_cast %226 : vector<1x1x16x128xbf16> to vector<16x128xbf16>
      %228 = arith.extf %227 : vector<16x128xbf16> to vector<16x128xf32>
      %229 = arith.maximumf %224, %228 : vector<16x128xf32>
      %c0_78 = arith.constant 0 : index
      %c9 = arith.constant 9 : index
      %230 = arith.index_cast %12 : i32 to index
      %c0_79 = arith.constant 0 : index
      %231 = vector.load %arg2[%c0_78, %c9, %230, %c0_79] : memref<4x16x16x128xbf16, #tpu.memory_space<vmem>>, vector<1x1x16x128xbf16>
      %232 = vector.shape_cast %231 : vector<1x1x16x128xbf16> to vector<16x128xbf16>
      %233 = arith.extf %232 : vector<16x128xbf16> to vector<16x128xf32>
      %234 = arith.maximumf %229, %233 : vector<16x128xf32>
      %c0_80 = arith.constant 0 : index
      %c10 = arith.constant 10 : index
      %235 = arith.index_cast %12 : i32 to index
      %c0_81 = arith.constant 0 : index
      %236 = vector.load %arg2[%c0_80, %c10, %235, %c0_81] : memref<4x16x16x128xbf16, #tpu.memory_space<vmem>>, vector<1x1x16x128xbf16>
      %237 = vector.shape_cast %236 : vector<1x1x16x128xbf16> to vector<16x128xbf16>
      %238 = arith.extf %237 : vector<16x128xbf16> to vector<16x128xf32>
      %239 = arith.maximumf %234, %238 : vector<16x128xf32>
      %c0_82 = arith.constant 0 : index
      %c11 = arith.constant 11 : index
      %240 = arith.index_cast %12 : i32 to index
      %c0_83 = arith.constant 0 : index
      %241 = vector.load %arg2[%c0_82, %c11, %240, %c0_83] : memref<4x16x16x128xbf16, #tpu.memory_space<vmem>>, vector<1x1x16x128xbf16>
      %242 = vector.shape_cast %241 : vector<1x1x16x128xbf16> to vector<16x128xbf16>
      %243 = arith.extf %242 : vector<16x128xbf16> to vector<16x128xf32>
      %244 = arith.maximumf %239, %243 : vector<16x128xf32>
      %c0_84 = arith.constant 0 : index
      %c12 = arith.constant 12 : index
      %245 = arith.index_cast %12 : i32 to index
      %c0_85 = arith.constant 0 : index
      %246 = vector.load %arg2[%c0_84, %c12, %245, %c0_85] : memref<4x16x16x128xbf16, #tpu.memory_space<vmem>>, vector<1x1x16x128xbf16>
      %247 = vector.shape_cast %246 : vector<1x1x16x128xbf16> to vector<16x128xbf16>
      %248 = arith.extf %247 : vector<16x128xbf16> to vector<16x128xf32>
      %249 = arith.maximumf %244, %248 : vector<16x128xf32>
      %c0_86 = arith.constant 0 : index
      %c13 = arith.constant 13 : index
      %250 = arith.index_cast %12 : i32 to index
      %c0_87 = arith.constant 0 : index
      %251 = vector.load %arg2[%c0_86, %c13, %250, %c0_87] : memref<4x16x16x128xbf16, #tpu.memory_space<vmem>>, vector<1x1x16x128xbf16>
      %252 = vector.shape_cast %251 : vector<1x1x16x128xbf16> to vector<16x128xbf16>
      %253 = arith.extf %252 : vector<16x128xbf16> to vector<16x128xf32>
      %254 = arith.maximumf %249, %253 : vector<16x128xf32>
      %c0_88 = arith.constant 0 : index
      %c14 = arith.constant 14 : index
      %255 = arith.index_cast %12 : i32 to index
      %c0_89 = arith.constant 0 : index
      %256 = vector.load %arg2[%c0_88, %c14, %255, %c0_89] : memref<4x16x16x128xbf16, #tpu.memory_space<vmem>>, vector<1x1x16x128xbf16>
      %257 = vector.shape_cast %256 : vector<1x1x16x128xbf16> to vector<16x128xbf16>
      %258 = arith.extf %257 : vector<16x128xbf16> to vector<16x128xf32>
      %259 = arith.maximumf %254, %258 : vector<16x128xf32>
      %c0_90 = arith.constant 0 : index
      %c15 = arith.constant 15 : index
      %260 = arith.index_cast %12 : i32 to index
      %c0_91 = arith.constant 0 : index
      %261 = vector.load %arg2[%c0_90, %c15, %260, %c0_91] : memref<4x16x16x128xbf16, #tpu.memory_space<vmem>>, vector<1x1x16x128xbf16>
      %262 = vector.shape_cast %261 : vector<1x1x16x128xbf16> to vector<16x128xbf16>
      %263 = arith.extf %262 : vector<16x128xbf16> to vector<16x128xf32>
      %264 = arith.maximumf %259, %263 : vector<16x128xf32>
      %cst_92 = arith.constant 0.000000e+00 : f32
      %265 = vector.broadcast %cst_92 : f32 to vector<16x128xf32>
      %cst_93 = arith.constant 0.000000e+00 : f32
      %266 = vector.broadcast %cst_93 : f32 to vector<16x128xf32>
      %c0_94 = arith.constant 0 : index
      %c0_95 = arith.constant 0 : index
      %267 = arith.index_cast %12 : i32 to index
      %c0_96 = arith.constant 0 : index
      %268 = vector.load %arg2[%c0_94, %c0_95, %267, %c0_96] : memref<4x16x16x128xbf16, #tpu.memory_space<vmem>>, vector<1x1x16x128xbf16>
      %269 = vector.shape_cast %268 : vector<1x1x16x128xbf16> to vector<16x128xbf16>
      %270 = arith.extf %269 : vector<16x128xbf16> to vector<16x128xf32>
      %271 = arith.subf %270, %264 : vector<16x128xf32>
      %272 = math.exp %271 : vector<16x128xf32>
      %273 = arith.addf %265, %272 : vector<16x128xf32>
      %cst_97 = arith.constant 0.000000e+00 : f32
      %274 = vector.broadcast %cst_97 : f32 to vector<16x128xf32>
      %275 = arith.subf %185, %274 : vector<16x128xf32>
      %276 = math.absf %275 : vector<16x128xf32>
      %cst_98 = arith.constant 1.000000e+00 : f32
      %277 = vector.broadcast %cst_98 : f32 to vector<16x128xf32>
      %278 = arith.subf %277, %276 : vector<16x128xf32>
      %cst_99 = arith.constant 0.000000e+00 : f32
      %279 = vector.broadcast %cst_99 : f32 to vector<16x128xf32>
      %280 = arith.maximumf %279, %278 : vector<16x128xf32>
      %281 = arith.mulf %270, %280 : vector<16x128xf32>
      %282 = arith.addf %266, %281 : vector<16x128xf32>
      %c0_100 = arith.constant 0 : index
      %c1_101 = arith.constant 1 : index
      %283 = arith.index_cast %12 : i32 to index
      %c0_102 = arith.constant 0 : index
      %284 = vector.load %arg2[%c0_100, %c1_101, %283, %c0_102] : memref<4x16x16x128xbf16, #tpu.memory_space<vmem>>, vector<1x1x16x128xbf16>
      %285 = vector.shape_cast %284 : vector<1x1x16x128xbf16> to vector<16x128xbf16>
      %286 = arith.extf %285 : vector<16x128xbf16> to vector<16x128xf32>
      %287 = arith.subf %286, %264 : vector<16x128xf32>
      %288 = math.exp %287 : vector<16x128xf32>
      %289 = arith.addf %273, %288 : vector<16x128xf32>
      %cst_103 = arith.constant 1.000000e+00 : f32
      %290 = vector.broadcast %cst_103 : f32 to vector<16x128xf32>
      %291 = arith.subf %185, %290 : vector<16x128xf32>
      %292 = math.absf %291 : vector<16x128xf32>
      %cst_104 = arith.constant 1.000000e+00 : f32
      %293 = vector.broadcast %cst_104 : f32 to vector<16x128xf32>
      %294 = arith.subf %293, %292 : vector<16x128xf32>
      %cst_105 = arith.constant 0.000000e+00 : f32
      %295 = vector.broadcast %cst_105 : f32 to vector<16x128xf32>
      %296 = arith.maximumf %295, %294 : vector<16x128xf32>
      %297 = arith.mulf %286, %296 : vector<16x128xf32>
      %298 = arith.addf %282, %297 : vector<16x128xf32>
      %c0_106 = arith.constant 0 : index
      %c2_107 = arith.constant 2 : index
      %299 = arith.index_cast %12 : i32 to index
      %c0_108 = arith.constant 0 : index
      %300 = vector.load %arg2[%c0_106, %c2_107, %299, %c0_108] : memref<4x16x16x128xbf16, #tpu.memory_space<vmem>>, vector<1x1x16x128xbf16>
      %301 = vector.shape_cast %300 : vector<1x1x16x128xbf16> to vector<16x128xbf16>
      %302 = arith.extf %301 : vector<16x128xbf16> to vector<16x128xf32>
      %303 = arith.subf %302, %264 : vector<16x128xf32>
      %304 = math.exp %303 : vector<16x128xf32>
      %305 = arith.addf %289, %304 : vector<16x128xf32>
      %cst_109 = arith.constant 2.000000e+00 : f32
      %306 = vector.broadcast %cst_109 : f32 to vector<16x128xf32>
      %307 = arith.subf %185, %306 : vector<16x128xf32>
      %308 = math.absf %307 : vector<16x128xf32>
      %cst_110 = arith.constant 1.000000e+00 : f32
      %309 = vector.broadcast %cst_110 : f32 to vector<16x128xf32>
      %310 = arith.subf %309, %308 : vector<16x128xf32>
      %cst_111 = arith.constant 0.000000e+00 : f32
      %311 = vector.broadcast %cst_111 : f32 to vector<16x128xf32>
      %312 = arith.maximumf %311, %310 : vector<16x128xf32>
      %313 = arith.mulf %302, %312 : vector<16x128xf32>
      %314 = arith.addf %298, %313 : vector<16x128xf32>
      %c0_112 = arith.constant 0 : index
      %c3_113 = arith.constant 3 : index
      %315 = arith.index_cast %12 : i32 to index
      %c0_114 = arith.constant 0 : index
      %316 = vector.load %arg2[%c0_112, %c3_113, %315, %c0_114] : memref<4x16x16x128xbf16, #tpu.memory_space<vmem>>, vector<1x1x16x128xbf16>
      %317 = vector.shape_cast %316 : vector<1x1x16x128xbf16> to vector<16x128xbf16>
      %318 = arith.extf %317 : vector<16x128xbf16> to vector<16x128xf32>
      %319 = arith.subf %318, %264 : vector<16x128xf32>
      %320 = math.exp %319 : vector<16x128xf32>
      %321 = arith.addf %305, %320 : vector<16x128xf32>
      %cst_115 = arith.constant 3.000000e+00 : f32
      %322 = vector.broadcast %cst_115 : f32 to vector<16x128xf32>
      %323 = arith.subf %185, %322 : vector<16x128xf32>
      %324 = math.absf %323 : vector<16x128xf32>
      %cst_116 = arith.constant 1.000000e+00 : f32
      %325 = vector.broadcast %cst_116 : f32 to vector<16x128xf32>
      %326 = arith.subf %325, %324 : vector<16x128xf32>
      %cst_117 = arith.constant 0.000000e+00 : f32
      %327 = vector.broadcast %cst_117 : f32 to vector<16x128xf32>
      %328 = arith.maximumf %327, %326 : vector<16x128xf32>
      %329 = arith.mulf %318, %328 : vector<16x128xf32>
      %330 = arith.addf %314, %329 : vector<16x128xf32>
      %c0_118 = arith.constant 0 : index
      %c4_119 = arith.constant 4 : index
      %331 = arith.index_cast %12 : i32 to index
      %c0_120 = arith.constant 0 : index
      %332 = vector.load %arg2[%c0_118, %c4_119, %331, %c0_120] : memref<4x16x16x128xbf16, #tpu.memory_space<vmem>>, vector<1x1x16x128xbf16>
      %333 = vector.shape_cast %332 : vector<1x1x16x128xbf16> to vector<16x128xbf16>
      %334 = arith.extf %333 : vector<16x128xbf16> to vector<16x128xf32>
      %335 = arith.subf %334, %264 : vector<16x128xf32>
      %336 = math.exp %335 : vector<16x128xf32>
      %337 = arith.addf %321, %336 : vector<16x128xf32>
      %cst_121 = arith.constant 4.000000e+00 : f32
      %338 = vector.broadcast %cst_121 : f32 to vector<16x128xf32>
      %339 = arith.subf %185, %338 : vector<16x128xf32>
      %340 = math.absf %339 : vector<16x128xf32>
      %cst_122 = arith.constant 1.000000e+00 : f32
      %341 = vector.broadcast %cst_122 : f32 to vector<16x128xf32>
      %342 = arith.subf %341, %340 : vector<16x128xf32>
      %cst_123 = arith.constant 0.000000e+00 : f32
      %343 = vector.broadcast %cst_123 : f32 to vector<16x128xf32>
      %344 = arith.maximumf %343, %342 : vector<16x128xf32>
      %345 = arith.mulf %334, %344 : vector<16x128xf32>
      %346 = arith.addf %330, %345 : vector<16x128xf32>
      %c0_124 = arith.constant 0 : index
      %c5_125 = arith.constant 5 : index
      %347 = arith.index_cast %12 : i32 to index
      %c0_126 = arith.constant 0 : index
      %348 = vector.load %arg2[%c0_124, %c5_125, %347, %c0_126] : memref<4x16x16x128xbf16, #tpu.memory_space<vmem>>, vector<1x1x16x128xbf16>
      %349 = vector.shape_cast %348 : vector<1x1x16x128xbf16> to vector<16x128xbf16>
      %350 = arith.extf %349 : vector<16x128xbf16> to vector<16x128xf32>
      %351 = arith.subf %350, %264 : vector<16x128xf32>
      %352 = math.exp %351 : vector<16x128xf32>
      %353 = arith.addf %337, %352 : vector<16x128xf32>
      %cst_127 = arith.constant 5.000000e+00 : f32
      %354 = vector.broadcast %cst_127 : f32 to vector<16x128xf32>
      %355 = arith.subf %185, %354 : vector<16x128xf32>
      %356 = math.absf %355 : vector<16x128xf32>
      %cst_128 = arith.constant 1.000000e+00 : f32
      %357 = vector.broadcast %cst_128 : f32 to vector<16x128xf32>
      %358 = arith.subf %357, %356 : vector<16x128xf32>
      %cst_129 = arith.constant 0.000000e+00 : f32
      %359 = vector.broadcast %cst_129 : f32 to vector<16x128xf32>
      %360 = arith.maximumf %359, %358 : vector<16x128xf32>
      %361 = arith.mulf %350, %360 : vector<16x128xf32>
      %362 = arith.addf %346, %361 : vector<16x128xf32>
      %c0_130 = arith.constant 0 : index
      %c6_131 = arith.constant 6 : index
      %363 = arith.index_cast %12 : i32 to index
      %c0_132 = arith.constant 0 : index
      %364 = vector.load %arg2[%c0_130, %c6_131, %363, %c0_132] : memref<4x16x16x128xbf16, #tpu.memory_space<vmem>>, vector<1x1x16x128xbf16>
      %365 = vector.shape_cast %364 : vector<1x1x16x128xbf16> to vector<16x128xbf16>
      %366 = arith.extf %365 : vector<16x128xbf16> to vector<16x128xf32>
      %367 = arith.subf %366, %264 : vector<16x128xf32>
      %368 = math.exp %367 : vector<16x128xf32>
      %369 = arith.addf %353, %368 : vector<16x128xf32>
      %cst_133 = arith.constant 6.000000e+00 : f32
      %370 = vector.broadcast %cst_133 : f32 to vector<16x128xf32>
      %371 = arith.subf %185, %370 : vector<16x128xf32>
      %372 = math.absf %371 : vector<16x128xf32>
      %cst_134 = arith.constant 1.000000e+00 : f32
      %373 = vector.broadcast %cst_134 : f32 to vector<16x128xf32>
      %374 = arith.subf %373, %372 : vector<16x128xf32>
      %cst_135 = arith.constant 0.000000e+00 : f32
      %375 = vector.broadcast %cst_135 : f32 to vector<16x128xf32>
      %376 = arith.maximumf %375, %374 : vector<16x128xf32>
      %377 = arith.mulf %366, %376 : vector<16x128xf32>
      %378 = arith.addf %362, %377 : vector<16x128xf32>
      %c0_136 = arith.constant 0 : index
      %c7_137 = arith.constant 7 : index
      %379 = arith.index_cast %12 : i32 to index
      %c0_138 = arith.constant 0 : index
      %380 = vector.load %arg2[%c0_136, %c7_137, %379, %c0_138] : memref<4x16x16x128xbf16, #tpu.memory_space<vmem>>, vector<1x1x16x128xbf16>
      %381 = vector.shape_cast %380 : vector<1x1x16x128xbf16> to vector<16x128xbf16>
      %382 = arith.extf %381 : vector<16x128xbf16> to vector<16x128xf32>
      %383 = arith.subf %382, %264 : vector<16x128xf32>
      %384 = math.exp %383 : vector<16x128xf32>
      %385 = arith.addf %369, %384 : vector<16x128xf32>
      %cst_139 = arith.constant 7.000000e+00 : f32
      %386 = vector.broadcast %cst_139 : f32 to vector<16x128xf32>
      %387 = arith.subf %185, %386 : vector<16x128xf32>
      %388 = math.absf %387 : vector<16x128xf32>
      %cst_140 = arith.constant 1.000000e+00 : f32
      %389 = vector.broadcast %cst_140 : f32 to vector<16x128xf32>
      %390 = arith.subf %389, %388 : vector<16x128xf32>
      %cst_141 = arith.constant 0.000000e+00 : f32
      %391 = vector.broadcast %cst_141 : f32 to vector<16x128xf32>
      %392 = arith.maximumf %391, %390 : vector<16x128xf32>
      %393 = arith.mulf %382, %392 : vector<16x128xf32>
      %394 = arith.addf %378, %393 : vector<16x128xf32>
      %c0_142 = arith.constant 0 : index
      %c8_143 = arith.constant 8 : index
      %395 = arith.index_cast %12 : i32 to index
      %c0_144 = arith.constant 0 : index
      %396 = vector.load %arg2[%c0_142, %c8_143, %395, %c0_144] : memref<4x16x16x128xbf16, #tpu.memory_space<vmem>>, vector<1x1x16x128xbf16>
      %397 = vector.shape_cast %396 : vector<1x1x16x128xbf16> to vector<16x128xbf16>
      %398 = arith.extf %397 : vector<16x128xbf16> to vector<16x128xf32>
      %399 = arith.subf %398, %264 : vector<16x128xf32>
      %400 = math.exp %399 : vector<16x128xf32>
      %401 = arith.addf %385, %400 : vector<16x128xf32>
      %cst_145 = arith.constant 8.000000e+00 : f32
      %402 = vector.broadcast %cst_145 : f32 to vector<16x128xf32>
      %403 = arith.subf %185, %402 : vector<16x128xf32>
      %404 = math.absf %403 : vector<16x128xf32>
      %cst_146 = arith.constant 1.000000e+00 : f32
      %405 = vector.broadcast %cst_146 : f32 to vector<16x128xf32>
      %406 = arith.subf %405, %404 : vector<16x128xf32>
      %cst_147 = arith.constant 0.000000e+00 : f32
      %407 = vector.broadcast %cst_147 : f32 to vector<16x128xf32>
      %408 = arith.maximumf %407, %406 : vector<16x128xf32>
      %409 = arith.mulf %398, %408 : vector<16x128xf32>
      %410 = arith.addf %394, %409 : vector<16x128xf32>
      %c0_148 = arith.constant 0 : index
      %c9_149 = arith.constant 9 : index
      %411 = arith.index_cast %12 : i32 to index
      %c0_150 = arith.constant 0 : index
      %412 = vector.load %arg2[%c0_148, %c9_149, %411, %c0_150] : memref<4x16x16x128xbf16, #tpu.memory_space<vmem>>, vector<1x1x16x128xbf16>
      %413 = vector.shape_cast %412 : vector<1x1x16x128xbf16> to vector<16x128xbf16>
      %414 = arith.extf %413 : vector<16x128xbf16> to vector<16x128xf32>
      %415 = arith.subf %414, %264 : vector<16x128xf32>
      %416 = math.exp %415 : vector<16x128xf32>
      %417 = arith.addf %401, %416 : vector<16x128xf32>
      %cst_151 = arith.constant 9.000000e+00 : f32
      %418 = vector.broadcast %cst_151 : f32 to vector<16x128xf32>
      %419 = arith.subf %185, %418 : vector<16x128xf32>
      %420 = math.absf %419 : vector<16x128xf32>
      %cst_152 = arith.constant 1.000000e+00 : f32
      %421 = vector.broadcast %cst_152 : f32 to vector<16x128xf32>
      %422 = arith.subf %421, %420 : vector<16x128xf32>
      %cst_153 = arith.constant 0.000000e+00 : f32
      %423 = vector.broadcast %cst_153 : f32 to vector<16x128xf32>
      %424 = arith.maximumf %423, %422 : vector<16x128xf32>
      %425 = arith.mulf %414, %424 : vector<16x128xf32>
      %426 = arith.addf %410, %425 : vector<16x128xf32>
      %c0_154 = arith.constant 0 : index
      %c10_155 = arith.constant 10 : index
      %427 = arith.index_cast %12 : i32 to index
      %c0_156 = arith.constant 0 : index
      %428 = vector.load %arg2[%c0_154, %c10_155, %427, %c0_156] : memref<4x16x16x128xbf16, #tpu.memory_space<vmem>>, vector<1x1x16x128xbf16>
      %429 = vector.shape_cast %428 : vector<1x1x16x128xbf16> to vector<16x128xbf16>
      %430 = arith.extf %429 : vector<16x128xbf16> to vector<16x128xf32>
      %431 = arith.subf %430, %264 : vector<16x128xf32>
      %432 = math.exp %431 : vector<16x128xf32>
      %433 = arith.addf %417, %432 : vector<16x128xf32>
      %cst_157 = arith.constant 1.000000e+01 : f32
      %434 = vector.broadcast %cst_157 : f32 to vector<16x128xf32>
      %435 = arith.subf %185, %434 : vector<16x128xf32>
      %436 = math.absf %435 : vector<16x128xf32>
      %cst_158 = arith.constant 1.000000e+00 : f32
      %437 = vector.broadcast %cst_158 : f32 to vector<16x128xf32>
      %438 = arith.subf %437, %436 : vector<16x128xf32>
      %cst_159 = arith.constant 0.000000e+00 : f32
      %439 = vector.broadcast %cst_159 : f32 to vector<16x128xf32>
      %440 = arith.maximumf %439, %438 : vector<16x128xf32>
      %441 = arith.mulf %430, %440 : vector<16x128xf32>
      %442 = arith.addf %426, %441 : vector<16x128xf32>
      %c0_160 = arith.constant 0 : index
      %c11_161 = arith.constant 11 : index
      %443 = arith.index_cast %12 : i32 to index
      %c0_162 = arith.constant 0 : index
      %444 = vector.load %arg2[%c0_160, %c11_161, %443, %c0_162] : memref<4x16x16x128xbf16, #tpu.memory_space<vmem>>, vector<1x1x16x128xbf16>
      %445 = vector.shape_cast %444 : vector<1x1x16x128xbf16> to vector<16x128xbf16>
      %446 = arith.extf %445 : vector<16x128xbf16> to vector<16x128xf32>
      %447 = arith.subf %446, %264 : vector<16x128xf32>
      %448 = math.exp %447 : vector<16x128xf32>
      %449 = arith.addf %433, %448 : vector<16x128xf32>
      %cst_163 = arith.constant 1.100000e+01 : f32
      %450 = vector.broadcast %cst_163 : f32 to vector<16x128xf32>
      %451 = arith.subf %185, %450 : vector<16x128xf32>
      %452 = math.absf %451 : vector<16x128xf32>
      %cst_164 = arith.constant 1.000000e+00 : f32
      %453 = vector.broadcast %cst_164 : f32 to vector<16x128xf32>
      %454 = arith.subf %453, %452 : vector<16x128xf32>
      %cst_165 = arith.constant 0.000000e+00 : f32
      %455 = vector.broadcast %cst_165 : f32 to vector<16x128xf32>
      %456 = arith.maximumf %455, %454 : vector<16x128xf32>
      %457 = arith.mulf %446, %456 : vector<16x128xf32>
      %458 = arith.addf %442, %457 : vector<16x128xf32>
      %c0_166 = arith.constant 0 : index
      %c12_167 = arith.constant 12 : index
      %459 = arith.index_cast %12 : i32 to index
      %c0_168 = arith.constant 0 : index
      %460 = vector.load %arg2[%c0_166, %c12_167, %459, %c0_168] : memref<4x16x16x128xbf16, #tpu.memory_space<vmem>>, vector<1x1x16x128xbf16>
      %461 = vector.shape_cast %460 : vector<1x1x16x128xbf16> to vector<16x128xbf16>
      %462 = arith.extf %461 : vector<16x128xbf16> to vector<16x128xf32>
      %463 = arith.subf %462, %264 : vector<16x128xf32>
      %464 = math.exp %463 : vector<16x128xf32>
      %465 = arith.addf %449, %464 : vector<16x128xf32>
      %cst_169 = arith.constant 1.200000e+01 : f32
      %466 = vector.broadcast %cst_169 : f32 to vector<16x128xf32>
      %467 = arith.subf %185, %466 : vector<16x128xf32>
      %468 = math.absf %467 : vector<16x128xf32>
      %cst_170 = arith.constant 1.000000e+00 : f32
      %469 = vector.broadcast %cst_170 : f32 to vector<16x128xf32>
      %470 = arith.subf %469, %468 : vector<16x128xf32>
      %cst_171 = arith.constant 0.000000e+00 : f32
      %471 = vector.broadcast %cst_171 : f32 to vector<16x128xf32>
      %472 = arith.maximumf %471, %470 : vector<16x128xf32>
      %473 = arith.mulf %462, %472 : vector<16x128xf32>
      %474 = arith.addf %458, %473 : vector<16x128xf32>
      %c0_172 = arith.constant 0 : index
      %c13_173 = arith.constant 13 : index
      %475 = arith.index_cast %12 : i32 to index
      %c0_174 = arith.constant 0 : index
      %476 = vector.load %arg2[%c0_172, %c13_173, %475, %c0_174] : memref<4x16x16x128xbf16, #tpu.memory_space<vmem>>, vector<1x1x16x128xbf16>
      %477 = vector.shape_cast %476 : vector<1x1x16x128xbf16> to vector<16x128xbf16>
      %478 = arith.extf %477 : vector<16x128xbf16> to vector<16x128xf32>
      %479 = arith.subf %478, %264 : vector<16x128xf32>
      %480 = math.exp %479 : vector<16x128xf32>
      %481 = arith.addf %465, %480 : vector<16x128xf32>
      %cst_175 = arith.constant 1.300000e+01 : f32
      %482 = vector.broadcast %cst_175 : f32 to vector<16x128xf32>
      %483 = arith.subf %185, %482 : vector<16x128xf32>
      %484 = math.absf %483 : vector<16x128xf32>
      %cst_176 = arith.constant 1.000000e+00 : f32
      %485 = vector.broadcast %cst_176 : f32 to vector<16x128xf32>
      %486 = arith.subf %485, %484 : vector<16x128xf32>
      %cst_177 = arith.constant 0.000000e+00 : f32
      %487 = vector.broadcast %cst_177 : f32 to vector<16x128xf32>
      %488 = arith.maximumf %487, %486 : vector<16x128xf32>
      %489 = arith.mulf %478, %488 : vector<16x128xf32>
      %490 = arith.addf %474, %489 : vector<16x128xf32>
      %c0_178 = arith.constant 0 : index
      %c14_179 = arith.constant 14 : index
      %491 = arith.index_cast %12 : i32 to index
      %c0_180 = arith.constant 0 : index
      %492 = vector.load %arg2[%c0_178, %c14_179, %491, %c0_180] : memref<4x16x16x128xbf16, #tpu.memory_space<vmem>>, vector<1x1x16x128xbf16>
      %493 = vector.shape_cast %492 : vector<1x1x16x128xbf16> to vector<16x128xbf16>
      %494 = arith.extf %493 : vector<16x128xbf16> to vector<16x128xf32>
      %495 = arith.subf %494, %264 : vector<16x128xf32>
      %496 = math.exp %495 : vector<16x128xf32>
      %497 = arith.addf %481, %496 : vector<16x128xf32>
      %cst_181 = arith.constant 1.400000e+01 : f32
      %498 = vector.broadcast %cst_181 : f32 to vector<16x128xf32>
      %499 = arith.subf %185, %498 : vector<16x128xf32>
      %500 = math.absf %499 : vector<16x128xf32>
      %cst_182 = arith.constant 1.000000e+00 : f32
      %501 = vector.broadcast %cst_182 : f32 to vector<16x128xf32>
      %502 = arith.subf %501, %500 : vector<16x128xf32>
      %cst_183 = arith.constant 0.000000e+00 : f32
      %503 = vector.broadcast %cst_183 : f32 to vector<16x128xf32>
      %504 = arith.maximumf %503, %502 : vector<16x128xf32>
      %505 = arith.mulf %494, %504 : vector<16x128xf32>
      %506 = arith.addf %490, %505 : vector<16x128xf32>
      %c0_184 = arith.constant 0 : index
      %c15_185 = arith.constant 15 : index
      %507 = arith.index_cast %12 : i32 to index
      %c0_186 = arith.constant 0 : index
      %508 = vector.load %arg2[%c0_184, %c15_185, %507, %c0_186] : memref<4x16x16x128xbf16, #tpu.memory_space<vmem>>, vector<1x1x16x128xbf16>
      %509 = vector.shape_cast %508 : vector<1x1x16x128xbf16> to vector<16x128xbf16>
      %510 = arith.extf %509 : vector<16x128xbf16> to vector<16x128xf32>
      %511 = arith.subf %510, %264 : vector<16x128xf32>
      %512 = math.exp %511 : vector<16x128xf32>
      %513 = arith.addf %497, %512 : vector<16x128xf32>
      %cst_187 = arith.constant 1.500000e+01 : f32
      %514 = vector.broadcast %cst_187 : f32 to vector<16x128xf32>
      %515 = arith.subf %185, %514 : vector<16x128xf32>
      %516 = math.absf %515 : vector<16x128xf32>
      %cst_188 = arith.constant 1.000000e+00 : f32
      %517 = vector.broadcast %cst_188 : f32 to vector<16x128xf32>
      %518 = arith.subf %517, %516 : vector<16x128xf32>
      %cst_189 = arith.constant 0.000000e+00 : f32
      %519 = vector.broadcast %cst_189 : f32 to vector<16x128xf32>
      %520 = arith.maximumf %519, %518 : vector<16x128xf32>
      %521 = arith.mulf %510, %520 : vector<16x128xf32>
      %522 = arith.addf %506, %521 : vector<16x128xf32>
      %523 = math.log %513 : vector<16x128xf32>
      %524 = arith.addf %523, %264 : vector<16x128xf32>
      %525 = arith.subf %524, %522 : vector<16x128xf32>
      %526 = arith.addf %181, %525 : vector<16x128xf32>
      %cst_190 = arith.constant 0.000000e+00 : f32
      %cst_191 = arith.constant 1.499000e+01 : f32
      %527 = vector.broadcast %cst_190 : f32 to vector<16x128xf32>
      %528 = arith.maximumf %527, %176 : vector<16x128xf32>
      %529 = vector.broadcast %cst_191 : f32 to vector<16x128xf32>
      %530 = arith.minimumf %529, %528 : vector<16x128xf32>
      %c1_192 = arith.constant 1 : index
      %c0_193 = arith.constant 0 : index
      %531 = arith.index_cast %12 : i32 to index
      %c0_194 = arith.constant 0 : index
      %532 = vector.load %arg2[%c1_192, %c0_193, %531, %c0_194] : memref<4x16x16x128xbf16, #tpu.memory_space<vmem>>, vector<1x1x16x128xbf16>
      %533 = vector.shape_cast %532 : vector<1x1x16x128xbf16> to vector<16x128xbf16>
      %534 = arith.extf %533 : vector<16x128xbf16> to vector<16x128xf32>
      %c1_195 = arith.constant 1 : index
      %c1_196 = arith.constant 1 : index
      %535 = arith.index_cast %12 : i32 to index
      %c0_197 = arith.constant 0 : index
      %536 = vector.load %arg2[%c1_195, %c1_196, %535, %c0_197] : memref<4x16x16x128xbf16, #tpu.memory_space<vmem>>, vector<1x1x16x128xbf16>
      %537 = vector.shape_cast %536 : vector<1x1x16x128xbf16> to vector<16x128xbf16>
      %538 = arith.extf %537 : vector<16x128xbf16> to vector<16x128xf32>
      %539 = arith.maximumf %534, %538 : vector<16x128xf32>
      %c1_198 = arith.constant 1 : index
      %c2_199 = arith.constant 2 : index
      %540 = arith.index_cast %12 : i32 to index
      %c0_200 = arith.constant 0 : index
      %541 = vector.load %arg2[%c1_198, %c2_199, %540, %c0_200] : memref<4x16x16x128xbf16, #tpu.memory_space<vmem>>, vector<1x1x16x128xbf16>
      %542 = vector.shape_cast %541 : vector<1x1x16x128xbf16> to vector<16x128xbf16>
      %543 = arith.extf %542 : vector<16x128xbf16> to vector<16x128xf32>
      %544 = arith.maximumf %539, %543 : vector<16x128xf32>
      %c1_201 = arith.constant 1 : index
      %c3_202 = arith.constant 3 : index
      %545 = arith.index_cast %12 : i32 to index
      %c0_203 = arith.constant 0 : index
      %546 = vector.load %arg2[%c1_201, %c3_202, %545, %c0_203] : memref<4x16x16x128xbf16, #tpu.memory_space<vmem>>, vector<1x1x16x128xbf16>
      %547 = vector.shape_cast %546 : vector<1x1x16x128xbf16> to vector<16x128xbf16>
      %548 = arith.extf %547 : vector<16x128xbf16> to vector<16x128xf32>
      %549 = arith.maximumf %544, %548 : vector<16x128xf32>
      %c1_204 = arith.constant 1 : index
      %c4_205 = arith.constant 4 : index
      %550 = arith.index_cast %12 : i32 to index
      %c0_206 = arith.constant 0 : index
      %551 = vector.load %arg2[%c1_204, %c4_205, %550, %c0_206] : memref<4x16x16x128xbf16, #tpu.memory_space<vmem>>, vector<1x1x16x128xbf16>
      %552 = vector.shape_cast %551 : vector<1x1x16x128xbf16> to vector<16x128xbf16>
      %553 = arith.extf %552 : vector<16x128xbf16> to vector<16x128xf32>
      %554 = arith.maximumf %549, %553 : vector<16x128xf32>
      %c1_207 = arith.constant 1 : index
      %c5_208 = arith.constant 5 : index
      %555 = arith.index_cast %12 : i32 to index
      %c0_209 = arith.constant 0 : index
      %556 = vector.load %arg2[%c1_207, %c5_208, %555, %c0_209] : memref<4x16x16x128xbf16, #tpu.memory_space<vmem>>, vector<1x1x16x128xbf16>
      %557 = vector.shape_cast %556 : vector<1x1x16x128xbf16> to vector<16x128xbf16>
      %558 = arith.extf %557 : vector<16x128xbf16> to vector<16x128xf32>
      %559 = arith.maximumf %554, %558 : vector<16x128xf32>
      %c1_210 = arith.constant 1 : index
      %c6_211 = arith.constant 6 : index
      %560 = arith.index_cast %12 : i32 to index
      %c0_212 = arith.constant 0 : index
      %561 = vector.load %arg2[%c1_210, %c6_211, %560, %c0_212] : memref<4x16x16x128xbf16, #tpu.memory_space<vmem>>, vector<1x1x16x128xbf16>
      %562 = vector.shape_cast %561 : vector<1x1x16x128xbf16> to vector<16x128xbf16>
      %563 = arith.extf %562 : vector<16x128xbf16> to vector<16x128xf32>
      %564 = arith.maximumf %559, %563 : vector<16x128xf32>
      %c1_213 = arith.constant 1 : index
      %c7_214 = arith.constant 7 : index
      %565 = arith.index_cast %12 : i32 to index
      %c0_215 = arith.constant 0 : index
      %566 = vector.load %arg2[%c1_213, %c7_214, %565, %c0_215] : memref<4x16x16x128xbf16, #tpu.memory_space<vmem>>, vector<1x1x16x128xbf16>
      %567 = vector.shape_cast %566 : vector<1x1x16x128xbf16> to vector<16x128xbf16>
      %568 = arith.extf %567 : vector<16x128xbf16> to vector<16x128xf32>
      %569 = arith.maximumf %564, %568 : vector<16x128xf32>
      %c1_216 = arith.constant 1 : index
      %c8_217 = arith.constant 8 : index
      %570 = arith.index_cast %12 : i32 to index
      %c0_218 = arith.constant 0 : index
      %571 = vector.load %arg2[%c1_216, %c8_217, %570, %c0_218] : memref<4x16x16x128xbf16, #tpu.memory_space<vmem>>, vector<1x1x16x128xbf16>
      %572 = vector.shape_cast %571 : vector<1x1x16x128xbf16> to vector<16x128xbf16>
      %573 = arith.extf %572 : vector<16x128xbf16> to vector<16x128xf32>
      %574 = arith.maximumf %569, %573 : vector<16x128xf32>
      %c1_219 = arith.constant 1 : index
      %c9_220 = arith.constant 9 : index
      %575 = arith.index_cast %12 : i32 to index
      %c0_221 = arith.constant 0 : index
      %576 = vector.load %arg2[%c1_219, %c9_220, %575, %c0_221] : memref<4x16x16x128xbf16, #tpu.memory_space<vmem>>, vector<1x1x16x128xbf16>
      %577 = vector.shape_cast %576 : vector<1x1x16x128xbf16> to vector<16x128xbf16>
      %578 = arith.extf %577 : vector<16x128xbf16> to vector<16x128xf32>
      %579 = arith.maximumf %574, %578 : vector<16x128xf32>
      %c1_222 = arith.constant 1 : index
      %c10_223 = arith.constant 10 : index
      %580 = arith.index_cast %12 : i32 to index
      %c0_224 = arith.constant 0 : index
      %581 = vector.load %arg2[%c1_222, %c10_223, %580, %c0_224] : memref<4x16x16x128xbf16, #tpu.memory_space<vmem>>, vector<1x1x16x128xbf16>
      %582 = vector.shape_cast %581 : vector<1x1x16x128xbf16> to vector<16x128xbf16>
      %583 = arith.extf %582 : vector<16x128xbf16> to vector<16x128xf32>
      %584 = arith.maximumf %579, %583 : vector<16x128xf32>
      %c1_225 = arith.constant 1 : index
      %c11_226 = arith.constant 11 : index
      %585 = arith.index_cast %12 : i32 to index
      %c0_227 = arith.constant 0 : index
      %586 = vector.load %arg2[%c1_225, %c11_226, %585, %c0_227] : memref<4x16x16x128xbf16, #tpu.memory_space<vmem>>, vector<1x1x16x128xbf16>
      %587 = vector.shape_cast %586 : vector<1x1x16x128xbf16> to vector<16x128xbf16>
      %588 = arith.extf %587 : vector<16x128xbf16> to vector<16x128xf32>
      %589 = arith.maximumf %584, %588 : vector<16x128xf32>
      %c1_228 = arith.constant 1 : index
      %c12_229 = arith.constant 12 : index
      %590 = arith.index_cast %12 : i32 to index
      %c0_230 = arith.constant 0 : index
      %591 = vector.load %arg2[%c1_228, %c12_229, %590, %c0_230] : memref<4x16x16x128xbf16, #tpu.memory_space<vmem>>, vector<1x1x16x128xbf16>
      %592 = vector.shape_cast %591 : vector<1x1x16x128xbf16> to vector<16x128xbf16>
      %593 = arith.extf %592 : vector<16x128xbf16> to vector<16x128xf32>
      %594 = arith.maximumf %589, %593 : vector<16x128xf32>
      %c1_231 = arith.constant 1 : index
      %c13_232 = arith.constant 13 : index
      %595 = arith.index_cast %12 : i32 to index
      %c0_233 = arith.constant 0 : index
      %596 = vector.load %arg2[%c1_231, %c13_232, %595, %c0_233] : memref<4x16x16x128xbf16, #tpu.memory_space<vmem>>, vector<1x1x16x128xbf16>
      %597 = vector.shape_cast %596 : vector<1x1x16x128xbf16> to vector<16x128xbf16>
      %598 = arith.extf %597 : vector<16x128xbf16> to vector<16x128xf32>
      %599 = arith.maximumf %594, %598 : vector<16x128xf32>
      %c1_234 = arith.constant 1 : index
      %c14_235 = arith.constant 14 : index
      %600 = arith.index_cast %12 : i32 to index
      %c0_236 = arith.constant 0 : index
      %601 = vector.load %arg2[%c1_234, %c14_235, %600, %c0_236] : memref<4x16x16x128xbf16, #tpu.memory_space<vmem>>, vector<1x1x16x128xbf16>
      %602 = vector.shape_cast %601 : vector<1x1x16x128xbf16> to vector<16x128xbf16>
      %603 = arith.extf %602 : vector<16x128xbf16> to vector<16x128xf32>
      %604 = arith.maximumf %599, %603 : vector<16x128xf32>
      %c1_237 = arith.constant 1 : index
      %c15_238 = arith.constant 15 : index
      %605 = arith.index_cast %12 : i32 to index
      %c0_239 = arith.constant 0 : index
      %606 = vector.load %arg2[%c1_237, %c15_238, %605, %c0_239] : memref<4x16x16x128xbf16, #tpu.memory_space<vmem>>, vector<1x1x16x128xbf16>
      %607 = vector.shape_cast %606 : vector<1x1x16x128xbf16> to vector<16x128xbf16>
      %608 = arith.extf %607 : vector<16x128xbf16> to vector<16x128xf32>
      %609 = arith.maximumf %604, %608 : vector<16x128xf32>
      %cst_240 = arith.constant 0.000000e+00 : f32
      %610 = vector.broadcast %cst_240 : f32 to vector<16x128xf32>
      %cst_241 = arith.constant 0.000000e+00 : f32
      %611 = vector.broadcast %cst_241 : f32 to vector<16x128xf32>
      %c1_242 = arith.constant 1 : index
      %c0_243 = arith.constant 0 : index
      %612 = arith.index_cast %12 : i32 to index
      %c0_244 = arith.constant 0 : index
      %613 = vector.load %arg2[%c1_242, %c0_243, %612, %c0_244] : memref<4x16x16x128xbf16, #tpu.memory_space<vmem>>, vector<1x1x16x128xbf16>
      %614 = vector.shape_cast %613 : vector<1x1x16x128xbf16> to vector<16x128xbf16>
      %615 = arith.extf %614 : vector<16x128xbf16> to vector<16x128xf32>
      %616 = arith.subf %615, %609 : vector<16x128xf32>
      %617 = math.exp %616 : vector<16x128xf32>
      %618 = arith.addf %610, %617 : vector<16x128xf32>
      %cst_245 = arith.constant 0.000000e+00 : f32
      %619 = vector.broadcast %cst_245 : f32 to vector<16x128xf32>
      %620 = arith.subf %530, %619 : vector<16x128xf32>
      %621 = math.absf %620 : vector<16x128xf32>
      %cst_246 = arith.constant 1.000000e+00 : f32
      %622 = vector.broadcast %cst_246 : f32 to vector<16x128xf32>
      %623 = arith.subf %622, %621 : vector<16x128xf32>
      %cst_247 = arith.constant 0.000000e+00 : f32
      %624 = vector.broadcast %cst_247 : f32 to vector<16x128xf32>
      %625 = arith.maximumf %624, %623 : vector<16x128xf32>
      %626 = arith.mulf %615, %625 : vector<16x128xf32>
      %627 = arith.addf %611, %626 : vector<16x128xf32>
      %c1_248 = arith.constant 1 : index
      %c1_249 = arith.constant 1 : index
      %628 = arith.index_cast %12 : i32 to index
      %c0_250 = arith.constant 0 : index
      %629 = vector.load %arg2[%c1_248, %c1_249, %628, %c0_250] : memref<4x16x16x128xbf16, #tpu.memory_space<vmem>>, vector<1x1x16x128xbf16>
      %630 = vector.shape_cast %629 : vector<1x1x16x128xbf16> to vector<16x128xbf16>
      %631 = arith.extf %630 : vector<16x128xbf16> to vector<16x128xf32>
      %632 = arith.subf %631, %609 : vector<16x128xf32>
      %633 = math.exp %632 : vector<16x128xf32>
      %634 = arith.addf %618, %633 : vector<16x128xf32>
      %cst_251 = arith.constant 1.000000e+00 : f32
      %635 = vector.broadcast %cst_251 : f32 to vector<16x128xf32>
      %636 = arith.subf %530, %635 : vector<16x128xf32>
      %637 = math.absf %636 : vector<16x128xf32>
      %cst_252 = arith.constant 1.000000e+00 : f32
      %638 = vector.broadcast %cst_252 : f32 to vector<16x128xf32>
      %639 = arith.subf %638, %637 : vector<16x128xf32>
      %cst_253 = arith.constant 0.000000e+00 : f32
      %640 = vector.broadcast %cst_253 : f32 to vector<16x128xf32>
      %641 = arith.maximumf %640, %639 : vector<16x128xf32>
      %642 = arith.mulf %631, %641 : vector<16x128xf32>
      %643 = arith.addf %627, %642 : vector<16x128xf32>
      %c1_254 = arith.constant 1 : index
      %c2_255 = arith.constant 2 : index
      %644 = arith.index_cast %12 : i32 to index
      %c0_256 = arith.constant 0 : index
      %645 = vector.load %arg2[%c1_254, %c2_255, %644, %c0_256] : memref<4x16x16x128xbf16, #tpu.memory_space<vmem>>, vector<1x1x16x128xbf16>
      %646 = vector.shape_cast %645 : vector<1x1x16x128xbf16> to vector<16x128xbf16>
      %647 = arith.extf %646 : vector<16x128xbf16> to vector<16x128xf32>
      %648 = arith.subf %647, %609 : vector<16x128xf32>
      %649 = math.exp %648 : vector<16x128xf32>
      %650 = arith.addf %634, %649 : vector<16x128xf32>
      %cst_257 = arith.constant 2.000000e+00 : f32
      %651 = vector.broadcast %cst_257 : f32 to vector<16x128xf32>
      %652 = arith.subf %530, %651 : vector<16x128xf32>
      %653 = math.absf %652 : vector<16x128xf32>
      %cst_258 = arith.constant 1.000000e+00 : f32
      %654 = vector.broadcast %cst_258 : f32 to vector<16x128xf32>
      %655 = arith.subf %654, %653 : vector<16x128xf32>
      %cst_259 = arith.constant 0.000000e+00 : f32
      %656 = vector.broadcast %cst_259 : f32 to vector<16x128xf32>
      %657 = arith.maximumf %656, %655 : vector<16x128xf32>
      %658 = arith.mulf %647, %657 : vector<16x128xf32>
      %659 = arith.addf %643, %658 : vector<16x128xf32>
      %c1_260 = arith.constant 1 : index
      %c3_261 = arith.constant 3 : index
      %660 = arith.index_cast %12 : i32 to index
      %c0_262 = arith.constant 0 : index
      %661 = vector.load %arg2[%c1_260, %c3_261, %660, %c0_262] : memref<4x16x16x128xbf16, #tpu.memory_space<vmem>>, vector<1x1x16x128xbf16>
      %662 = vector.shape_cast %661 : vector<1x1x16x128xbf16> to vector<16x128xbf16>
      %663 = arith.extf %662 : vector<16x128xbf16> to vector<16x128xf32>
      %664 = arith.subf %663, %609 : vector<16x128xf32>
      %665 = math.exp %664 : vector<16x128xf32>
      %666 = arith.addf %650, %665 : vector<16x128xf32>
      %cst_263 = arith.constant 3.000000e+00 : f32
      %667 = vector.broadcast %cst_263 : f32 to vector<16x128xf32>
      %668 = arith.subf %530, %667 : vector<16x128xf32>
      %669 = math.absf %668 : vector<16x128xf32>
      %cst_264 = arith.constant 1.000000e+00 : f32
      %670 = vector.broadcast %cst_264 : f32 to vector<16x128xf32>
      %671 = arith.subf %670, %669 : vector<16x128xf32>
      %cst_265 = arith.constant 0.000000e+00 : f32
      %672 = vector.broadcast %cst_265 : f32 to vector<16x128xf32>
      %673 = arith.maximumf %672, %671 : vector<16x128xf32>
      %674 = arith.mulf %663, %673 : vector<16x128xf32>
      %675 = arith.addf %659, %674 : vector<16x128xf32>
      %c1_266 = arith.constant 1 : index
      %c4_267 = arith.constant 4 : index
      %676 = arith.index_cast %12 : i32 to index
      %c0_268 = arith.constant 0 : index
      %677 = vector.load %arg2[%c1_266, %c4_267, %676, %c0_268] : memref<4x16x16x128xbf16, #tpu.memory_space<vmem>>, vector<1x1x16x128xbf16>
      %678 = vector.shape_cast %677 : vector<1x1x16x128xbf16> to vector<16x128xbf16>
      %679 = arith.extf %678 : vector<16x128xbf16> to vector<16x128xf32>
      %680 = arith.subf %679, %609 : vector<16x128xf32>
      %681 = math.exp %680 : vector<16x128xf32>
      %682 = arith.addf %666, %681 : vector<16x128xf32>
      %cst_269 = arith.constant 4.000000e+00 : f32
      %683 = vector.broadcast %cst_269 : f32 to vector<16x128xf32>
      %684 = arith.subf %530, %683 : vector<16x128xf32>
      %685 = math.absf %684 : vector<16x128xf32>
      %cst_270 = arith.constant 1.000000e+00 : f32
      %686 = vector.broadcast %cst_270 : f32 to vector<16x128xf32>
      %687 = arith.subf %686, %685 : vector<16x128xf32>
      %cst_271 = arith.constant 0.000000e+00 : f32
      %688 = vector.broadcast %cst_271 : f32 to vector<16x128xf32>
      %689 = arith.maximumf %688, %687 : vector<16x128xf32>
      %690 = arith.mulf %679, %689 : vector<16x128xf32>
      %691 = arith.addf %675, %690 : vector<16x128xf32>
      %c1_272 = arith.constant 1 : index
      %c5_273 = arith.constant 5 : index
      %692 = arith.index_cast %12 : i32 to index
      %c0_274 = arith.constant 0 : index
      %693 = vector.load %arg2[%c1_272, %c5_273, %692, %c0_274] : memref<4x16x16x128xbf16, #tpu.memory_space<vmem>>, vector<1x1x16x128xbf16>
      %694 = vector.shape_cast %693 : vector<1x1x16x128xbf16> to vector<16x128xbf16>
      %695 = arith.extf %694 : vector<16x128xbf16> to vector<16x128xf32>
      %696 = arith.subf %695, %609 : vector<16x128xf32>
      %697 = math.exp %696 : vector<16x128xf32>
      %698 = arith.addf %682, %697 : vector<16x128xf32>
      %cst_275 = arith.constant 5.000000e+00 : f32
      %699 = vector.broadcast %cst_275 : f32 to vector<16x128xf32>
      %700 = arith.subf %530, %699 : vector<16x128xf32>
      %701 = math.absf %700 : vector<16x128xf32>
      %cst_276 = arith.constant 1.000000e+00 : f32
      %702 = vector.broadcast %cst_276 : f32 to vector<16x128xf32>
      %703 = arith.subf %702, %701 : vector<16x128xf32>
      %cst_277 = arith.constant 0.000000e+00 : f32
      %704 = vector.broadcast %cst_277 : f32 to vector<16x128xf32>
      %705 = arith.maximumf %704, %703 : vector<16x128xf32>
      %706 = arith.mulf %695, %705 : vector<16x128xf32>
      %707 = arith.addf %691, %706 : vector<16x128xf32>
      %c1_278 = arith.constant 1 : index
      %c6_279 = arith.constant 6 : index
      %708 = arith.index_cast %12 : i32 to index
      %c0_280 = arith.constant 0 : index
      %709 = vector.load %arg2[%c1_278, %c6_279, %708, %c0_280] : memref<4x16x16x128xbf16, #tpu.memory_space<vmem>>, vector<1x1x16x128xbf16>
      %710 = vector.shape_cast %709 : vector<1x1x16x128xbf16> to vector<16x128xbf16>
      %711 = arith.extf %710 : vector<16x128xbf16> to vector<16x128xf32>
      %712 = arith.subf %711, %609 : vector<16x128xf32>
      %713 = math.exp %712 : vector<16x128xf32>
      %714 = arith.addf %698, %713 : vector<16x128xf32>
      %cst_281 = arith.constant 6.000000e+00 : f32
      %715 = vector.broadcast %cst_281 : f32 to vector<16x128xf32>
      %716 = arith.subf %530, %715 : vector<16x128xf32>
      %717 = math.absf %716 : vector<16x128xf32>
      %cst_282 = arith.constant 1.000000e+00 : f32
      %718 = vector.broadcast %cst_282 : f32 to vector<16x128xf32>
      %719 = arith.subf %718, %717 : vector<16x128xf32>
      %cst_283 = arith.constant 0.000000e+00 : f32
      %720 = vector.broadcast %cst_283 : f32 to vector<16x128xf32>
      %721 = arith.maximumf %720, %719 : vector<16x128xf32>
      %722 = arith.mulf %711, %721 : vector<16x128xf32>
      %723 = arith.addf %707, %722 : vector<16x128xf32>
      %c1_284 = arith.constant 1 : index
      %c7_285 = arith.constant 7 : index
      %724 = arith.index_cast %12 : i32 to index
      %c0_286 = arith.constant 0 : index
      %725 = vector.load %arg2[%c1_284, %c7_285, %724, %c0_286] : memref<4x16x16x128xbf16, #tpu.memory_space<vmem>>, vector<1x1x16x128xbf16>
      %726 = vector.shape_cast %725 : vector<1x1x16x128xbf16> to vector<16x128xbf16>
      %727 = arith.extf %726 : vector<16x128xbf16> to vector<16x128xf32>
      %728 = arith.subf %727, %609 : vector<16x128xf32>
      %729 = math.exp %728 : vector<16x128xf32>
      %730 = arith.addf %714, %729 : vector<16x128xf32>
      %cst_287 = arith.constant 7.000000e+00 : f32
      %731 = vector.broadcast %cst_287 : f32 to vector<16x128xf32>
      %732 = arith.subf %530, %731 : vector<16x128xf32>
      %733 = math.absf %732 : vector<16x128xf32>
      %cst_288 = arith.constant 1.000000e+00 : f32
      %734 = vector.broadcast %cst_288 : f32 to vector<16x128xf32>
      %735 = arith.subf %734, %733 : vector<16x128xf32>
      %cst_289 = arith.constant 0.000000e+00 : f32
      %736 = vector.broadcast %cst_289 : f32 to vector<16x128xf32>
      %737 = arith.maximumf %736, %735 : vector<16x128xf32>
      %738 = arith.mulf %727, %737 : vector<16x128xf32>
      %739 = arith.addf %723, %738 : vector<16x128xf32>
      %c1_290 = arith.constant 1 : index
      %c8_291 = arith.constant 8 : index
      %740 = arith.index_cast %12 : i32 to index
      %c0_292 = arith.constant 0 : index
      %741 = vector.load %arg2[%c1_290, %c8_291, %740, %c0_292] : memref<4x16x16x128xbf16, #tpu.memory_space<vmem>>, vector<1x1x16x128xbf16>
      %742 = vector.shape_cast %741 : vector<1x1x16x128xbf16> to vector<16x128xbf16>
      %743 = arith.extf %742 : vector<16x128xbf16> to vector<16x128xf32>
      %744 = arith.subf %743, %609 : vector<16x128xf32>
      %745 = math.exp %744 : vector<16x128xf32>
      %746 = arith.addf %730, %745 : vector<16x128xf32>
      %cst_293 = arith.constant 8.000000e+00 : f32
      %747 = vector.broadcast %cst_293 : f32 to vector<16x128xf32>
      %748 = arith.subf %530, %747 : vector<16x128xf32>
      %749 = math.absf %748 : vector<16x128xf32>
      %cst_294 = arith.constant 1.000000e+00 : f32
      %750 = vector.broadcast %cst_294 : f32 to vector<16x128xf32>
      %751 = arith.subf %750, %749 : vector<16x128xf32>
      %cst_295 = arith.constant 0.000000e+00 : f32
      %752 = vector.broadcast %cst_295 : f32 to vector<16x128xf32>
      %753 = arith.maximumf %752, %751 : vector<16x128xf32>
      %754 = arith.mulf %743, %753 : vector<16x128xf32>
      %755 = arith.addf %739, %754 : vector<16x128xf32>
      %c1_296 = arith.constant 1 : index
      %c9_297 = arith.constant 9 : index
      %756 = arith.index_cast %12 : i32 to index
      %c0_298 = arith.constant 0 : index
      %757 = vector.load %arg2[%c1_296, %c9_297, %756, %c0_298] : memref<4x16x16x128xbf16, #tpu.memory_space<vmem>>, vector<1x1x16x128xbf16>
      %758 = vector.shape_cast %757 : vector<1x1x16x128xbf16> to vector<16x128xbf16>
      %759 = arith.extf %758 : vector<16x128xbf16> to vector<16x128xf32>
      %760 = arith.subf %759, %609 : vector<16x128xf32>
      %761 = math.exp %760 : vector<16x128xf32>
      %762 = arith.addf %746, %761 : vector<16x128xf32>
      %cst_299 = arith.constant 9.000000e+00 : f32
      %763 = vector.broadcast %cst_299 : f32 to vector<16x128xf32>
      %764 = arith.subf %530, %763 : vector<16x128xf32>
      %765 = math.absf %764 : vector<16x128xf32>
      %cst_300 = arith.constant 1.000000e+00 : f32
      %766 = vector.broadcast %cst_300 : f32 to vector<16x128xf32>
      %767 = arith.subf %766, %765 : vector<16x128xf32>
      %cst_301 = arith.constant 0.000000e+00 : f32
      %768 = vector.broadcast %cst_301 : f32 to vector<16x128xf32>
      %769 = arith.maximumf %768, %767 : vector<16x128xf32>
      %770 = arith.mulf %759, %769 : vector<16x128xf32>
      %771 = arith.addf %755, %770 : vector<16x128xf32>
      %c1_302 = arith.constant 1 : index
      %c10_303 = arith.constant 10 : index
      %772 = arith.index_cast %12 : i32 to index
      %c0_304 = arith.constant 0 : index
      %773 = vector.load %arg2[%c1_302, %c10_303, %772, %c0_304] : memref<4x16x16x128xbf16, #tpu.memory_space<vmem>>, vector<1x1x16x128xbf16>
      %774 = vector.shape_cast %773 : vector<1x1x16x128xbf16> to vector<16x128xbf16>
      %775 = arith.extf %774 : vector<16x128xbf16> to vector<16x128xf32>
      %776 = arith.subf %775, %609 : vector<16x128xf32>
      %777 = math.exp %776 : vector<16x128xf32>
      %778 = arith.addf %762, %777 : vector<16x128xf32>
      %cst_305 = arith.constant 1.000000e+01 : f32
      %779 = vector.broadcast %cst_305 : f32 to vector<16x128xf32>
      %780 = arith.subf %530, %779 : vector<16x128xf32>
      %781 = math.absf %780 : vector<16x128xf32>
      %cst_306 = arith.constant 1.000000e+00 : f32
      %782 = vector.broadcast %cst_306 : f32 to vector<16x128xf32>
      %783 = arith.subf %782, %781 : vector<16x128xf32>
      %cst_307 = arith.constant 0.000000e+00 : f32
      %784 = vector.broadcast %cst_307 : f32 to vector<16x128xf32>
      %785 = arith.maximumf %784, %783 : vector<16x128xf32>
      %786 = arith.mulf %775, %785 : vector<16x128xf32>
      %787 = arith.addf %771, %786 : vector<16x128xf32>
      %c1_308 = arith.constant 1 : index
      %c11_309 = arith.constant 11 : index
      %788 = arith.index_cast %12 : i32 to index
      %c0_310 = arith.constant 0 : index
      %789 = vector.load %arg2[%c1_308, %c11_309, %788, %c0_310] : memref<4x16x16x128xbf16, #tpu.memory_space<vmem>>, vector<1x1x16x128xbf16>
      %790 = vector.shape_cast %789 : vector<1x1x16x128xbf16> to vector<16x128xbf16>
      %791 = arith.extf %790 : vector<16x128xbf16> to vector<16x128xf32>
      %792 = arith.subf %791, %609 : vector<16x128xf32>
      %793 = math.exp %792 : vector<16x128xf32>
      %794 = arith.addf %778, %793 : vector<16x128xf32>
      %cst_311 = arith.constant 1.100000e+01 : f32
      %795 = vector.broadcast %cst_311 : f32 to vector<16x128xf32>
      %796 = arith.subf %530, %795 : vector<16x128xf32>
      %797 = math.absf %796 : vector<16x128xf32>
      %cst_312 = arith.constant 1.000000e+00 : f32
      %798 = vector.broadcast %cst_312 : f32 to vector<16x128xf32>
      %799 = arith.subf %798, %797 : vector<16x128xf32>
      %cst_313 = arith.constant 0.000000e+00 : f32
      %800 = vector.broadcast %cst_313 : f32 to vector<16x128xf32>
      %801 = arith.maximumf %800, %799 : vector<16x128xf32>
      %802 = arith.mulf %791, %801 : vector<16x128xf32>
      %803 = arith.addf %787, %802 : vector<16x128xf32>
      %c1_314 = arith.constant 1 : index
      %c12_315 = arith.constant 12 : index
      %804 = arith.index_cast %12 : i32 to index
      %c0_316 = arith.constant 0 : index
      %805 = vector.load %arg2[%c1_314, %c12_315, %804, %c0_316] : memref<4x16x16x128xbf16, #tpu.memory_space<vmem>>, vector<1x1x16x128xbf16>
      %806 = vector.shape_cast %805 : vector<1x1x16x128xbf16> to vector<16x128xbf16>
      %807 = arith.extf %806 : vector<16x128xbf16> to vector<16x128xf32>
      %808 = arith.subf %807, %609 : vector<16x128xf32>
      %809 = math.exp %808 : vector<16x128xf32>
      %810 = arith.addf %794, %809 : vector<16x128xf32>
      %cst_317 = arith.constant 1.200000e+01 : f32
      %811 = vector.broadcast %cst_317 : f32 to vector<16x128xf32>
      %812 = arith.subf %530, %811 : vector<16x128xf32>
      %813 = math.absf %812 : vector<16x128xf32>
      %cst_318 = arith.constant 1.000000e+00 : f32
      %814 = vector.broadcast %cst_318 : f32 to vector<16x128xf32>
      %815 = arith.subf %814, %813 : vector<16x128xf32>
      %cst_319 = arith.constant 0.000000e+00 : f32
      %816 = vector.broadcast %cst_319 : f32 to vector<16x128xf32>
      %817 = arith.maximumf %816, %815 : vector<16x128xf32>
      %818 = arith.mulf %807, %817 : vector<16x128xf32>
      %819 = arith.addf %803, %818 : vector<16x128xf32>
      %c1_320 = arith.constant 1 : index
      %c13_321 = arith.constant 13 : index
      %820 = arith.index_cast %12 : i32 to index
      %c0_322 = arith.constant 0 : index
      %821 = vector.load %arg2[%c1_320, %c13_321, %820, %c0_322] : memref<4x16x16x128xbf16, #tpu.memory_space<vmem>>, vector<1x1x16x128xbf16>
      %822 = vector.shape_cast %821 : vector<1x1x16x128xbf16> to vector<16x128xbf16>
      %823 = arith.extf %822 : vector<16x128xbf16> to vector<16x128xf32>
      %824 = arith.subf %823, %609 : vector<16x128xf32>
      %825 = math.exp %824 : vector<16x128xf32>
      %826 = arith.addf %810, %825 : vector<16x128xf32>
      %cst_323 = arith.constant 1.300000e+01 : f32
      %827 = vector.broadcast %cst_323 : f32 to vector<16x128xf32>
      %828 = arith.subf %530, %827 : vector<16x128xf32>
      %829 = math.absf %828 : vector<16x128xf32>
      %cst_324 = arith.constant 1.000000e+00 : f32
      %830 = vector.broadcast %cst_324 : f32 to vector<16x128xf32>
      %831 = arith.subf %830, %829 : vector<16x128xf32>
      %cst_325 = arith.constant 0.000000e+00 : f32
      %832 = vector.broadcast %cst_325 : f32 to vector<16x128xf32>
      %833 = arith.maximumf %832, %831 : vector<16x128xf32>
      %834 = arith.mulf %823, %833 : vector<16x128xf32>
      %835 = arith.addf %819, %834 : vector<16x128xf32>
      %c1_326 = arith.constant 1 : index
      %c14_327 = arith.constant 14 : index
      %836 = arith.index_cast %12 : i32 to index
      %c0_328 = arith.constant 0 : index
      %837 = vector.load %arg2[%c1_326, %c14_327, %836, %c0_328] : memref<4x16x16x128xbf16, #tpu.memory_space<vmem>>, vector<1x1x16x128xbf16>
      %838 = vector.shape_cast %837 : vector<1x1x16x128xbf16> to vector<16x128xbf16>
      %839 = arith.extf %838 : vector<16x128xbf16> to vector<16x128xf32>
      %840 = arith.subf %839, %609 : vector<16x128xf32>
      %841 = math.exp %840 : vector<16x128xf32>
      %842 = arith.addf %826, %841 : vector<16x128xf32>
      %cst_329 = arith.constant 1.400000e+01 : f32
      %843 = vector.broadcast %cst_329 : f32 to vector<16x128xf32>
      %844 = arith.subf %530, %843 : vector<16x128xf32>
      %845 = math.absf %844 : vector<16x128xf32>
      %cst_330 = arith.constant 1.000000e+00 : f32
      %846 = vector.broadcast %cst_330 : f32 to vector<16x128xf32>
      %847 = arith.subf %846, %845 : vector<16x128xf32>
      %cst_331 = arith.constant 0.000000e+00 : f32
      %848 = vector.broadcast %cst_331 : f32 to vector<16x128xf32>
      %849 = arith.maximumf %848, %847 : vector<16x128xf32>
      %850 = arith.mulf %839, %849 : vector<16x128xf32>
      %851 = arith.addf %835, %850 : vector<16x128xf32>
      %c1_332 = arith.constant 1 : index
      %c15_333 = arith.constant 15 : index
      %852 = arith.index_cast %12 : i32 to index
      %c0_334 = arith.constant 0 : index
      %853 = vector.load %arg2[%c1_332, %c15_333, %852, %c0_334] : memref<4x16x16x128xbf16, #tpu.memory_space<vmem>>, vector<1x1x16x128xbf16>
      %854 = vector.shape_cast %853 : vector<1x1x16x128xbf16> to vector<16x128xbf16>
      %855 = arith.extf %854 : vector<16x128xbf16> to vector<16x128xf32>
      %856 = arith.subf %855, %609 : vector<16x128xf32>
      %857 = math.exp %856 : vector<16x128xf32>
      %858 = arith.addf %842, %857 : vector<16x128xf32>
      %cst_335 = arith.constant 1.500000e+01 : f32
      %859 = vector.broadcast %cst_335 : f32 to vector<16x128xf32>
      %860 = arith.subf %530, %859 : vector<16x128xf32>
      %861 = math.absf %860 : vector<16x128xf32>
      %cst_336 = arith.constant 1.000000e+00 : f32
      %862 = vector.broadcast %cst_336 : f32 to vector<16x128xf32>
      %863 = arith.subf %862, %861 : vector<16x128xf32>
      %cst_337 = arith.constant 0.000000e+00 : f32
      %864 = vector.broadcast %cst_337 : f32 to vector<16x128xf32>
      %865 = arith.maximumf %864, %863 : vector<16x128xf32>
      %866 = arith.mulf %855, %865 : vector<16x128xf32>
      %867 = arith.addf %851, %866 : vector<16x128xf32>
      %868 = math.log %858 : vector<16x128xf32>
      %869 = arith.addf %868, %609 : vector<16x128xf32>
      %870 = arith.subf %869, %867 : vector<16x128xf32>
      %871 = arith.addf %526, %870 : vector<16x128xf32>
      %cst_338 = arith.constant 0.000000e+00 : f32
      %cst_339 = arith.constant 1.499000e+01 : f32
      %872 = vector.broadcast %cst_338 : f32 to vector<16x128xf32>
      %873 = arith.maximumf %872, %178 : vector<16x128xf32>
      %874 = vector.broadcast %cst_339 : f32 to vector<16x128xf32>
      %875 = arith.minimumf %874, %873 : vector<16x128xf32>
      %c2_340 = arith.constant 2 : index
      %c0_341 = arith.constant 0 : index
      %876 = arith.index_cast %12 : i32 to index
      %c0_342 = arith.constant 0 : index
      %877 = vector.load %arg2[%c2_340, %c0_341, %876, %c0_342] : memref<4x16x16x128xbf16, #tpu.memory_space<vmem>>, vector<1x1x16x128xbf16>
      %878 = vector.shape_cast %877 : vector<1x1x16x128xbf16> to vector<16x128xbf16>
      %879 = arith.extf %878 : vector<16x128xbf16> to vector<16x128xf32>
      %c2_343 = arith.constant 2 : index
      %c1_344 = arith.constant 1 : index
      %880 = arith.index_cast %12 : i32 to index
      %c0_345 = arith.constant 0 : index
      %881 = vector.load %arg2[%c2_343, %c1_344, %880, %c0_345] : memref<4x16x16x128xbf16, #tpu.memory_space<vmem>>, vector<1x1x16x128xbf16>
      %882 = vector.shape_cast %881 : vector<1x1x16x128xbf16> to vector<16x128xbf16>
      %883 = arith.extf %882 : vector<16x128xbf16> to vector<16x128xf32>
      %884 = arith.maximumf %879, %883 : vector<16x128xf32>
      %c2_346 = arith.constant 2 : index
      %c2_347 = arith.constant 2 : index
      %885 = arith.index_cast %12 : i32 to index
      %c0_348 = arith.constant 0 : index
      %886 = vector.load %arg2[%c2_346, %c2_347, %885, %c0_348] : memref<4x16x16x128xbf16, #tpu.memory_space<vmem>>, vector<1x1x16x128xbf16>
      %887 = vector.shape_cast %886 : vector<1x1x16x128xbf16> to vector<16x128xbf16>
      %888 = arith.extf %887 : vector<16x128xbf16> to vector<16x128xf32>
      %889 = arith.maximumf %884, %888 : vector<16x128xf32>
      %c2_349 = arith.constant 2 : index
      %c3_350 = arith.constant 3 : index
      %890 = arith.index_cast %12 : i32 to index
      %c0_351 = arith.constant 0 : index
      %891 = vector.load %arg2[%c2_349, %c3_350, %890, %c0_351] : memref<4x16x16x128xbf16, #tpu.memory_space<vmem>>, vector<1x1x16x128xbf16>
      %892 = vector.shape_cast %891 : vector<1x1x16x128xbf16> to vector<16x128xbf16>
      %893 = arith.extf %892 : vector<16x128xbf16> to vector<16x128xf32>
      %894 = arith.maximumf %889, %893 : vector<16x128xf32>
      %c2_352 = arith.constant 2 : index
      %c4_353 = arith.constant 4 : index
      %895 = arith.index_cast %12 : i32 to index
      %c0_354 = arith.constant 0 : index
      %896 = vector.load %arg2[%c2_352, %c4_353, %895, %c0_354] : memref<4x16x16x128xbf16, #tpu.memory_space<vmem>>, vector<1x1x16x128xbf16>
      %897 = vector.shape_cast %896 : vector<1x1x16x128xbf16> to vector<16x128xbf16>
      %898 = arith.extf %897 : vector<16x128xbf16> to vector<16x128xf32>
      %899 = arith.maximumf %894, %898 : vector<16x128xf32>
      %c2_355 = arith.constant 2 : index
      %c5_356 = arith.constant 5 : index
      %900 = arith.index_cast %12 : i32 to index
      %c0_357 = arith.constant 0 : index
      %901 = vector.load %arg2[%c2_355, %c5_356, %900, %c0_357] : memref<4x16x16x128xbf16, #tpu.memory_space<vmem>>, vector<1x1x16x128xbf16>
      %902 = vector.shape_cast %901 : vector<1x1x16x128xbf16> to vector<16x128xbf16>
      %903 = arith.extf %902 : vector<16x128xbf16> to vector<16x128xf32>
      %904 = arith.maximumf %899, %903 : vector<16x128xf32>
      %c2_358 = arith.constant 2 : index
      %c6_359 = arith.constant 6 : index
      %905 = arith.index_cast %12 : i32 to index
      %c0_360 = arith.constant 0 : index
      %906 = vector.load %arg2[%c2_358, %c6_359, %905, %c0_360] : memref<4x16x16x128xbf16, #tpu.memory_space<vmem>>, vector<1x1x16x128xbf16>
      %907 = vector.shape_cast %906 : vector<1x1x16x128xbf16> to vector<16x128xbf16>
      %908 = arith.extf %907 : vector<16x128xbf16> to vector<16x128xf32>
      %909 = arith.maximumf %904, %908 : vector<16x128xf32>
      %c2_361 = arith.constant 2 : index
      %c7_362 = arith.constant 7 : index
      %910 = arith.index_cast %12 : i32 to index
      %c0_363 = arith.constant 0 : index
      %911 = vector.load %arg2[%c2_361, %c7_362, %910, %c0_363] : memref<4x16x16x128xbf16, #tpu.memory_space<vmem>>, vector<1x1x16x128xbf16>
      %912 = vector.shape_cast %911 : vector<1x1x16x128xbf16> to vector<16x128xbf16>
      %913 = arith.extf %912 : vector<16x128xbf16> to vector<16x128xf32>
      %914 = arith.maximumf %909, %913 : vector<16x128xf32>
      %c2_364 = arith.constant 2 : index
      %c8_365 = arith.constant 8 : index
      %915 = arith.index_cast %12 : i32 to index
      %c0_366 = arith.constant 0 : index
      %916 = vector.load %arg2[%c2_364, %c8_365, %915, %c0_366] : memref<4x16x16x128xbf16, #tpu.memory_space<vmem>>, vector<1x1x16x128xbf16>
      %917 = vector.shape_cast %916 : vector<1x1x16x128xbf16> to vector<16x128xbf16>
      %918 = arith.extf %917 : vector<16x128xbf16> to vector<16x128xf32>
      %919 = arith.maximumf %914, %918 : vector<16x128xf32>
      %c2_367 = arith.constant 2 : index
      %c9_368 = arith.constant 9 : index
      %920 = arith.index_cast %12 : i32 to index
      %c0_369 = arith.constant 0 : index
      %921 = vector.load %arg2[%c2_367, %c9_368, %920, %c0_369] : memref<4x16x16x128xbf16, #tpu.memory_space<vmem>>, vector<1x1x16x128xbf16>
      %922 = vector.shape_cast %921 : vector<1x1x16x128xbf16> to vector<16x128xbf16>
      %923 = arith.extf %922 : vector<16x128xbf16> to vector<16x128xf32>
      %924 = arith.maximumf %919, %923 : vector<16x128xf32>
      %c2_370 = arith.constant 2 : index
      %c10_371 = arith.constant 10 : index
      %925 = arith.index_cast %12 : i32 to index
      %c0_372 = arith.constant 0 : index
      %926 = vector.load %arg2[%c2_370, %c10_371, %925, %c0_372] : memref<4x16x16x128xbf16, #tpu.memory_space<vmem>>, vector<1x1x16x128xbf16>
      %927 = vector.shape_cast %926 : vector<1x1x16x128xbf16> to vector<16x128xbf16>
      %928 = arith.extf %927 : vector<16x128xbf16> to vector<16x128xf32>
      %929 = arith.maximumf %924, %928 : vector<16x128xf32>
      %c2_373 = arith.constant 2 : index
      %c11_374 = arith.constant 11 : index
      %930 = arith.index_cast %12 : i32 to index
      %c0_375 = arith.constant 0 : index
      %931 = vector.load %arg2[%c2_373, %c11_374, %930, %c0_375] : memref<4x16x16x128xbf16, #tpu.memory_space<vmem>>, vector<1x1x16x128xbf16>
      %932 = vector.shape_cast %931 : vector<1x1x16x128xbf16> to vector<16x128xbf16>
      %933 = arith.extf %932 : vector<16x128xbf16> to vector<16x128xf32>
      %934 = arith.maximumf %929, %933 : vector<16x128xf32>
      %c2_376 = arith.constant 2 : index
      %c12_377 = arith.constant 12 : index
      %935 = arith.index_cast %12 : i32 to index
      %c0_378 = arith.constant 0 : index
      %936 = vector.load %arg2[%c2_376, %c12_377, %935, %c0_378] : memref<4x16x16x128xbf16, #tpu.memory_space<vmem>>, vector<1x1x16x128xbf16>
      %937 = vector.shape_cast %936 : vector<1x1x16x128xbf16> to vector<16x128xbf16>
      %938 = arith.extf %937 : vector<16x128xbf16> to vector<16x128xf32>
      %939 = arith.maximumf %934, %938 : vector<16x128xf32>
      %c2_379 = arith.constant 2 : index
      %c13_380 = arith.constant 13 : index
      %940 = arith.index_cast %12 : i32 to index
      %c0_381 = arith.constant 0 : index
      %941 = vector.load %arg2[%c2_379, %c13_380, %940, %c0_381] : memref<4x16x16x128xbf16, #tpu.memory_space<vmem>>, vector<1x1x16x128xbf16>
      %942 = vector.shape_cast %941 : vector<1x1x16x128xbf16> to vector<16x128xbf16>
      %943 = arith.extf %942 : vector<16x128xbf16> to vector<16x128xf32>
      %944 = arith.maximumf %939, %943 : vector<16x128xf32>
      %c2_382 = arith.constant 2 : index
      %c14_383 = arith.constant 14 : index
      %945 = arith.index_cast %12 : i32 to index
      %c0_384 = arith.constant 0 : index
      %946 = vector.load %arg2[%c2_382, %c14_383, %945, %c0_384] : memref<4x16x16x128xbf16, #tpu.memory_space<vmem>>, vector<1x1x16x128xbf16>
      %947 = vector.shape_cast %946 : vector<1x1x16x128xbf16> to vector<16x128xbf16>
      %948 = arith.extf %947 : vector<16x128xbf16> to vector<16x128xf32>
      %949 = arith.maximumf %944, %948 : vector<16x128xf32>
      %c2_385 = arith.constant 2 : index
      %c15_386 = arith.constant 15 : index
      %950 = arith.index_cast %12 : i32 to index
      %c0_387 = arith.constant 0 : index
      %951 = vector.load %arg2[%c2_385, %c15_386, %950, %c0_387] : memref<4x16x16x128xbf16, #tpu.memory_space<vmem>>, vector<1x1x16x128xbf16>
      %952 = vector.shape_cast %951 : vector<1x1x16x128xbf16> to vector<16x128xbf16>
      %953 = arith.extf %952 : vector<16x128xbf16> to vector<16x128xf32>
      %954 = arith.maximumf %949, %953 : vector<16x128xf32>
      %cst_388 = arith.constant 0.000000e+00 : f32
      %955 = vector.broadcast %cst_388 : f32 to vector<16x128xf32>
      %cst_389 = arith.constant 0.000000e+00 : f32
      %956 = vector.broadcast %cst_389 : f32 to vector<16x128xf32>
      %c2_390 = arith.constant 2 : index
      %c0_391 = arith.constant 0 : index
      %957 = arith.index_cast %12 : i32 to index
      %c0_392 = arith.constant 0 : index
      %958 = vector.load %arg2[%c2_390, %c0_391, %957, %c0_392] : memref<4x16x16x128xbf16, #tpu.memory_space<vmem>>, vector<1x1x16x128xbf16>
      %959 = vector.shape_cast %958 : vector<1x1x16x128xbf16> to vector<16x128xbf16>
      %960 = arith.extf %959 : vector<16x128xbf16> to vector<16x128xf32>
      %961 = arith.subf %960, %954 : vector<16x128xf32>
      %962 = math.exp %961 : vector<16x128xf32>
      %963 = arith.addf %955, %962 : vector<16x128xf32>
      %cst_393 = arith.constant 0.000000e+00 : f32
      %964 = vector.broadcast %cst_393 : f32 to vector<16x128xf32>
      %965 = arith.subf %875, %964 : vector<16x128xf32>
      %966 = math.absf %965 : vector<16x128xf32>
      %cst_394 = arith.constant 1.000000e+00 : f32
      %967 = vector.broadcast %cst_394 : f32 to vector<16x128xf32>
      %968 = arith.subf %967, %966 : vector<16x128xf32>
      %cst_395 = arith.constant 0.000000e+00 : f32
      %969 = vector.broadcast %cst_395 : f32 to vector<16x128xf32>
      %970 = arith.maximumf %969, %968 : vector<16x128xf32>
      %971 = arith.mulf %960, %970 : vector<16x128xf32>
      %972 = arith.addf %956, %971 : vector<16x128xf32>
      %c2_396 = arith.constant 2 : index
      %c1_397 = arith.constant 1 : index
      %973 = arith.index_cast %12 : i32 to index
      %c0_398 = arith.constant 0 : index
      %974 = vector.load %arg2[%c2_396, %c1_397, %973, %c0_398] : memref<4x16x16x128xbf16, #tpu.memory_space<vmem>>, vector<1x1x16x128xbf16>
      %975 = vector.shape_cast %974 : vector<1x1x16x128xbf16> to vector<16x128xbf16>
      %976 = arith.extf %975 : vector<16x128xbf16> to vector<16x128xf32>
      %977 = arith.subf %976, %954 : vector<16x128xf32>
      %978 = math.exp %977 : vector<16x128xf32>
      %979 = arith.addf %963, %978 : vector<16x128xf32>
      %cst_399 = arith.constant 1.000000e+00 : f32
      %980 = vector.broadcast %cst_399 : f32 to vector<16x128xf32>
      %981 = arith.subf %875, %980 : vector<16x128xf32>
      %982 = math.absf %981 : vector<16x128xf32>
      %cst_400 = arith.constant 1.000000e+00 : f32
      %983 = vector.broadcast %cst_400 : f32 to vector<16x128xf32>
      %984 = arith.subf %983, %982 : vector<16x128xf32>
      %cst_401 = arith.constant 0.000000e+00 : f32
      %985 = vector.broadcast %cst_401 : f32 to vector<16x128xf32>
      %986 = arith.maximumf %985, %984 : vector<16x128xf32>
      %987 = arith.mulf %976, %986 : vector<16x128xf32>
      %988 = arith.addf %972, %987 : vector<16x128xf32>
      %c2_402 = arith.constant 2 : index
      %c2_403 = arith.constant 2 : index
      %989 = arith.index_cast %12 : i32 to index
      %c0_404 = arith.constant 0 : index
      %990 = vector.load %arg2[%c2_402, %c2_403, %989, %c0_404] : memref<4x16x16x128xbf16, #tpu.memory_space<vmem>>, vector<1x1x16x128xbf16>
      %991 = vector.shape_cast %990 : vector<1x1x16x128xbf16> to vector<16x128xbf16>
      %992 = arith.extf %991 : vector<16x128xbf16> to vector<16x128xf32>
      %993 = arith.subf %992, %954 : vector<16x128xf32>
      %994 = math.exp %993 : vector<16x128xf32>
      %995 = arith.addf %979, %994 : vector<16x128xf32>
      %cst_405 = arith.constant 2.000000e+00 : f32
      %996 = vector.broadcast %cst_405 : f32 to vector<16x128xf32>
      %997 = arith.subf %875, %996 : vector<16x128xf32>
      %998 = math.absf %997 : vector<16x128xf32>
      %cst_406 = arith.constant 1.000000e+00 : f32
      %999 = vector.broadcast %cst_406 : f32 to vector<16x128xf32>
      %1000 = arith.subf %999, %998 : vector<16x128xf32>
      %cst_407 = arith.constant 0.000000e+00 : f32
      %1001 = vector.broadcast %cst_407 : f32 to vector<16x128xf32>
      %1002 = arith.maximumf %1001, %1000 : vector<16x128xf32>
      %1003 = arith.mulf %992, %1002 : vector<16x128xf32>
      %1004 = arith.addf %988, %1003 : vector<16x128xf32>
      %c2_408 = arith.constant 2 : index
      %c3_409 = arith.constant 3 : index
      %1005 = arith.index_cast %12 : i32 to index
      %c0_410 = arith.constant 0 : index
      %1006 = vector.load %arg2[%c2_408, %c3_409, %1005, %c0_410] : memref<4x16x16x128xbf16, #tpu.memory_space<vmem>>, vector<1x1x16x128xbf16>
      %1007 = vector.shape_cast %1006 : vector<1x1x16x128xbf16> to vector<16x128xbf16>
      %1008 = arith.extf %1007 : vector<16x128xbf16> to vector<16x128xf32>
      %1009 = arith.subf %1008, %954 : vector<16x128xf32>
      %1010 = math.exp %1009 : vector<16x128xf32>
      %1011 = arith.addf %995, %1010 : vector<16x128xf32>
      %cst_411 = arith.constant 3.000000e+00 : f32
      %1012 = vector.broadcast %cst_411 : f32 to vector<16x128xf32>
      %1013 = arith.subf %875, %1012 : vector<16x128xf32>
      %1014 = math.absf %1013 : vector<16x128xf32>
      %cst_412 = arith.constant 1.000000e+00 : f32
      %1015 = vector.broadcast %cst_412 : f32 to vector<16x128xf32>
      %1016 = arith.subf %1015, %1014 : vector<16x128xf32>
      %cst_413 = arith.constant 0.000000e+00 : f32
      %1017 = vector.broadcast %cst_413 : f32 to vector<16x128xf32>
      %1018 = arith.maximumf %1017, %1016 : vector<16x128xf32>
      %1019 = arith.mulf %1008, %1018 : vector<16x128xf32>
      %1020 = arith.addf %1004, %1019 : vector<16x128xf32>
      %c2_414 = arith.constant 2 : index
      %c4_415 = arith.constant 4 : index
      %1021 = arith.index_cast %12 : i32 to index
      %c0_416 = arith.constant 0 : index
      %1022 = vector.load %arg2[%c2_414, %c4_415, %1021, %c0_416] : memref<4x16x16x128xbf16, #tpu.memory_space<vmem>>, vector<1x1x16x128xbf16>
      %1023 = vector.shape_cast %1022 : vector<1x1x16x128xbf16> to vector<16x128xbf16>
      %1024 = arith.extf %1023 : vector<16x128xbf16> to vector<16x128xf32>
      %1025 = arith.subf %1024, %954 : vector<16x128xf32>
      %1026 = math.exp %1025 : vector<16x128xf32>
      %1027 = arith.addf %1011, %1026 : vector<16x128xf32>
      %cst_417 = arith.constant 4.000000e+00 : f32
      %1028 = vector.broadcast %cst_417 : f32 to vector<16x128xf32>
      %1029 = arith.subf %875, %1028 : vector<16x128xf32>
      %1030 = math.absf %1029 : vector<16x128xf32>
      %cst_418 = arith.constant 1.000000e+00 : f32
      %1031 = vector.broadcast %cst_418 : f32 to vector<16x128xf32>
      %1032 = arith.subf %1031, %1030 : vector<16x128xf32>
      %cst_419 = arith.constant 0.000000e+00 : f32
      %1033 = vector.broadcast %cst_419 : f32 to vector<16x128xf32>
      %1034 = arith.maximumf %1033, %1032 : vector<16x128xf32>
      %1035 = arith.mulf %1024, %1034 : vector<16x128xf32>
      %1036 = arith.addf %1020, %1035 : vector<16x128xf32>
      %c2_420 = arith.constant 2 : index
      %c5_421 = arith.constant 5 : index
      %1037 = arith.index_cast %12 : i32 to index
      %c0_422 = arith.constant 0 : index
      %1038 = vector.load %arg2[%c2_420, %c5_421, %1037, %c0_422] : memref<4x16x16x128xbf16, #tpu.memory_space<vmem>>, vector<1x1x16x128xbf16>
      %1039 = vector.shape_cast %1038 : vector<1x1x16x128xbf16> to vector<16x128xbf16>
      %1040 = arith.extf %1039 : vector<16x128xbf16> to vector<16x128xf32>
      %1041 = arith.subf %1040, %954 : vector<16x128xf32>
      %1042 = math.exp %1041 : vector<16x128xf32>
      %1043 = arith.addf %1027, %1042 : vector<16x128xf32>
      %cst_423 = arith.constant 5.000000e+00 : f32
      %1044 = vector.broadcast %cst_423 : f32 to vector<16x128xf32>
      %1045 = arith.subf %875, %1044 : vector<16x128xf32>
      %1046 = math.absf %1045 : vector<16x128xf32>
      %cst_424 = arith.constant 1.000000e+00 : f32
      %1047 = vector.broadcast %cst_424 : f32 to vector<16x128xf32>
      %1048 = arith.subf %1047, %1046 : vector<16x128xf32>
      %cst_425 = arith.constant 0.000000e+00 : f32
      %1049 = vector.broadcast %cst_425 : f32 to vector<16x128xf32>
      %1050 = arith.maximumf %1049, %1048 : vector<16x128xf32>
      %1051 = arith.mulf %1040, %1050 : vector<16x128xf32>
      %1052 = arith.addf %1036, %1051 : vector<16x128xf32>
      %c2_426 = arith.constant 2 : index
      %c6_427 = arith.constant 6 : index
      %1053 = arith.index_cast %12 : i32 to index
      %c0_428 = arith.constant 0 : index
      %1054 = vector.load %arg2[%c2_426, %c6_427, %1053, %c0_428] : memref<4x16x16x128xbf16, #tpu.memory_space<vmem>>, vector<1x1x16x128xbf16>
      %1055 = vector.shape_cast %1054 : vector<1x1x16x128xbf16> to vector<16x128xbf16>
      %1056 = arith.extf %1055 : vector<16x128xbf16> to vector<16x128xf32>
      %1057 = arith.subf %1056, %954 : vector<16x128xf32>
      %1058 = math.exp %1057 : vector<16x128xf32>
      %1059 = arith.addf %1043, %1058 : vector<16x128xf32>
      %cst_429 = arith.constant 6.000000e+00 : f32
      %1060 = vector.broadcast %cst_429 : f32 to vector<16x128xf32>
      %1061 = arith.subf %875, %1060 : vector<16x128xf32>
      %1062 = math.absf %1061 : vector<16x128xf32>
      %cst_430 = arith.constant 1.000000e+00 : f32
      %1063 = vector.broadcast %cst_430 : f32 to vector<16x128xf32>
      %1064 = arith.subf %1063, %1062 : vector<16x128xf32>
      %cst_431 = arith.constant 0.000000e+00 : f32
      %1065 = vector.broadcast %cst_431 : f32 to vector<16x128xf32>
      %1066 = arith.maximumf %1065, %1064 : vector<16x128xf32>
      %1067 = arith.mulf %1056, %1066 : vector<16x128xf32>
      %1068 = arith.addf %1052, %1067 : vector<16x128xf32>
      %c2_432 = arith.constant 2 : index
      %c7_433 = arith.constant 7 : index
      %1069 = arith.index_cast %12 : i32 to index
      %c0_434 = arith.constant 0 : index
      %1070 = vector.load %arg2[%c2_432, %c7_433, %1069, %c0_434] : memref<4x16x16x128xbf16, #tpu.memory_space<vmem>>, vector<1x1x16x128xbf16>
      %1071 = vector.shape_cast %1070 : vector<1x1x16x128xbf16> to vector<16x128xbf16>
      %1072 = arith.extf %1071 : vector<16x128xbf16> to vector<16x128xf32>
      %1073 = arith.subf %1072, %954 : vector<16x128xf32>
      %1074 = math.exp %1073 : vector<16x128xf32>
      %1075 = arith.addf %1059, %1074 : vector<16x128xf32>
      %cst_435 = arith.constant 7.000000e+00 : f32
      %1076 = vector.broadcast %cst_435 : f32 to vector<16x128xf32>
      %1077 = arith.subf %875, %1076 : vector<16x128xf32>
      %1078 = math.absf %1077 : vector<16x128xf32>
      %cst_436 = arith.constant 1.000000e+00 : f32
      %1079 = vector.broadcast %cst_436 : f32 to vector<16x128xf32>
      %1080 = arith.subf %1079, %1078 : vector<16x128xf32>
      %cst_437 = arith.constant 0.000000e+00 : f32
      %1081 = vector.broadcast %cst_437 : f32 to vector<16x128xf32>
      %1082 = arith.maximumf %1081, %1080 : vector<16x128xf32>
      %1083 = arith.mulf %1072, %1082 : vector<16x128xf32>
      %1084 = arith.addf %1068, %1083 : vector<16x128xf32>
      %c2_438 = arith.constant 2 : index
      %c8_439 = arith.constant 8 : index
      %1085 = arith.index_cast %12 : i32 to index
      %c0_440 = arith.constant 0 : index
      %1086 = vector.load %arg2[%c2_438, %c8_439, %1085, %c0_440] : memref<4x16x16x128xbf16, #tpu.memory_space<vmem>>, vector<1x1x16x128xbf16>
      %1087 = vector.shape_cast %1086 : vector<1x1x16x128xbf16> to vector<16x128xbf16>
      %1088 = arith.extf %1087 : vector<16x128xbf16> to vector<16x128xf32>
      %1089 = arith.subf %1088, %954 : vector<16x128xf32>
      %1090 = math.exp %1089 : vector<16x128xf32>
      %1091 = arith.addf %1075, %1090 : vector<16x128xf32>
      %cst_441 = arith.constant 8.000000e+00 : f32
      %1092 = vector.broadcast %cst_441 : f32 to vector<16x128xf32>
      %1093 = arith.subf %875, %1092 : vector<16x128xf32>
      %1094 = math.absf %1093 : vector<16x128xf32>
      %cst_442 = arith.constant 1.000000e+00 : f32
      %1095 = vector.broadcast %cst_442 : f32 to vector<16x128xf32>
      %1096 = arith.subf %1095, %1094 : vector<16x128xf32>
      %cst_443 = arith.constant 0.000000e+00 : f32
      %1097 = vector.broadcast %cst_443 : f32 to vector<16x128xf32>
      %1098 = arith.maximumf %1097, %1096 : vector<16x128xf32>
      %1099 = arith.mulf %1088, %1098 : vector<16x128xf32>
      %1100 = arith.addf %1084, %1099 : vector<16x128xf32>
      %c2_444 = arith.constant 2 : index
      %c9_445 = arith.constant 9 : index
      %1101 = arith.index_cast %12 : i32 to index
      %c0_446 = arith.constant 0 : index
      %1102 = vector.load %arg2[%c2_444, %c9_445, %1101, %c0_446] : memref<4x16x16x128xbf16, #tpu.memory_space<vmem>>, vector<1x1x16x128xbf16>
      %1103 = vector.shape_cast %1102 : vector<1x1x16x128xbf16> to vector<16x128xbf16>
      %1104 = arith.extf %1103 : vector<16x128xbf16> to vector<16x128xf32>
      %1105 = arith.subf %1104, %954 : vector<16x128xf32>
      %1106 = math.exp %1105 : vector<16x128xf32>
      %1107 = arith.addf %1091, %1106 : vector<16x128xf32>
      %cst_447 = arith.constant 9.000000e+00 : f32
      %1108 = vector.broadcast %cst_447 : f32 to vector<16x128xf32>
      %1109 = arith.subf %875, %1108 : vector<16x128xf32>
      %1110 = math.absf %1109 : vector<16x128xf32>
      %cst_448 = arith.constant 1.000000e+00 : f32
      %1111 = vector.broadcast %cst_448 : f32 to vector<16x128xf32>
      %1112 = arith.subf %1111, %1110 : vector<16x128xf32>
      %cst_449 = arith.constant 0.000000e+00 : f32
      %1113 = vector.broadcast %cst_449 : f32 to vector<16x128xf32>
      %1114 = arith.maximumf %1113, %1112 : vector<16x128xf32>
      %1115 = arith.mulf %1104, %1114 : vector<16x128xf32>
      %1116 = arith.addf %1100, %1115 : vector<16x128xf32>
      %c2_450 = arith.constant 2 : index
      %c10_451 = arith.constant 10 : index
      %1117 = arith.index_cast %12 : i32 to index
      %c0_452 = arith.constant 0 : index
      %1118 = vector.load %arg2[%c2_450, %c10_451, %1117, %c0_452] : memref<4x16x16x128xbf16, #tpu.memory_space<vmem>>, vector<1x1x16x128xbf16>
      %1119 = vector.shape_cast %1118 : vector<1x1x16x128xbf16> to vector<16x128xbf16>
      %1120 = arith.extf %1119 : vector<16x128xbf16> to vector<16x128xf32>
      %1121 = arith.subf %1120, %954 : vector<16x128xf32>
      %1122 = math.exp %1121 : vector<16x128xf32>
      %1123 = arith.addf %1107, %1122 : vector<16x128xf32>
      %cst_453 = arith.constant 1.000000e+01 : f32
      %1124 = vector.broadcast %cst_453 : f32 to vector<16x128xf32>
      %1125 = arith.subf %875, %1124 : vector<16x128xf32>
      %1126 = math.absf %1125 : vector<16x128xf32>
      %cst_454 = arith.constant 1.000000e+00 : f32
      %1127 = vector.broadcast %cst_454 : f32 to vector<16x128xf32>
      %1128 = arith.subf %1127, %1126 : vector<16x128xf32>
      %cst_455 = arith.constant 0.000000e+00 : f32
      %1129 = vector.broadcast %cst_455 : f32 to vector<16x128xf32>
      %1130 = arith.maximumf %1129, %1128 : vector<16x128xf32>
      %1131 = arith.mulf %1120, %1130 : vector<16x128xf32>
      %1132 = arith.addf %1116, %1131 : vector<16x128xf32>
      %c2_456 = arith.constant 2 : index
      %c11_457 = arith.constant 11 : index
      %1133 = arith.index_cast %12 : i32 to index
      %c0_458 = arith.constant 0 : index
      %1134 = vector.load %arg2[%c2_456, %c11_457, %1133, %c0_458] : memref<4x16x16x128xbf16, #tpu.memory_space<vmem>>, vector<1x1x16x128xbf16>
      %1135 = vector.shape_cast %1134 : vector<1x1x16x128xbf16> to vector<16x128xbf16>
      %1136 = arith.extf %1135 : vector<16x128xbf16> to vector<16x128xf32>
      %1137 = arith.subf %1136, %954 : vector<16x128xf32>
      %1138 = math.exp %1137 : vector<16x128xf32>
      %1139 = arith.addf %1123, %1138 : vector<16x128xf32>
      %cst_459 = arith.constant 1.100000e+01 : f32
      %1140 = vector.broadcast %cst_459 : f32 to vector<16x128xf32>
      %1141 = arith.subf %875, %1140 : vector<16x128xf32>
      %1142 = math.absf %1141 : vector<16x128xf32>
      %cst_460 = arith.constant 1.000000e+00 : f32
      %1143 = vector.broadcast %cst_460 : f32 to vector<16x128xf32>
      %1144 = arith.subf %1143, %1142 : vector<16x128xf32>
      %cst_461 = arith.constant 0.000000e+00 : f32
      %1145 = vector.broadcast %cst_461 : f32 to vector<16x128xf32>
      %1146 = arith.maximumf %1145, %1144 : vector<16x128xf32>
      %1147 = arith.mulf %1136, %1146 : vector<16x128xf32>
      %1148 = arith.addf %1132, %1147 : vector<16x128xf32>
      %c2_462 = arith.constant 2 : index
      %c12_463 = arith.constant 12 : index
      %1149 = arith.index_cast %12 : i32 to index
      %c0_464 = arith.constant 0 : index
      %1150 = vector.load %arg2[%c2_462, %c12_463, %1149, %c0_464] : memref<4x16x16x128xbf16, #tpu.memory_space<vmem>>, vector<1x1x16x128xbf16>
      %1151 = vector.shape_cast %1150 : vector<1x1x16x128xbf16> to vector<16x128xbf16>
      %1152 = arith.extf %1151 : vector<16x128xbf16> to vector<16x128xf32>
      %1153 = arith.subf %1152, %954 : vector<16x128xf32>
      %1154 = math.exp %1153 : vector<16x128xf32>
      %1155 = arith.addf %1139, %1154 : vector<16x128xf32>
      %cst_465 = arith.constant 1.200000e+01 : f32
      %1156 = vector.broadcast %cst_465 : f32 to vector<16x128xf32>
      %1157 = arith.subf %875, %1156 : vector<16x128xf32>
      %1158 = math.absf %1157 : vector<16x128xf32>
      %cst_466 = arith.constant 1.000000e+00 : f32
      %1159 = vector.broadcast %cst_466 : f32 to vector<16x128xf32>
      %1160 = arith.subf %1159, %1158 : vector<16x128xf32>
      %cst_467 = arith.constant 0.000000e+00 : f32
      %1161 = vector.broadcast %cst_467 : f32 to vector<16x128xf32>
      %1162 = arith.maximumf %1161, %1160 : vector<16x128xf32>
      %1163 = arith.mulf %1152, %1162 : vector<16x128xf32>
      %1164 = arith.addf %1148, %1163 : vector<16x128xf32>
      %c2_468 = arith.constant 2 : index
      %c13_469 = arith.constant 13 : index
      %1165 = arith.index_cast %12 : i32 to index
      %c0_470 = arith.constant 0 : index
      %1166 = vector.load %arg2[%c2_468, %c13_469, %1165, %c0_470] : memref<4x16x16x128xbf16, #tpu.memory_space<vmem>>, vector<1x1x16x128xbf16>
      %1167 = vector.shape_cast %1166 : vector<1x1x16x128xbf16> to vector<16x128xbf16>
      %1168 = arith.extf %1167 : vector<16x128xbf16> to vector<16x128xf32>
      %1169 = arith.subf %1168, %954 : vector<16x128xf32>
      %1170 = math.exp %1169 : vector<16x128xf32>
      %1171 = arith.addf %1155, %1170 : vector<16x128xf32>
      %cst_471 = arith.constant 1.300000e+01 : f32
      %1172 = vector.broadcast %cst_471 : f32 to vector<16x128xf32>
      %1173 = arith.subf %875, %1172 : vector<16x128xf32>
      %1174 = math.absf %1173 : vector<16x128xf32>
      %cst_472 = arith.constant 1.000000e+00 : f32
      %1175 = vector.broadcast %cst_472 : f32 to vector<16x128xf32>
      %1176 = arith.subf %1175, %1174 : vector<16x128xf32>
      %cst_473 = arith.constant 0.000000e+00 : f32
      %1177 = vector.broadcast %cst_473 : f32 to vector<16x128xf32>
      %1178 = arith.maximumf %1177, %1176 : vector<16x128xf32>
      %1179 = arith.mulf %1168, %1178 : vector<16x128xf32>
      %1180 = arith.addf %1164, %1179 : vector<16x128xf32>
      %c2_474 = arith.constant 2 : index
      %c14_475 = arith.constant 14 : index
      %1181 = arith.index_cast %12 : i32 to index
      %c0_476 = arith.constant 0 : index
      %1182 = vector.load %arg2[%c2_474, %c14_475, %1181, %c0_476] : memref<4x16x16x128xbf16, #tpu.memory_space<vmem>>, vector<1x1x16x128xbf16>
      %1183 = vector.shape_cast %1182 : vector<1x1x16x128xbf16> to vector<16x128xbf16>
      %1184 = arith.extf %1183 : vector<16x128xbf16> to vector<16x128xf32>
      %1185 = arith.subf %1184, %954 : vector<16x128xf32>
      %1186 = math.exp %1185 : vector<16x128xf32>
      %1187 = arith.addf %1171, %1186 : vector<16x128xf32>
      %cst_477 = arith.constant 1.400000e+01 : f32
      %1188 = vector.broadcast %cst_477 : f32 to vector<16x128xf32>
      %1189 = arith.subf %875, %1188 : vector<16x128xf32>
      %1190 = math.absf %1189 : vector<16x128xf32>
      %cst_478 = arith.constant 1.000000e+00 : f32
      %1191 = vector.broadcast %cst_478 : f32 to vector<16x128xf32>
      %1192 = arith.subf %1191, %1190 : vector<16x128xf32>
      %cst_479 = arith.constant 0.000000e+00 : f32
      %1193 = vector.broadcast %cst_479 : f32 to vector<16x128xf32>
      %1194 = arith.maximumf %1193, %1192 : vector<16x128xf32>
      %1195 = arith.mulf %1184, %1194 : vector<16x128xf32>
      %1196 = arith.addf %1180, %1195 : vector<16x128xf32>
      %c2_480 = arith.constant 2 : index
      %c15_481 = arith.constant 15 : index
      %1197 = arith.index_cast %12 : i32 to index
      %c0_482 = arith.constant 0 : index
      %1198 = vector.load %arg2[%c2_480, %c15_481, %1197, %c0_482] : memref<4x16x16x128xbf16, #tpu.memory_space<vmem>>, vector<1x1x16x128xbf16>
      %1199 = vector.shape_cast %1198 : vector<1x1x16x128xbf16> to vector<16x128xbf16>
      %1200 = arith.extf %1199 : vector<16x128xbf16> to vector<16x128xf32>
      %1201 = arith.subf %1200, %954 : vector<16x128xf32>
      %1202 = math.exp %1201 : vector<16x128xf32>
      %1203 = arith.addf %1187, %1202 : vector<16x128xf32>
      %cst_483 = arith.constant 1.500000e+01 : f32
      %1204 = vector.broadcast %cst_483 : f32 to vector<16x128xf32>
      %1205 = arith.subf %875, %1204 : vector<16x128xf32>
      %1206 = math.absf %1205 : vector<16x128xf32>
      %cst_484 = arith.constant 1.000000e+00 : f32
      %1207 = vector.broadcast %cst_484 : f32 to vector<16x128xf32>
      %1208 = arith.subf %1207, %1206 : vector<16x128xf32>
      %cst_485 = arith.constant 0.000000e+00 : f32
      %1209 = vector.broadcast %cst_485 : f32 to vector<16x128xf32>
      %1210 = arith.maximumf %1209, %1208 : vector<16x128xf32>
      %1211 = arith.mulf %1200, %1210 : vector<16x128xf32>
      %1212 = arith.addf %1196, %1211 : vector<16x128xf32>
      %1213 = math.log %1203 : vector<16x128xf32>
      %1214 = arith.addf %1213, %954 : vector<16x128xf32>
      %1215 = arith.subf %1214, %1212 : vector<16x128xf32>
      %1216 = arith.addf %871, %1215 : vector<16x128xf32>
      %cst_486 = arith.constant 0.000000e+00 : f32
      %cst_487 = arith.constant 1.499000e+01 : f32
      %1217 = vector.broadcast %cst_486 : f32 to vector<16x128xf32>
      %1218 = arith.maximumf %1217, %180 : vector<16x128xf32>
      %1219 = vector.broadcast %cst_487 : f32 to vector<16x128xf32>
      %1220 = arith.minimumf %1219, %1218 : vector<16x128xf32>
      %c3_488 = arith.constant 3 : index
      %c0_489 = arith.constant 0 : index
      %1221 = arith.index_cast %12 : i32 to index
      %c0_490 = arith.constant 0 : index
      %1222 = vector.load %arg2[%c3_488, %c0_489, %1221, %c0_490] : memref<4x16x16x128xbf16, #tpu.memory_space<vmem>>, vector<1x1x16x128xbf16>
      %1223 = vector.shape_cast %1222 : vector<1x1x16x128xbf16> to vector<16x128xbf16>
      %1224 = arith.extf %1223 : vector<16x128xbf16> to vector<16x128xf32>
      %c3_491 = arith.constant 3 : index
      %c1_492 = arith.constant 1 : index
      %1225 = arith.index_cast %12 : i32 to index
      %c0_493 = arith.constant 0 : index
      %1226 = vector.load %arg2[%c3_491, %c1_492, %1225, %c0_493] : memref<4x16x16x128xbf16, #tpu.memory_space<vmem>>, vector<1x1x16x128xbf16>
      %1227 = vector.shape_cast %1226 : vector<1x1x16x128xbf16> to vector<16x128xbf16>
      %1228 = arith.extf %1227 : vector<16x128xbf16> to vector<16x128xf32>
      %1229 = arith.maximumf %1224, %1228 : vector<16x128xf32>
      %c3_494 = arith.constant 3 : index
      %c2_495 = arith.constant 2 : index
      %1230 = arith.index_cast %12 : i32 to index
      %c0_496 = arith.constant 0 : index
      %1231 = vector.load %arg2[%c3_494, %c2_495, %1230, %c0_496] : memref<4x16x16x128xbf16, #tpu.memory_space<vmem>>, vector<1x1x16x128xbf16>
      %1232 = vector.shape_cast %1231 : vector<1x1x16x128xbf16> to vector<16x128xbf16>
      %1233 = arith.extf %1232 : vector<16x128xbf16> to vector<16x128xf32>
      %1234 = arith.maximumf %1229, %1233 : vector<16x128xf32>
      %c3_497 = arith.constant 3 : index
      %c3_498 = arith.constant 3 : index
      %1235 = arith.index_cast %12 : i32 to index
      %c0_499 = arith.constant 0 : index
      %1236 = vector.load %arg2[%c3_497, %c3_498, %1235, %c0_499] : memref<4x16x16x128xbf16, #tpu.memory_space<vmem>>, vector<1x1x16x128xbf16>
      %1237 = vector.shape_cast %1236 : vector<1x1x16x128xbf16> to vector<16x128xbf16>
      %1238 = arith.extf %1237 : vector<16x128xbf16> to vector<16x128xf32>
      %1239 = arith.maximumf %1234, %1238 : vector<16x128xf32>
      %c3_500 = arith.constant 3 : index
      %c4_501 = arith.constant 4 : index
      %1240 = arith.index_cast %12 : i32 to index
      %c0_502 = arith.constant 0 : index
      %1241 = vector.load %arg2[%c3_500, %c4_501, %1240, %c0_502] : memref<4x16x16x128xbf16, #tpu.memory_space<vmem>>, vector<1x1x16x128xbf16>
      %1242 = vector.shape_cast %1241 : vector<1x1x16x128xbf16> to vector<16x128xbf16>
      %1243 = arith.extf %1242 : vector<16x128xbf16> to vector<16x128xf32>
      %1244 = arith.maximumf %1239, %1243 : vector<16x128xf32>
      %c3_503 = arith.constant 3 : index
      %c5_504 = arith.constant 5 : index
      %1245 = arith.index_cast %12 : i32 to index
      %c0_505 = arith.constant 0 : index
      %1246 = vector.load %arg2[%c3_503, %c5_504, %1245, %c0_505] : memref<4x16x16x128xbf16, #tpu.memory_space<vmem>>, vector<1x1x16x128xbf16>
      %1247 = vector.shape_cast %1246 : vector<1x1x16x128xbf16> to vector<16x128xbf16>
      %1248 = arith.extf %1247 : vector<16x128xbf16> to vector<16x128xf32>
      %1249 = arith.maximumf %1244, %1248 : vector<16x128xf32>
      %c3_506 = arith.constant 3 : index
      %c6_507 = arith.constant 6 : index
      %1250 = arith.index_cast %12 : i32 to index
      %c0_508 = arith.constant 0 : index
      %1251 = vector.load %arg2[%c3_506, %c6_507, %1250, %c0_508] : memref<4x16x16x128xbf16, #tpu.memory_space<vmem>>, vector<1x1x16x128xbf16>
      %1252 = vector.shape_cast %1251 : vector<1x1x16x128xbf16> to vector<16x128xbf16>
      %1253 = arith.extf %1252 : vector<16x128xbf16> to vector<16x128xf32>
      %1254 = arith.maximumf %1249, %1253 : vector<16x128xf32>
      %c3_509 = arith.constant 3 : index
      %c7_510 = arith.constant 7 : index
      %1255 = arith.index_cast %12 : i32 to index
      %c0_511 = arith.constant 0 : index
      %1256 = vector.load %arg2[%c3_509, %c7_510, %1255, %c0_511] : memref<4x16x16x128xbf16, #tpu.memory_space<vmem>>, vector<1x1x16x128xbf16>
      %1257 = vector.shape_cast %1256 : vector<1x1x16x128xbf16> to vector<16x128xbf16>
      %1258 = arith.extf %1257 : vector<16x128xbf16> to vector<16x128xf32>
      %1259 = arith.maximumf %1254, %1258 : vector<16x128xf32>
      %c3_512 = arith.constant 3 : index
      %c8_513 = arith.constant 8 : index
      %1260 = arith.index_cast %12 : i32 to index
      %c0_514 = arith.constant 0 : index
      %1261 = vector.load %arg2[%c3_512, %c8_513, %1260, %c0_514] : memref<4x16x16x128xbf16, #tpu.memory_space<vmem>>, vector<1x1x16x128xbf16>
      %1262 = vector.shape_cast %1261 : vector<1x1x16x128xbf16> to vector<16x128xbf16>
      %1263 = arith.extf %1262 : vector<16x128xbf16> to vector<16x128xf32>
      %1264 = arith.maximumf %1259, %1263 : vector<16x128xf32>
      %c3_515 = arith.constant 3 : index
      %c9_516 = arith.constant 9 : index
      %1265 = arith.index_cast %12 : i32 to index
      %c0_517 = arith.constant 0 : index
      %1266 = vector.load %arg2[%c3_515, %c9_516, %1265, %c0_517] : memref<4x16x16x128xbf16, #tpu.memory_space<vmem>>, vector<1x1x16x128xbf16>
      %1267 = vector.shape_cast %1266 : vector<1x1x16x128xbf16> to vector<16x128xbf16>
      %1268 = arith.extf %1267 : vector<16x128xbf16> to vector<16x128xf32>
      %1269 = arith.maximumf %1264, %1268 : vector<16x128xf32>
      %c3_518 = arith.constant 3 : index
      %c10_519 = arith.constant 10 : index
      %1270 = arith.index_cast %12 : i32 to index
      %c0_520 = arith.constant 0 : index
      %1271 = vector.load %arg2[%c3_518, %c10_519, %1270, %c0_520] : memref<4x16x16x128xbf16, #tpu.memory_space<vmem>>, vector<1x1x16x128xbf16>
      %1272 = vector.shape_cast %1271 : vector<1x1x16x128xbf16> to vector<16x128xbf16>
      %1273 = arith.extf %1272 : vector<16x128xbf16> to vector<16x128xf32>
      %1274 = arith.maximumf %1269, %1273 : vector<16x128xf32>
      %c3_521 = arith.constant 3 : index
      %c11_522 = arith.constant 11 : index
      %1275 = arith.index_cast %12 : i32 to index
      %c0_523 = arith.constant 0 : index
      %1276 = vector.load %arg2[%c3_521, %c11_522, %1275, %c0_523] : memref<4x16x16x128xbf16, #tpu.memory_space<vmem>>, vector<1x1x16x128xbf16>
      %1277 = vector.shape_cast %1276 : vector<1x1x16x128xbf16> to vector<16x128xbf16>
      %1278 = arith.extf %1277 : vector<16x128xbf16> to vector<16x128xf32>
      %1279 = arith.maximumf %1274, %1278 : vector<16x128xf32>
      %c3_524 = arith.constant 3 : index
      %c12_525 = arith.constant 12 : index
      %1280 = arith.index_cast %12 : i32 to index
      %c0_526 = arith.constant 0 : index
      %1281 = vector.load %arg2[%c3_524, %c12_525, %1280, %c0_526] : memref<4x16x16x128xbf16, #tpu.memory_space<vmem>>, vector<1x1x16x128xbf16>
      %1282 = vector.shape_cast %1281 : vector<1x1x16x128xbf16> to vector<16x128xbf16>
      %1283 = arith.extf %1282 : vector<16x128xbf16> to vector<16x128xf32>
      %1284 = arith.maximumf %1279, %1283 : vector<16x128xf32>
      %c3_527 = arith.constant 3 : index
      %c13_528 = arith.constant 13 : index
      %1285 = arith.index_cast %12 : i32 to index
      %c0_529 = arith.constant 0 : index
      %1286 = vector.load %arg2[%c3_527, %c13_528, %1285, %c0_529] : memref<4x16x16x128xbf16, #tpu.memory_space<vmem>>, vector<1x1x16x128xbf16>
      %1287 = vector.shape_cast %1286 : vector<1x1x16x128xbf16> to vector<16x128xbf16>
      %1288 = arith.extf %1287 : vector<16x128xbf16> to vector<16x128xf32>
      %1289 = arith.maximumf %1284, %1288 : vector<16x128xf32>
      %c3_530 = arith.constant 3 : index
      %c14_531 = arith.constant 14 : index
      %1290 = arith.index_cast %12 : i32 to index
      %c0_532 = arith.constant 0 : index
      %1291 = vector.load %arg2[%c3_530, %c14_531, %1290, %c0_532] : memref<4x16x16x128xbf16, #tpu.memory_space<vmem>>, vector<1x1x16x128xbf16>
      %1292 = vector.shape_cast %1291 : vector<1x1x16x128xbf16> to vector<16x128xbf16>
      %1293 = arith.extf %1292 : vector<16x128xbf16> to vector<16x128xf32>
      %1294 = arith.maximumf %1289, %1293 : vector<16x128xf32>
      %c3_533 = arith.constant 3 : index
      %c15_534 = arith.constant 15 : index
      %1295 = arith.index_cast %12 : i32 to index
      %c0_535 = arith.constant 0 : index
      %1296 = vector.load %arg2[%c3_533, %c15_534, %1295, %c0_535] : memref<4x16x16x128xbf16, #tpu.memory_space<vmem>>, vector<1x1x16x128xbf16>
      %1297 = vector.shape_cast %1296 : vector<1x1x16x128xbf16> to vector<16x128xbf16>
      %1298 = arith.extf %1297 : vector<16x128xbf16> to vector<16x128xf32>
      %1299 = arith.maximumf %1294, %1298 : vector<16x128xf32>
      %cst_536 = arith.constant 0.000000e+00 : f32
      %1300 = vector.broadcast %cst_536 : f32 to vector<16x128xf32>
      %cst_537 = arith.constant 0.000000e+00 : f32
      %1301 = vector.broadcast %cst_537 : f32 to vector<16x128xf32>
      %c3_538 = arith.constant 3 : index
      %c0_539 = arith.constant 0 : index
      %1302 = arith.index_cast %12 : i32 to index
      %c0_540 = arith.constant 0 : index
      %1303 = vector.load %arg2[%c3_538, %c0_539, %1302, %c0_540] : memref<4x16x16x128xbf16, #tpu.memory_space<vmem>>, vector<1x1x16x128xbf16>
      %1304 = vector.shape_cast %1303 : vector<1x1x16x128xbf16> to vector<16x128xbf16>
      %1305 = arith.extf %1304 : vector<16x128xbf16> to vector<16x128xf32>
      %1306 = arith.subf %1305, %1299 : vector<16x128xf32>
      %1307 = math.exp %1306 : vector<16x128xf32>
      %1308 = arith.addf %1300, %1307 : vector<16x128xf32>
      %cst_541 = arith.constant 0.000000e+00 : f32
      %1309 = vector.broadcast %cst_541 : f32 to vector<16x128xf32>
      %1310 = arith.subf %1220, %1309 : vector<16x128xf32>
      %1311 = math.absf %1310 : vector<16x128xf32>
      %cst_542 = arith.constant 1.000000e+00 : f32
      %1312 = vector.broadcast %cst_542 : f32 to vector<16x128xf32>
      %1313 = arith.subf %1312, %1311 : vector<16x128xf32>
      %cst_543 = arith.constant 0.000000e+00 : f32
      %1314 = vector.broadcast %cst_543 : f32 to vector<16x128xf32>
      %1315 = arith.maximumf %1314, %1313 : vector<16x128xf32>
      %1316 = arith.mulf %1305, %1315 : vector<16x128xf32>
      %1317 = arith.addf %1301, %1316 : vector<16x128xf32>
      %c3_544 = arith.constant 3 : index
      %c1_545 = arith.constant 1 : index
      %1318 = arith.index_cast %12 : i32 to index
      %c0_546 = arith.constant 0 : index
      %1319 = vector.load %arg2[%c3_544, %c1_545, %1318, %c0_546] : memref<4x16x16x128xbf16, #tpu.memory_space<vmem>>, vector<1x1x16x128xbf16>
      %1320 = vector.shape_cast %1319 : vector<1x1x16x128xbf16> to vector<16x128xbf16>
      %1321 = arith.extf %1320 : vector<16x128xbf16> to vector<16x128xf32>
      %1322 = arith.subf %1321, %1299 : vector<16x128xf32>
      %1323 = math.exp %1322 : vector<16x128xf32>
      %1324 = arith.addf %1308, %1323 : vector<16x128xf32>
      %cst_547 = arith.constant 1.000000e+00 : f32
      %1325 = vector.broadcast %cst_547 : f32 to vector<16x128xf32>
      %1326 = arith.subf %1220, %1325 : vector<16x128xf32>
      %1327 = math.absf %1326 : vector<16x128xf32>
      %cst_548 = arith.constant 1.000000e+00 : f32
      %1328 = vector.broadcast %cst_548 : f32 to vector<16x128xf32>
      %1329 = arith.subf %1328, %1327 : vector<16x128xf32>
      %cst_549 = arith.constant 0.000000e+00 : f32
      %1330 = vector.broadcast %cst_549 : f32 to vector<16x128xf32>
      %1331 = arith.maximumf %1330, %1329 : vector<16x128xf32>
      %1332 = arith.mulf %1321, %1331 : vector<16x128xf32>
      %1333 = arith.addf %1317, %1332 : vector<16x128xf32>
      %c3_550 = arith.constant 3 : index
      %c2_551 = arith.constant 2 : index
      %1334 = arith.index_cast %12 : i32 to index
      %c0_552 = arith.constant 0 : index
      %1335 = vector.load %arg2[%c3_550, %c2_551, %1334, %c0_552] : memref<4x16x16x128xbf16, #tpu.memory_space<vmem>>, vector<1x1x16x128xbf16>
      %1336 = vector.shape_cast %1335 : vector<1x1x16x128xbf16> to vector<16x128xbf16>
      %1337 = arith.extf %1336 : vector<16x128xbf16> to vector<16x128xf32>
      %1338 = arith.subf %1337, %1299 : vector<16x128xf32>
      %1339 = math.exp %1338 : vector<16x128xf32>
      %1340 = arith.addf %1324, %1339 : vector<16x128xf32>
      %cst_553 = arith.constant 2.000000e+00 : f32
      %1341 = vector.broadcast %cst_553 : f32 to vector<16x128xf32>
      %1342 = arith.subf %1220, %1341 : vector<16x128xf32>
      %1343 = math.absf %1342 : vector<16x128xf32>
      %cst_554 = arith.constant 1.000000e+00 : f32
      %1344 = vector.broadcast %cst_554 : f32 to vector<16x128xf32>
      %1345 = arith.subf %1344, %1343 : vector<16x128xf32>
      %cst_555 = arith.constant 0.000000e+00 : f32
      %1346 = vector.broadcast %cst_555 : f32 to vector<16x128xf32>
      %1347 = arith.maximumf %1346, %1345 : vector<16x128xf32>
      %1348 = arith.mulf %1337, %1347 : vector<16x128xf32>
      %1349 = arith.addf %1333, %1348 : vector<16x128xf32>
      %c3_556 = arith.constant 3 : index
      %c3_557 = arith.constant 3 : index
      %1350 = arith.index_cast %12 : i32 to index
      %c0_558 = arith.constant 0 : index
      %1351 = vector.load %arg2[%c3_556, %c3_557, %1350, %c0_558] : memref<4x16x16x128xbf16, #tpu.memory_space<vmem>>, vector<1x1x16x128xbf16>
      %1352 = vector.shape_cast %1351 : vector<1x1x16x128xbf16> to vector<16x128xbf16>
      %1353 = arith.extf %1352 : vector<16x128xbf16> to vector<16x128xf32>
      %1354 = arith.subf %1353, %1299 : vector<16x128xf32>
      %1355 = math.exp %1354 : vector<16x128xf32>
      %1356 = arith.addf %1340, %1355 : vector<16x128xf32>
      %cst_559 = arith.constant 3.000000e+00 : f32
      %1357 = vector.broadcast %cst_559 : f32 to vector<16x128xf32>
      %1358 = arith.subf %1220, %1357 : vector<16x128xf32>
      %1359 = math.absf %1358 : vector<16x128xf32>
      %cst_560 = arith.constant 1.000000e+00 : f32
      %1360 = vector.broadcast %cst_560 : f32 to vector<16x128xf32>
      %1361 = arith.subf %1360, %1359 : vector<16x128xf32>
      %cst_561 = arith.constant 0.000000e+00 : f32
      %1362 = vector.broadcast %cst_561 : f32 to vector<16x128xf32>
      %1363 = arith.maximumf %1362, %1361 : vector<16x128xf32>
      %1364 = arith.mulf %1353, %1363 : vector<16x128xf32>
      %1365 = arith.addf %1349, %1364 : vector<16x128xf32>
      %c3_562 = arith.constant 3 : index
      %c4_563 = arith.constant 4 : index
      %1366 = arith.index_cast %12 : i32 to index
      %c0_564 = arith.constant 0 : index
      %1367 = vector.load %arg2[%c3_562, %c4_563, %1366, %c0_564] : memref<4x16x16x128xbf16, #tpu.memory_space<vmem>>, vector<1x1x16x128xbf16>
      %1368 = vector.shape_cast %1367 : vector<1x1x16x128xbf16> to vector<16x128xbf16>
      %1369 = arith.extf %1368 : vector<16x128xbf16> to vector<16x128xf32>
      %1370 = arith.subf %1369, %1299 : vector<16x128xf32>
      %1371 = math.exp %1370 : vector<16x128xf32>
      %1372 = arith.addf %1356, %1371 : vector<16x128xf32>
      %cst_565 = arith.constant 4.000000e+00 : f32
      %1373 = vector.broadcast %cst_565 : f32 to vector<16x128xf32>
      %1374 = arith.subf %1220, %1373 : vector<16x128xf32>
      %1375 = math.absf %1374 : vector<16x128xf32>
      %cst_566 = arith.constant 1.000000e+00 : f32
      %1376 = vector.broadcast %cst_566 : f32 to vector<16x128xf32>
      %1377 = arith.subf %1376, %1375 : vector<16x128xf32>
      %cst_567 = arith.constant 0.000000e+00 : f32
      %1378 = vector.broadcast %cst_567 : f32 to vector<16x128xf32>
      %1379 = arith.maximumf %1378, %1377 : vector<16x128xf32>
      %1380 = arith.mulf %1369, %1379 : vector<16x128xf32>
      %1381 = arith.addf %1365, %1380 : vector<16x128xf32>
      %c3_568 = arith.constant 3 : index
      %c5_569 = arith.constant 5 : index
      %1382 = arith.index_cast %12 : i32 to index
      %c0_570 = arith.constant 0 : index
      %1383 = vector.load %arg2[%c3_568, %c5_569, %1382, %c0_570] : memref<4x16x16x128xbf16, #tpu.memory_space<vmem>>, vector<1x1x16x128xbf16>
      %1384 = vector.shape_cast %1383 : vector<1x1x16x128xbf16> to vector<16x128xbf16>
      %1385 = arith.extf %1384 : vector<16x128xbf16> to vector<16x128xf32>
      %1386 = arith.subf %1385, %1299 : vector<16x128xf32>
      %1387 = math.exp %1386 : vector<16x128xf32>
      %1388 = arith.addf %1372, %1387 : vector<16x128xf32>
      %cst_571 = arith.constant 5.000000e+00 : f32
      %1389 = vector.broadcast %cst_571 : f32 to vector<16x128xf32>
      %1390 = arith.subf %1220, %1389 : vector<16x128xf32>
      %1391 = math.absf %1390 : vector<16x128xf32>
      %cst_572 = arith.constant 1.000000e+00 : f32
      %1392 = vector.broadcast %cst_572 : f32 to vector<16x128xf32>
      %1393 = arith.subf %1392, %1391 : vector<16x128xf32>
      %cst_573 = arith.constant 0.000000e+00 : f32
      %1394 = vector.broadcast %cst_573 : f32 to vector<16x128xf32>
      %1395 = arith.maximumf %1394, %1393 : vector<16x128xf32>
      %1396 = arith.mulf %1385, %1395 : vector<16x128xf32>
      %1397 = arith.addf %1381, %1396 : vector<16x128xf32>
      %c3_574 = arith.constant 3 : index
      %c6_575 = arith.constant 6 : index
      %1398 = arith.index_cast %12 : i32 to index
      %c0_576 = arith.constant 0 : index
      %1399 = vector.load %arg2[%c3_574, %c6_575, %1398, %c0_576] : memref<4x16x16x128xbf16, #tpu.memory_space<vmem>>, vector<1x1x16x128xbf16>
      %1400 = vector.shape_cast %1399 : vector<1x1x16x128xbf16> to vector<16x128xbf16>
      %1401 = arith.extf %1400 : vector<16x128xbf16> to vector<16x128xf32>
      %1402 = arith.subf %1401, %1299 : vector<16x128xf32>
      %1403 = math.exp %1402 : vector<16x128xf32>
      %1404 = arith.addf %1388, %1403 : vector<16x128xf32>
      %cst_577 = arith.constant 6.000000e+00 : f32
      %1405 = vector.broadcast %cst_577 : f32 to vector<16x128xf32>
      %1406 = arith.subf %1220, %1405 : vector<16x128xf32>
      %1407 = math.absf %1406 : vector<16x128xf32>
      %cst_578 = arith.constant 1.000000e+00 : f32
      %1408 = vector.broadcast %cst_578 : f32 to vector<16x128xf32>
      %1409 = arith.subf %1408, %1407 : vector<16x128xf32>
      %cst_579 = arith.constant 0.000000e+00 : f32
      %1410 = vector.broadcast %cst_579 : f32 to vector<16x128xf32>
      %1411 = arith.maximumf %1410, %1409 : vector<16x128xf32>
      %1412 = arith.mulf %1401, %1411 : vector<16x128xf32>
      %1413 = arith.addf %1397, %1412 : vector<16x128xf32>
      %c3_580 = arith.constant 3 : index
      %c7_581 = arith.constant 7 : index
      %1414 = arith.index_cast %12 : i32 to index
      %c0_582 = arith.constant 0 : index
      %1415 = vector.load %arg2[%c3_580, %c7_581, %1414, %c0_582] : memref<4x16x16x128xbf16, #tpu.memory_space<vmem>>, vector<1x1x16x128xbf16>
      %1416 = vector.shape_cast %1415 : vector<1x1x16x128xbf16> to vector<16x128xbf16>
      %1417 = arith.extf %1416 : vector<16x128xbf16> to vector<16x128xf32>
      %1418 = arith.subf %1417, %1299 : vector<16x128xf32>
      %1419 = math.exp %1418 : vector<16x128xf32>
      %1420 = arith.addf %1404, %1419 : vector<16x128xf32>
      %cst_583 = arith.constant 7.000000e+00 : f32
      %1421 = vector.broadcast %cst_583 : f32 to vector<16x128xf32>
      %1422 = arith.subf %1220, %1421 : vector<16x128xf32>
      %1423 = math.absf %1422 : vector<16x128xf32>
      %cst_584 = arith.constant 1.000000e+00 : f32
      %1424 = vector.broadcast %cst_584 : f32 to vector<16x128xf32>
      %1425 = arith.subf %1424, %1423 : vector<16x128xf32>
      %cst_585 = arith.constant 0.000000e+00 : f32
      %1426 = vector.broadcast %cst_585 : f32 to vector<16x128xf32>
      %1427 = arith.maximumf %1426, %1425 : vector<16x128xf32>
      %1428 = arith.mulf %1417, %1427 : vector<16x128xf32>
      %1429 = arith.addf %1413, %1428 : vector<16x128xf32>
      %c3_586 = arith.constant 3 : index
      %c8_587 = arith.constant 8 : index
      %1430 = arith.index_cast %12 : i32 to index
      %c0_588 = arith.constant 0 : index
      %1431 = vector.load %arg2[%c3_586, %c8_587, %1430, %c0_588] : memref<4x16x16x128xbf16, #tpu.memory_space<vmem>>, vector<1x1x16x128xbf16>
      %1432 = vector.shape_cast %1431 : vector<1x1x16x128xbf16> to vector<16x128xbf16>
      %1433 = arith.extf %1432 : vector<16x128xbf16> to vector<16x128xf32>
      %1434 = arith.subf %1433, %1299 : vector<16x128xf32>
      %1435 = math.exp %1434 : vector<16x128xf32>
      %1436 = arith.addf %1420, %1435 : vector<16x128xf32>
      %cst_589 = arith.constant 8.000000e+00 : f32
      %1437 = vector.broadcast %cst_589 : f32 to vector<16x128xf32>
      %1438 = arith.subf %1220, %1437 : vector<16x128xf32>
      %1439 = math.absf %1438 : vector<16x128xf32>
      %cst_590 = arith.constant 1.000000e+00 : f32
      %1440 = vector.broadcast %cst_590 : f32 to vector<16x128xf32>
      %1441 = arith.subf %1440, %1439 : vector<16x128xf32>
      %cst_591 = arith.constant 0.000000e+00 : f32
      %1442 = vector.broadcast %cst_591 : f32 to vector<16x128xf32>
      %1443 = arith.maximumf %1442, %1441 : vector<16x128xf32>
      %1444 = arith.mulf %1433, %1443 : vector<16x128xf32>
      %1445 = arith.addf %1429, %1444 : vector<16x128xf32>
      %c3_592 = arith.constant 3 : index
      %c9_593 = arith.constant 9 : index
      %1446 = arith.index_cast %12 : i32 to index
      %c0_594 = arith.constant 0 : index
      %1447 = vector.load %arg2[%c3_592, %c9_593, %1446, %c0_594] : memref<4x16x16x128xbf16, #tpu.memory_space<vmem>>, vector<1x1x16x128xbf16>
      %1448 = vector.shape_cast %1447 : vector<1x1x16x128xbf16> to vector<16x128xbf16>
      %1449 = arith.extf %1448 : vector<16x128xbf16> to vector<16x128xf32>
      %1450 = arith.subf %1449, %1299 : vector<16x128xf32>
      %1451 = math.exp %1450 : vector<16x128xf32>
      %1452 = arith.addf %1436, %1451 : vector<16x128xf32>
      %cst_595 = arith.constant 9.000000e+00 : f32
      %1453 = vector.broadcast %cst_595 : f32 to vector<16x128xf32>
      %1454 = arith.subf %1220, %1453 : vector<16x128xf32>
      %1455 = math.absf %1454 : vector<16x128xf32>
      %cst_596 = arith.constant 1.000000e+00 : f32
      %1456 = vector.broadcast %cst_596 : f32 to vector<16x128xf32>
      %1457 = arith.subf %1456, %1455 : vector<16x128xf32>
      %cst_597 = arith.constant 0.000000e+00 : f32
      %1458 = vector.broadcast %cst_597 : f32 to vector<16x128xf32>
      %1459 = arith.maximumf %1458, %1457 : vector<16x128xf32>
      %1460 = arith.mulf %1449, %1459 : vector<16x128xf32>
      %1461 = arith.addf %1445, %1460 : vector<16x128xf32>
      %c3_598 = arith.constant 3 : index
      %c10_599 = arith.constant 10 : index
      %1462 = arith.index_cast %12 : i32 to index
      %c0_600 = arith.constant 0 : index
      %1463 = vector.load %arg2[%c3_598, %c10_599, %1462, %c0_600] : memref<4x16x16x128xbf16, #tpu.memory_space<vmem>>, vector<1x1x16x128xbf16>
      %1464 = vector.shape_cast %1463 : vector<1x1x16x128xbf16> to vector<16x128xbf16>
      %1465 = arith.extf %1464 : vector<16x128xbf16> to vector<16x128xf32>
      %1466 = arith.subf %1465, %1299 : vector<16x128xf32>
      %1467 = math.exp %1466 : vector<16x128xf32>
      %1468 = arith.addf %1452, %1467 : vector<16x128xf32>
      %cst_601 = arith.constant 1.000000e+01 : f32
      %1469 = vector.broadcast %cst_601 : f32 to vector<16x128xf32>
      %1470 = arith.subf %1220, %1469 : vector<16x128xf32>
      %1471 = math.absf %1470 : vector<16x128xf32>
      %cst_602 = arith.constant 1.000000e+00 : f32
      %1472 = vector.broadcast %cst_602 : f32 to vector<16x128xf32>
      %1473 = arith.subf %1472, %1471 : vector<16x128xf32>
      %cst_603 = arith.constant 0.000000e+00 : f32
      %1474 = vector.broadcast %cst_603 : f32 to vector<16x128xf32>
      %1475 = arith.maximumf %1474, %1473 : vector<16x128xf32>
      %1476 = arith.mulf %1465, %1475 : vector<16x128xf32>
      %1477 = arith.addf %1461, %1476 : vector<16x128xf32>
      %c3_604 = arith.constant 3 : index
      %c11_605 = arith.constant 11 : index
      %1478 = arith.index_cast %12 : i32 to index
      %c0_606 = arith.constant 0 : index
      %1479 = vector.load %arg2[%c3_604, %c11_605, %1478, %c0_606] : memref<4x16x16x128xbf16, #tpu.memory_space<vmem>>, vector<1x1x16x128xbf16>
      %1480 = vector.shape_cast %1479 : vector<1x1x16x128xbf16> to vector<16x128xbf16>
      %1481 = arith.extf %1480 : vector<16x128xbf16> to vector<16x128xf32>
      %1482 = arith.subf %1481, %1299 : vector<16x128xf32>
      %1483 = math.exp %1482 : vector<16x128xf32>
      %1484 = arith.addf %1468, %1483 : vector<16x128xf32>
      %cst_607 = arith.constant 1.100000e+01 : f32
      %1485 = vector.broadcast %cst_607 : f32 to vector<16x128xf32>
      %1486 = arith.subf %1220, %1485 : vector<16x128xf32>
      %1487 = math.absf %1486 : vector<16x128xf32>
      %cst_608 = arith.constant 1.000000e+00 : f32
      %1488 = vector.broadcast %cst_608 : f32 to vector<16x128xf32>
      %1489 = arith.subf %1488, %1487 : vector<16x128xf32>
      %cst_609 = arith.constant 0.000000e+00 : f32
      %1490 = vector.broadcast %cst_609 : f32 to vector<16x128xf32>
      %1491 = arith.maximumf %1490, %1489 : vector<16x128xf32>
      %1492 = arith.mulf %1481, %1491 : vector<16x128xf32>
      %1493 = arith.addf %1477, %1492 : vector<16x128xf32>
      %c3_610 = arith.constant 3 : index
      %c12_611 = arith.constant 12 : index
      %1494 = arith.index_cast %12 : i32 to index
      %c0_612 = arith.constant 0 : index
      %1495 = vector.load %arg2[%c3_610, %c12_611, %1494, %c0_612] : memref<4x16x16x128xbf16, #tpu.memory_space<vmem>>, vector<1x1x16x128xbf16>
      %1496 = vector.shape_cast %1495 : vector<1x1x16x128xbf16> to vector<16x128xbf16>
      %1497 = arith.extf %1496 : vector<16x128xbf16> to vector<16x128xf32>
      %1498 = arith.subf %1497, %1299 : vector<16x128xf32>
      %1499 = math.exp %1498 : vector<16x128xf32>
      %1500 = arith.addf %1484, %1499 : vector<16x128xf32>
      %cst_613 = arith.constant 1.200000e+01 : f32
      %1501 = vector.broadcast %cst_613 : f32 to vector<16x128xf32>
      %1502 = arith.subf %1220, %1501 : vector<16x128xf32>
      %1503 = math.absf %1502 : vector<16x128xf32>
      %cst_614 = arith.constant 1.000000e+00 : f32
      %1504 = vector.broadcast %cst_614 : f32 to vector<16x128xf32>
      %1505 = arith.subf %1504, %1503 : vector<16x128xf32>
      %cst_615 = arith.constant 0.000000e+00 : f32
      %1506 = vector.broadcast %cst_615 : f32 to vector<16x128xf32>
      %1507 = arith.maximumf %1506, %1505 : vector<16x128xf32>
      %1508 = arith.mulf %1497, %1507 : vector<16x128xf32>
      %1509 = arith.addf %1493, %1508 : vector<16x128xf32>
      %c3_616 = arith.constant 3 : index
      %c13_617 = arith.constant 13 : index
      %1510 = arith.index_cast %12 : i32 to index
      %c0_618 = arith.constant 0 : index
      %1511 = vector.load %arg2[%c3_616, %c13_617, %1510, %c0_618] : memref<4x16x16x128xbf16, #tpu.memory_space<vmem>>, vector<1x1x16x128xbf16>
      %1512 = vector.shape_cast %1511 : vector<1x1x16x128xbf16> to vector<16x128xbf16>
      %1513 = arith.extf %1512 : vector<16x128xbf16> to vector<16x128xf32>
      %1514 = arith.subf %1513, %1299 : vector<16x128xf32>
      %1515 = math.exp %1514 : vector<16x128xf32>
      %1516 = arith.addf %1500, %1515 : vector<16x128xf32>
      %cst_619 = arith.constant 1.300000e+01 : f32
      %1517 = vector.broadcast %cst_619 : f32 to vector<16x128xf32>
      %1518 = arith.subf %1220, %1517 : vector<16x128xf32>
      %1519 = math.absf %1518 : vector<16x128xf32>
      %cst_620 = arith.constant 1.000000e+00 : f32
      %1520 = vector.broadcast %cst_620 : f32 to vector<16x128xf32>
      %1521 = arith.subf %1520, %1519 : vector<16x128xf32>
      %cst_621 = arith.constant 0.000000e+00 : f32
      %1522 = vector.broadcast %cst_621 : f32 to vector<16x128xf32>
      %1523 = arith.maximumf %1522, %1521 : vector<16x128xf32>
      %1524 = arith.mulf %1513, %1523 : vector<16x128xf32>
      %1525 = arith.addf %1509, %1524 : vector<16x128xf32>
      %c3_622 = arith.constant 3 : index
      %c14_623 = arith.constant 14 : index
      %1526 = arith.index_cast %12 : i32 to index
      %c0_624 = arith.constant 0 : index
      %1527 = vector.load %arg2[%c3_622, %c14_623, %1526, %c0_624] : memref<4x16x16x128xbf16, #tpu.memory_space<vmem>>, vector<1x1x16x128xbf16>
      %1528 = vector.shape_cast %1527 : vector<1x1x16x128xbf16> to vector<16x128xbf16>
      %1529 = arith.extf %1528 : vector<16x128xbf16> to vector<16x128xf32>
      %1530 = arith.subf %1529, %1299 : vector<16x128xf32>
      %1531 = math.exp %1530 : vector<16x128xf32>
      %1532 = arith.addf %1516, %1531 : vector<16x128xf32>
      %cst_625 = arith.constant 1.400000e+01 : f32
      %1533 = vector.broadcast %cst_625 : f32 to vector<16x128xf32>
      %1534 = arith.subf %1220, %1533 : vector<16x128xf32>
      %1535 = math.absf %1534 : vector<16x128xf32>
      %cst_626 = arith.constant 1.000000e+00 : f32
      %1536 = vector.broadcast %cst_626 : f32 to vector<16x128xf32>
      %1537 = arith.subf %1536, %1535 : vector<16x128xf32>
      %cst_627 = arith.constant 0.000000e+00 : f32
      %1538 = vector.broadcast %cst_627 : f32 to vector<16x128xf32>
      %1539 = arith.maximumf %1538, %1537 : vector<16x128xf32>
      %1540 = arith.mulf %1529, %1539 : vector<16x128xf32>
      %1541 = arith.addf %1525, %1540 : vector<16x128xf32>
      %c3_628 = arith.constant 3 : index
      %c15_629 = arith.constant 15 : index
      %1542 = arith.index_cast %12 : i32 to index
      %c0_630 = arith.constant 0 : index
      %1543 = vector.load %arg2[%c3_628, %c15_629, %1542, %c0_630] : memref<4x16x16x128xbf16, #tpu.memory_space<vmem>>, vector<1x1x16x128xbf16>
      %1544 = vector.shape_cast %1543 : vector<1x1x16x128xbf16> to vector<16x128xbf16>
      %1545 = arith.extf %1544 : vector<16x128xbf16> to vector<16x128xf32>
      %1546 = arith.subf %1545, %1299 : vector<16x128xf32>
      %1547 = math.exp %1546 : vector<16x128xf32>
      %1548 = arith.addf %1532, %1547 : vector<16x128xf32>
      %cst_631 = arith.constant 1.500000e+01 : f32
      %1549 = vector.broadcast %cst_631 : f32 to vector<16x128xf32>
      %1550 = arith.subf %1220, %1549 : vector<16x128xf32>
      %1551 = math.absf %1550 : vector<16x128xf32>
      %cst_632 = arith.constant 1.000000e+00 : f32
      %1552 = vector.broadcast %cst_632 : f32 to vector<16x128xf32>
      %1553 = arith.subf %1552, %1551 : vector<16x128xf32>
      %cst_633 = arith.constant 0.000000e+00 : f32
      %1554 = vector.broadcast %cst_633 : f32 to vector<16x128xf32>
      %1555 = arith.maximumf %1554, %1553 : vector<16x128xf32>
      %1556 = arith.mulf %1545, %1555 : vector<16x128xf32>
      %1557 = arith.addf %1541, %1556 : vector<16x128xf32>
      %1558 = math.log %1548 : vector<16x128xf32>
      %1559 = arith.addf %1558, %1299 : vector<16x128xf32>
      %1560 = arith.subf %1559, %1557 : vector<16x128xf32>
      %1561 = arith.addf %1216, %1560 : vector<16x128xf32>
      %cst_634 = arith.constant 2.500000e-01 : f32
      %1562 = vector.broadcast %cst_634 : f32 to vector<16x128xf32>
      %1563 = arith.mulf %1561, %1562 : vector<16x128xf32>
      %1564 = arith.mulf %1563, %20 : vector<16x128xf32>
      %cst_635 = arith.constant 0.000000e+00 : f32
      %1565 = vector.broadcast %cst_635 : f32 to vector<16x128xf32>
      %1566 = arith.select %17, %1564, %1565 : vector<16x128xi1>, vector<16x128xf32>
      %1567 = arith.addf %10, %1566 : vector<16x128xf32>
      %c1_i32 = arith.constant 1 : i32
      %c0_636 = arith.constant 0 : index
      %c0_637 = arith.constant 0 : index
      %c0_638 = arith.constant 0 : index
      %c0_639 = arith.constant 0 : index
      %1568 = vector.load %arg6[%c0_636, %c0_637, %c0_638, %c0_639] : memref<1x2x16x128xf32, #tpu.memory_space<vmem>>, vector<1x1x16x128xf32>
      %1569 = vector.shape_cast %1568 : vector<1x1x16x128xf32> to vector<16x128xf32>
      %1570 = vector.shape_cast %168 : vector<16x128xf32> to vector<1x1x16x128xf32>
      tpu.vector_store %arg6[%c0_636, %c0_637, %c0_638, %c0_639], %1570 {strides = array<i32>} : memref<1x2x16x128xf32, #tpu.memory_space<vmem>>, vector<1x1x16x128xf32>,
      %c0_640 = arith.constant 0 : index
      %c1_641 = arith.constant 1 : index
      %c0_642 = arith.constant 0 : index
      %c0_643 = arith.constant 0 : index
      %1571 = vector.load %arg6[%c0_640, %c1_641, %c0_642, %c0_643] : memref<1x2x16x128xf32, #tpu.memory_space<vmem>>, vector<1x1x16x128xf32>
      %1572 = vector.shape_cast %1571 : vector<1x1x16x128xf32> to vector<16x128xf32>
      %1573 = vector.shape_cast %1567 : vector<16x128xf32> to vector<1x1x16x128xf32>
      tpu.vector_store %arg6[%c0_640, %c1_641, %c0_642, %c0_643], %1573 {strides = array<i32>} : memref<1x2x16x128xf32, #tpu.memory_space<vmem>>, vector<1x1x16x128xf32>,
    } else {
    }
    return
  }
  func.func @transform_0(%arg0: i32, %arg1: memref<1xi32, #tpu.memory_space<smem>>) -> (i32, i32, i32, i32) {
    %c0_i32 = arith.constant 0 : i32
    %c0_i32_0 = arith.constant 0 : i32
    %c0_i32_1 = arith.constant 0 : i32
    %c0_i32_2 = arith.constant 0 : i32
    return %c0_i32, %c0_i32_0, %arg0, %c0_i32_1 : i32, i32, i32, i32
  }
  func.func @transform_1(%arg0: i32, %arg1: memref<1xi32, #tpu.memory_space<smem>>) -> (i32, i32, i32) {
    %c0_i32 = arith.constant 0 : i32
    %c0_i32_0 = arith.constant 0 : i32
    %c0_i32_1 = arith.constant 0 : i32
    return %c0_i32, %arg0, %c0_i32_0 : i32, i32, i32
  }
  func.func @transform_2(%arg0: i32, %arg1: memref<1xi32, #tpu.memory_space<smem>>) -> (i32, i32, i32) {
    %c0_i32 = arith.constant 0 : i32
    %c0_i32_0 = arith.constant 0 : i32
    %c0_i32_1 = arith.constant 0 : i32
    return %c0_i32, %arg0, %c0_i32_0 : i32, i32, i32
  }
  func.func @transform_3(%arg0: i32, %arg1: memref<1xi32, #tpu.memory_space<smem>>) -> (i32, i32, i32) {
    %c0_i32 = arith.constant 0 : i32
    %c0_i32_0 = arith.constant 0 : i32
    %c0_i32_1 = arith.constant 0 : i32
    return %c0_i32, %arg0, %c0_i32_0 : i32, i32, i32
  }
  func.func @transform_4(%arg0: i32, %arg1: memref<1xi32, #tpu.memory_space<smem>>) -> (i32, i32, i32, i32) {
    %c0_i32 = arith.constant 0 : i32
    %c0_i32_0 = arith.constant 0 : i32
    %c0_i32_1 = arith.constant 0 : i32
    %c0_i32_2 = arith.constant 0 : i32
    return %arg0, %c0_i32, %c0_i32_0, %c0_i32_1 : i32, i32, i32, i32
  }
}

</mosaic_0001>

<llo_original>
// kernel: rotated_bbox_loss.1
$region0: #{rotated_bbox_loss.1}
  #allocation0 [shape = 'u32[]', space=smem, size = 0x4, offset = 0x4, fixed_abs, tag = 'smem constant byte address 0x4 - core index']
  #allocation1 [shape = 'u32[144,128]{1,0:T(1,128)}', space=vmem, size = 0x12000, scoped, tag = 'internal scratch']
  #allocation2 [shape = 's32[1]{0}', space=sflag, size = 0x4, scoped, tag = 'scoped memory for rotated_bbox_loss.1']
  #allocation3 [shape = 's32[1]{0:T(128)S(6)}', space=smem, size = 0x200, scoped, tag = 'prefetched SMEM operand 0']
  %s0 = inlined_call_operand.<no memory space> [shape: s32[1], index: 0, kind: input, shape index: {}]
  %s1 = inlined_call_operand.vmem [shape: bf16[4,16,16,128], index: 1, kind: input, shape index: {}]
  %s2 = inlined_call_operand.vmem [shape: f32[5,16,128], index: 2, kind: input, shape index: {}]
  %s3 = inlined_call_operand.vmem [shape: f32[7,16,128], index: 3, kind: input, shape index: {}]
  %s4 = inlined_call_operand.vmem [shape: f32[2,16,128], index: 4, kind: input, shape index: {}]
  %s5 = inlined_call_operand.vmem [shape: f32[1,2,16,128], index: 5, kind: output, shape index: {}]
  %s6 = sld [smem:[#allocation0]]
  $region34: #{rotated_bbox_loss.1} parent=0
    _
  %s8 = ssub.s32 1, %s6
  %s9 = scalar_select 0, %s8, %s6
  %10 = sst [smem:[#allocation3]] %s0
  // Predicated region
  $region2: #{rotated_bbox_loss.1} parent=0 // pred_check
    _
  $region3: #{rotated_bbox_loss.1} parent=0 // pred_check_branch
    %12 = sbr.rel (0) target = $region5
  $region4: #{rotated_bbox_loss.1} parent=0 // pred_region
    _
  $region5: #{rotated_bbox_loss.1} parent=0 // pred_fallthru
    _
  // Predicated region
  $region6: #{rotated_bbox_loss.1} parent=0 // pred_check
    _
  $region7: #{rotated_bbox_loss.1} parent=0 // pred_check_branch
    %14 = sbr.rel (0) target = $region9
  $region8: #{rotated_bbox_loss.1} parent=0 // pred_region
    _
  $region9: #{rotated_bbox_loss.1} parent=0 // pred_fallthru
    _
  // Predicated region
  $region10: #{rotated_bbox_loss.1} parent=0 // pred_check
    _
  $region11: #{rotated_bbox_loss.1} parent=0 // pred_check_branch
    %16 = sbr.rel (0) target = $region13
  $region12: #{rotated_bbox_loss.1} parent=0 // pred_region
    _
  $region13: #{rotated_bbox_loss.1} parent=0 // pred_fallthru
    _
  // Predicated region
  $region14: #{rotated_bbox_loss.1} parent=0 // pred_check
    _
  $region15: #{rotated_bbox_loss.1} parent=0 // pred_check_branch
    %18 = sbr.rel (0) target = $region17
  $region16: #{rotated_bbox_loss.1} parent=0 // pred_region
    _
  $region17: #{rotated_bbox_loss.1} parent=0 // pred_fallthru
    _
  %s19 = sld [smem:[#allocation3]]
  %p20 = scmp.eq.s32.totalorder %s19, 0
  // Predicated region
  $region18: #{rotated_bbox_loss.1} parent=0 // pred_check
    %p21 = pneg %p20
  $region19: #{rotated_bbox_loss.1} parent=0 // pred_check_branch
    %23 = sbr.rel (%p21) target = $region21
  $region20: #{rotated_bbox_loss.1} parent=0 // pred_region
    %24 = vst [vmem:[%s5] sm:$0xff] 0.0
    %25 = vst [vmem:[%s5 + $0x8] sm:$0xff] 0.0
    %26 = vst [vmem:[%s5 + $0x10] sm:$0xff] 0.0
    %27 = vst [vmem:[%s5 + $0x18] sm:$0xff] 0.0
  $region21: #{rotated_bbox_loss.1} parent=0 // pred_fallthru
    _
  %s28 = sld [smem:[#allocation3]]
  %p29 = scmp.gt.s32.totalorder %s28, 0
  // Predicated region
  $region22: #{rotated_bbox_loss.1} parent=0 // pred_check
    %p30 = pneg %p29
  $region23: #{rotated_bbox_loss.1} parent=0 // pred_check_branch
    %32 = sbr.rel (%p30) target = $region25
  $region24: #{rotated_bbox_loss.1} parent=0 // pred_region
    %s33 = sadd.s32 0, 16
    %s34 = scalar_lea.vmem %s4, %s33
    %v35 = vld [vmem:[%s34] sm:$0xff]
    %v36 = vld [vmem:[%s34 + $0x8] sm:$0xff]
    %vm37 = vcmp.gt.f32.partialorder %v35, 0.5
    %vm38 = vcmp.gt.f32.partialorder %v36, 0.5
    %v39 = vld [vmem:[%s4] sm:$0xff]
    %v40 = vld [vmem:[%s4 + $0x8] sm:$0xff]
    %v41 = vld [vmem:[%s2] sm:$0xff]
    %v42 = vld [vmem:[%s2 + $0x8] sm:$0xff]
    %s43 = scalar_lea.vmem %s2, %s33
    %v44 = vld [vmem:[%s43] sm:$0xff]
    %v45 = vld [vmem:[%s43 + $0x8] sm:$0xff]
    %s46 = sadd.s32 0, 32
    %s47 = scalar_lea.vmem %s2, %s46
    %v48 = vld [vmem:[%s47] sm:$0xff]
    %v49 = vld [vmem:[%s47 + $0x8] sm:$0xff]
    %s50 = sadd.s32 0, 48
    %s51 = scalar_lea.vmem %s2, %s50
    %v52 = vld [vmem:[%s51] sm:$0xff]
    %v53 = vld [vmem:[%s51 + $0x8] sm:$0xff]
    %s54 = sadd.s32 0, 64
    %s55 = scalar_lea.vmem %s2, %s54
    %v56 = vld [vmem:[%s55] sm:$0xff]
    %v57 = vld [vmem:[%s55 + $0x8] sm:$0xff]
    %v58 = vld [vmem:[%s3] sm:$0xff]
    %v59 = vld [vmem:[%s3 + $0x8] sm:$0xff]
    %s60 = scalar_lea.vmem %s3, %s33
    %v61 = vld [vmem:[%s60] sm:$0xff]
    %v62 = vld [vmem:[%s60 + $0x8] sm:$0xff]
    %s63 = scalar_lea.vmem %s3, %s46
    %v64 = vld [vmem:[%s63] sm:$0xff]
    %v65 = vld [vmem:[%s63 + $0x8] sm:$0xff]
    %s66 = scalar_lea.vmem %s3, %s50
    %v67 = vld [vmem:[%s66] sm:$0xff]
    %v68 = vld [vmem:[%s66 + $0x8] sm:$0xff]
    %s69 = scalar_lea.vmem %s3, %s54
    %v70 = vld [vmem:[%s69] sm:$0xff]
    %v71 = vld [vmem:[%s69 + $0x8] sm:$0xff]
    %s72 = sadd.s32 0, 80
    %s73 = scalar_lea.vmem %s3, %s72
    %v74 = vld [vmem:[%s73] sm:$0xff]
    %v75 = vld [vmem:[%s73 + $0x8] sm:$0xff]
    %s76 = sadd.s32 0, 96
    %s77 = scalar_lea.vmem %s3, %s76
    %v78 = vld [vmem:[%s77] sm:$0xff]
    %v79 = vld [vmem:[%s77 + $0x8] sm:$0xff]
    %v80 = vmul.f32 %v48, %v48
    %v81 = vmul.f32 %v49, %v49
    %v82 = vmul.f32 %v80, 0.083333336
    %v83 = vmul.f32 %v81, 0.083333336
    %v84 = vmul.f32 %v52, %v52
    %v85 = vmul.f32 %v53, %v53
    %v86 = vmul.f32 %v84, 0.083333336
    %v87 = vmul.f32 %v85, 0.083333336
    %v88 = vand.u32 2147483647, %v56
    %vm89 = vcmp.le.f32.partialorder %v88, 0.7853982
    %vm90 = vcmp.lt.s32.totalorder %v56, 0
    %v91 = vand.u32 %v56, 2139095040
    %v92 = vshrl.u32 %v91, 23
    %v93 = vsub.s32 %v92, 127
    %v94 = vand.u32 2147483647, %v56
    %v95 = vand.u32 %v94, 8388607
    %v96 = vor.u32 %v95, 8388608
    %v97 = vsub.s32 0, %v96
    %v98 = vadd.s32 %v93, 1
    %vm99 = vcmp.gt.s32.totalorder %v98, 0
    %v100 = vsel %vm99, %v98, 0
    %v101 = vshrl.u32 %v100, 5
    %v102 = vand.u32 %v100, 31
    %v103 = vsub.s32 32, %v102
    %v104 = vshrl.u32 683565275, %v103
    %v105 = vshll.u32 683565275, %v102
    %v106 = vshrl.u32 2475754826, %v103
    %v107 = vor.u32 %v105, %v106
    %v108 = vshll.u32 2475754826, %v102
    %v109 = vshrl.u32 2131351028, %v103
    %v110 = vor.u32 %v108, %v109
    %v111 = vshll.u32 2131351028, %v102
    %v112 = vshrl.u32 2102212464, %v103
    %v113 = vor.u32 %v111, %v112
    %v114 = vshll.u32 2102212464, %v102
    %v115 = vshrl.u32 920167782, %v103
    %v116 = vor.u32 %v114, %v115
    %v117 = vshll.u32 920167782, %v102
    %v118 = vshrl.u32 1326507024, %v103
    %v119 = vor.u32 %v117, %v118
    %vm120 = vcmp.lt.s32.totalorder %v101, 1
    %vm121 = vcmp.lt.s32.totalorder %v101, 2
    %vm122 = vcmp.lt.s32.totalorder %v101, 3
    %vm123 = vcmp.lt.s32.totalorder %v101, 4
    %v124 = vsel %vm120, %v104, %v107
    %v125 = vsel %vm123, %v113, 2102212464
    %v126 = vsel %vm122, %v110, %v125
    %v127 = vsel %vm121, %v124, %v126
    %v128 = vsel %vm120, %v107, %v110
    %v129 = vsel %vm123, %v116, 920167782
    %v130 = vsel %vm122, %v113, %v129
    %v131 = vsel %vm121, %v128, %v130
    %v132 = vsel %vm120, %v110, %v113
    %v133 = vsel %vm123, %v119, 1326507024
    %v134 = vsel %vm122, %v116, %v133
    %v135 = vsel %vm121, %v132, %v134
    %v136 = vshll.u32 %v96, 8
    %v137 = vmul.u32.u64.compose %v136, %v135
    %v138 = vextract.low.u32 %v137
    %v139 = vextract.high.u32 %v137
    %v140 = vmul.u32.u64.compose %v136, %v131
    %v141 = vextract.low.u32 %v140
    %v142 = vextract.high.u32 %v140
    %v143 = vmul.u32 %v136, %v127
    %v144 = vadd.s32 %v139, %v141
    %vm145 = vc.u32 %v139, %v141
    %v146 = vadd.s32 %v142, 1
    %v147 = vsel %vm145, %v146, %v142
    %v148 = vadd.s32 %v143, %v147
    %v149 = vadd.s32 %v148, 536870912
    %v150 = vshrl.u32 %v149, 30
    %v151 = vshll.u32 %v150, 30
    %v152 = vsub.s32 %v148, %v151
    %vm153 = vcmp.lt.s32.totalorder %v152, 0
    %v154 = vsub.s32 0, %v152
    %v155 = vsel %vm153, %v154, %v152
    %v156 = vclz %v155
    %v157 = vsub.s32 %v156, 2
    %vm158 = vcmp.gt.s32.totalorder 0, %v157
    %v159 = vsel %vm158, 0, %v157
    %v160 = vsub.s32 32, %v159
    %v161 = vshll.u32 %v152, %v159
    %v162 = vshrl.u32 %v144, %v160
    %v163 = vor.u32 %v161, %v162
    %v164 = vsub.s32 4294967266, %v159
    %v165 = vadd.s32 %v164, 127
    %v166 = vshll.u32 %v165, 23
    %v167 = vor.u32 4788187, %v166
    %v168 = vand.u32 2147483647, %v167
    %v170 = vcvt.s32.f32 %v163
    %v171 = vmul.f32 %v170, %v168
    %v172 = vxor.u32 %v171, 2147483648
    %v173 = vsel %vm90, %v172, %v171
    %v174 = vsub.s32 4, %v150
    %v175 = vsel %vm90, %v174, %v150
    %v176 = vsel %vm89, %v56, %v173
    %v177 = vsel %vm89, 0, %v175
    %v178 = vcosq.f32.pop %v176
    %v179 = vsinq.f32.pop %v176
    %vm180 = vweird.f32 %v56
    %v181 = vand.u32 %v177, 3
    %vm182 = vcmp.lt.s32.totalorder %v181, 2
    %vm183 = vcmp.eq.s32.totalorder %v181, 0
    %v184 = vxor.u32 %v179, 2147483648
    %v185 = vsel %vm183, %v178, %v184
    %vm186 = vcmp.eq.s32.totalorder %v181, 2
    %v187 = vxor.u32 %v178, 2147483648
    %v188 = vsel %vm186, %v187, %v179
    %v189 = vsel %vm182, %v185, %v188
    %v190 = vsel %vm180, nan, %v189
    %v191 = vand.u32 2147483647, %v57
    %vm192 = vcmp.le.f32.partialorder %v191, 0.7853982
    %vm193 = vcmp.lt.s32.totalorder %v57, 0
    %v194 = vand.u32 %v57, 2139095040
    %v195 = vshrl.u32 %v194, 23
    %v196 = vsub.s32 %v195, 127
    %v197 = vand.u32 2147483647, %v57
    %v198 = vand.u32 %v197, 8388607
    %v199 = vor.u32 %v198, 8388608
    %v200 = vsub.s32 0, %v199
    %v201 = vadd.s32 %v196, 1
    %vm202 = vcmp.gt.s32.totalorder %v201, 0
    %v203 = vsel %vm202, %v201, 0
    %v204 = vshrl.u32 %v203, 5
    %v205 = vand.u32 %v203, 31
    %v206 = vsub.s32 32, %v205
    %v207 = vshrl.u32 683565275, %v206
    %v208 = vshll.u32 683565275, %v205
    %v209 = vshrl.u32 2475754826, %v206
    %v210 = vor.u32 %v208, %v209
    %v211 = vshll.u32 2475754826, %v205
    %v212 = vshrl.u32 2131351028, %v206
    %v213 = vor.u32 %v211, %v212
    %v214 = vshll.u32 2131351028, %v205
    %v215 = vshrl.u32 2102212464, %v206
    %v216 = vor.u32 %v214, %v215
    %v217 = vshll.u32 2102212464, %v205
    %v218 = vshrl.u32 920167782, %v206
    %v219 = vor.u32 %v217, %v218
    %v220 = vshll.u32 920167782, %v205
    %v221 = vshrl.u32 1326507024, %v206
    %v222 = vor.u32 %v220, %v221
    %vm223 = vcmp.lt.s32.totalorder %v204, 1
    %vm224 = vcmp.lt.s32.totalorder %v204, 2
    %vm225 = vcmp.lt.s32.totalorder %v204, 3
    %vm226 = vcmp.lt.s32.totalorder %v204, 4
    %v227 = vsel %vm223, %v207, %v210
    %v228 = vsel %vm226, %v216, 2102212464
    %v229 = vsel %vm225, %v213, %v228
    %v230 = vsel %vm224, %v227, %v229
    %v231 = vsel %vm223, %v210, %v213
    %v232 = vsel %vm226, %v219, 920167782
    %v233 = vsel %vm225, %v216, %v232
    %v234 = vsel %vm224, %v231, %v233
    %v235 = vsel %vm223, %v213, %v216
    %v236 = vsel %vm226, %v222, 1326507024
    %v237 = vsel %vm225, %v219, %v236
    %v238 = vsel %vm224, %v235, %v237
    %v239 = vshll.u32 %v199, 8
    %v240 = vmul.u32.u64.compose %v239, %v238
    %v241 = vextract.low.u32 %v240
    %v242 = vextract.high.u32 %v240
    %v243 = vmul.u32.u64.compose %v239, %v234
    %v244 = vextract.low.u32 %v243
    %v245 = vextract.high.u32 %v243
    %v246 = vmul.u32 %v239, %v230
    %v247 = vadd.s32 %v242, %v244
    %vm248 = vc.u32 %v242, %v244
    %v249 = vadd.s32 %v245, 1
    %v250 = vsel %vm248, %v249, %v245
    %v251 = vadd.s32 %v246, %v250
    %v252 = vadd.s32 %v251, 536870912
    %v253 = vshrl.u32 %v252, 30
    %v254 = vshll.u32 %v253, 30
    %v255 = vsub.s32 %v251, %v254
    %vm256 = vcmp.lt.s32.totalorder %v255, 0
    %v257 = vsub.s32 0, %v255
    %v258 = vsel %vm256, %v257, %v255
    %v259 = vclz %v258
    %v260 = vsub.s32 %v259, 2
    %vm261 = vcmp.gt.s32.totalorder 0, %v260
    %v262 = vsel %vm261, 0, %v260
    %v263 = vsub.s32 32, %v262
    %v264 = vshll.u32 %v255, %v262
    %v265 = vshrl.u32 %v247, %v263
    %v266 = vor.u32 %v264, %v265
    %v267 = vsub.s32 4294967266, %v262
    %v268 = vadd.s32 %v267, 127
    %v269 = vshll.u32 %v268, 23
    %v270 = vor.u32 4788187, %v269
    %v271 = vand.u32 2147483647, %v270
    %v273 = vcvt.s32.f32 %v266
    %v274 = vmul.f32 %v273, %v271
    %v275 = vxor.u32 %v274, 2147483648
    %v276 = vsel %vm193, %v275, %v274
    %v277 = vsub.s32 4, %v253
    %v278 = vsel %vm193, %v277, %v253
    %v279 = vsel %vm192, %v57, %v276
    %v280 = vsel %vm192, 0, %v278
    %v281 = vcosq.f32.pop %v279
    %v282 = vsinq.f32.pop %v279
    %vm283 = vweird.f32 %v57
    %v284 = vand.u32 %v280, 3
    %vm285 = vcmp.lt.s32.totalorder %v284, 2
    %vm286 = vcmp.eq.s32.totalorder %v284, 0
    %v287 = vxor.u32 %v282, 2147483648
    %v288 = vsel %vm286, %v281, %v287
    %vm289 = vcmp.eq.s32.totalorder %v284, 2
    %v290 = vxor.u32 %v281, 2147483648
    %v291 = vsel %vm289, %v290, %v282
    %v292 = vsel %vm285, %v288, %v291
    %v293 = vsel %vm283, nan, %v292
    %v294 = vand.u32 2147483647, %v56
    %vm295 = vcmp.le.f32.partialorder %v294, 0.7853982
    %vm296 = vcmp.lt.s32.totalorder %v56, 0
    %v297 = vand.u32 %v56, 2139095040
    %v298 = vshrl.u32 %v297, 23
    %v299 = vsub.s32 %v298, 127
    %v300 = vand.u32 2147483647, %v56
    %v301 = vand.u32 %v300, 8388607
    %v302 = vor.u32 %v301, 8388608
    %v303 = vsub.s32 0, %v302
    %v304 = vadd.s32 %v299, 1
    %vm305 = vcmp.gt.s32.totalorder %v304, 0
    %v306 = vsel %vm305, %v304, 0
    %v307 = vshrl.u32 %v306, 5
    %v308 = vand.u32 %v306, 31
    %v309 = vsub.s32 32, %v308
    %v310 = vshrl.u32 683565275, %v309
    %v311 = vshll.u32 683565275, %v308
    %v312 = vshrl.u32 2475754826, %v309
    %v313 = vor.u32 %v311, %v312
    %v314 = vshll.u32 2475754826, %v308
    %v315 = vshrl.u32 2131351028, %v309
    %v316 = vor.u32 %v314, %v315
    %v317 = vshll.u32 2131351028, %v308
    %v318 = vshrl.u32 2102212464, %v309
    %v319 = vor.u32 %v317, %v318
    %v320 = vshll.u32 2102212464, %v308
    %v321 = vshrl.u32 920167782, %v309
    %v322 = vor.u32 %v320, %v321
    %v323 = vshll.u32 920167782, %v308
    %v324 = vshrl.u32 1326507024, %v309
    %v325 = vor.u32 %v323, %v324
    %vm326 = vcmp.lt.s32.totalorder %v307, 1
    %vm327 = vcmp.lt.s32.totalorder %v307, 2
    %vm328 = vcmp.lt.s32.totalorder %v307, 3
    %vm329 = vcmp.lt.s32.totalorder %v307, 4
    %v330 = vsel %vm326, %v310, %v313
    %v331 = vsel %vm329, %v319, 2102212464
    %v332 = vsel %vm328, %v316, %v331
    %v333 = vsel %vm327, %v330, %v332
    %v334 = vsel %vm326, %v313, %v316
    %v335 = vsel %vm329, %v322, 920167782
    %v336 = vsel %vm328, %v319, %v335
    %v337 = vsel %vm327, %v334, %v336
    %v338 = vsel %vm326, %v316, %v319
    %v339 = vsel %vm329, %v325, 1326507024
    %v340 = vsel %vm328, %v322, %v339
    %v341 = vsel %vm327, %v338, %v340
    %v342 = vshll.u32 %v302, 8
    %v343 = vmul.u32.u64.compose %v342, %v341
    %v344 = vextract.low.u32 %v343
    %v345 = vextract.high.u32 %v343
    %v346 = vmul.u32.u64.compose %v342, %v337
    %v347 = vextract.low.u32 %v346
    %v348 = vextract.high.u32 %v346
    %v349 = vmul.u32 %v342, %v333
    %v350 = vadd.s32 %v345, %v347
    %vm351 = vc.u32 %v345, %v347
    %v352 = vadd.s32 %v348, 1
    %v353 = vsel %vm351, %v352, %v348
    %v354 = vadd.s32 %v349, %v353
    %v355 = vadd.s32 %v354, 536870912
    %v356 = vshrl.u32 %v355, 30
    %v357 = vshll.u32 %v356, 30
    %v358 = vsub.s32 %v354, %v357
    %vm359 = vcmp.lt.s32.totalorder %v358, 0
    %v360 = vsub.s32 0, %v358
    %v361 = vsel %vm359, %v360, %v358
    %v362 = vclz %v361
    %v363 = vsub.s32 %v362, 2
    %vm364 = vcmp.gt.s32.totalorder 0, %v363
    %v365 = vsel %vm364, 0, %v363
    %v366 = vsub.s32 32, %v365
    %v367 = vshll.u32 %v358, %v365
    %v368 = vshrl.u32 %v350, %v366
    %v369 = vor.u32 %v367, %v368
    %v370 = vsub.s32 4294967266, %v365
    %v371 = vadd.s32 %v370, 127
    %v372 = vshll.u32 %v371, 23
    %v373 = vor.u32 4788187, %v372
    %v374 = vand.u32 2147483647, %v373
    %v376 = vcvt.s32.f32 %v369
    %v377 = vmul.f32 %v376, %v374
    %v378 = vxor.u32 %v377, 2147483648
    %v379 = vsel %vm296, %v378, %v377
    %v380 = vsub.s32 4, %v356
    %v381 = vsel %vm296, %v380, %v356
    %v382 = vsel %vm295, %v56, %v379
    %v383 = vsel %vm295, 0, %v381
    %v384 = vcosq.f32.pop %v382
    %v385 = vsinq.f32.pop %v382
    %vm386 = vweird.f32 %v56
    %v387 = vadd.s32 %v383, 3
    %v388 = vand.u32 %v387, 3
    %vm389 = vcmp.lt.s32.totalorder %v388, 2
    %vm390 = vcmp.eq.s32.totalorder %v388, 0
    %v391 = vxor.u32 %v385, 2147483648
    %v392 = vsel %vm390, %v384, %v391
    %vm393 = vcmp.eq.s32.totalorder %v388, 2
    %v394 = vxor.u32 %v384, 2147483648
    %v395 = vsel %vm393, %v394, %v385
    %v396 = vsel %vm389, %v392, %v395
    %v397 = vsel %vm386, nan, %v396
    %v398 = vand.u32 2147483647, %v57
    %vm399 = vcmp.le.f32.partialorder %v398, 0.7853982
    %vm400 = vcmp.lt.s32.totalorder %v57, 0
    %v401 = vand.u32 %v57, 2139095040
    %v402 = vshrl.u32 %v401, 23
    %v403 = vsub.s32 %v402, 127
    %v404 = vand.u32 2147483647, %v57
    %v405 = vand.u32 %v404, 8388607
    %v406 = vor.u32 %v405, 8388608
    %v407 = vsub.s32 0, %v406
    %v408 = vadd.s32 %v403, 1
    %vm409 = vcmp.gt.s32.totalorder %v408, 0
    %v410 = vsel %vm409, %v408, 0
    %v411 = vshrl.u32 %v410, 5
    %v412 = vand.u32 %v410, 31
    %v413 = vsub.s32 32, %v412
    %v414 = vshrl.u32 683565275, %v413
    %v415 = vshll.u32 683565275, %v412
    %v416 = vshrl.u32 2475754826, %v413
    %v417 = vor.u32 %v415, %v416
    %v418 = vshll.u32 2475754826, %v412
    %v419 = vshrl.u32 2131351028, %v413
    %v420 = vor.u32 %v418, %v419
    %v421 = vshll.u32 2131351028, %v412
    %v422 = vshrl.u32 2102212464, %v413
    %v423 = vor.u32 %v421, %v422
    %v424 = vshll.u32 2102212464, %v412
    %v425 = vshrl.u32 920167782, %v413
    %v426 = vor.u32 %v424, %v425
    %v427 = vshll.u32 920167782, %v412
    %v428 = vshrl.u32 1326507024, %v413
    %v429 = vor.u32 %v427, %v428
    %vm430 = vcmp.lt.s32.totalorder %v411, 1
    %vm431 = vcmp.lt.s32.totalorder %v411, 2
    %vm432 = vcmp.lt.s32.totalorder %v411, 3
    %vm433 = vcmp.lt.s32.totalorder %v411, 4
    %v434 = vsel %vm430, %v414, %v417
    %v435 = vsel %vm433, %v423, 2102212464
    %v436 = vsel %vm432, %v420, %v435
    %v437 = vsel %vm431, %v434, %v436
    %v438 = vsel %vm430, %v417, %v420
    %v439 = vsel %vm433, %v426, 920167782
    %v440 = vsel %vm432, %v423, %v439
    %v441 = vsel %vm431, %v438, %v440
    %v442 = vsel %vm430, %v420, %v423
    %v443 = vsel %vm433, %v429, 1326507024
    %v444 = vsel %vm432, %v426, %v443
    %v445 = vsel %vm431, %v442, %v444
    %v446 = vshll.u32 %v406, 8
    %v447 = vmul.u32.u64.compose %v446, %v445
    %v448 = vextract.low.u32 %v447
    %v449 = vextract.high.u32 %v447
    %v450 = vmul.u32.u64.compose %v446, %v441
    %v451 = vextract.low.u32 %v450
    %v452 = vextract.high.u32 %v450
    %v453 = vmul.u32 %v446, %v437
    %v454 = vadd.s32 %v449, %v451
    %vm455 = vc.u32 %v449, %v451
    %v456 = vadd.s32 %v452, 1
    %v457 = vsel %vm455, %v456, %v452
    %v458 = vadd.s32 %v453, %v457
    %v459 = vadd.s32 %v458, 536870912
    %v460 = vshrl.u32 %v459, 30
    %v461 = vshll.u32 %v460, 30
    %v462 = vsub.s32 %v458, %v461
    %vm463 = vcmp.lt.s32.totalorder %v462, 0
    %v464 = vsub.s32 0, %v462
    %v465 = vsel %vm463, %v464, %v462
    %v466 = vclz %v465
    %v467 = vsub.s32 %v466, 2
    %vm468 = vcmp.gt.s32.totalorder 0, %v467
    %v469 = vsel %vm468, 0, %v467
    %v470 = vsub.s32 32, %v469
    %v471 = vshll.u32 %v462, %v469
    %v472 = vshrl.u32 %v454, %v470
    %v473 = vor.u32 %v471, %v472
    %v474 = vsub.s32 4294967266, %v469
    %v475 = vadd.s32 %v474, 127
    %v476 = vshll.u32 %v475, 23
    %v477 = vor.u32 4788187, %v476
    %v478 = vand.u32 2147483647, %v477
    %v480 = vcvt.s32.f32 %v473
    %v481 = vmul.f32 %v480, %v478
    %v482 = vxor.u32 %v481, 2147483648
    %v483 = vsel %vm400, %v482, %v481
    %v484 = vsub.s32 4, %v460
    %v485 = vsel %vm400, %v484, %v460
    %v486 = vsel %vm399, %v57, %v483
    %v487 = vsel %vm399, 0, %v485
    %v488 = vcosq.f32.pop %v486
    %v489 = vsinq.f32.pop %v486
    %vm490 = vweird.f32 %v57
    %v491 = vadd.s32 %v487, 3
    %v492 = vand.u32 %v491, 3
    %vm493 = vcmp.lt.s32.totalorder %v492, 2
    %vm494 = vcmp.eq.s32.totalorder %v492, 0
    %v495 = vxor.u32 %v489, 2147483648
    %v496 = vsel %vm494, %v488, %v495
    %vm497 = vcmp.eq.s32.totalorder %v492, 2
    %v498 = vxor.u32 %v488, 2147483648
    %v499 = vsel %vm497, %v498, %v489
    %v500 = vsel %vm493, %v496, %v499
    %v501 = vsel %vm490, nan, %v500
    %v502 = vmul.f32 %v82, %v190
    %v503 = vmul.f32 %v83, %v293
    %v504 = vmul.f32 %v502, %v190
    %v505 = vmul.f32 %v503, %v293
    %v506 = vmul.f32 %v86, %v397
    %v507 = vmul.f32 %v87, %v501
    %v508 = vmul.f32 %v506, %v397
    %v509 = vmul.f32 %v507, %v501
    %v510 = vadd.f32 %v504, %v508
    %v511 = vadd.f32 %v505, %v509
    %v512 = vmul.f32 %v82, %v397
    %v513 = vmul.f32 %v83, %v501
    %v514 = vmul.f32 %v512, %v397
    %v515 = vmul.f32 %v513, %v501
    %v516 = vmul.f32 %v86, %v190
    %v517 = vmul.f32 %v87, %v293
    %v518 = vmul.f32 %v516, %v190
    %v519 = vmul.f32 %v517, %v293
    %v520 = vadd.f32 %v514, %v518
    %v521 = vadd.f32 %v515, %v519
    %v522 = vsub.f32 %v82, %v86
    %v523 = vsub.f32 %v83, %v87
    %v524 = vmul.f32 %v522, %v190
    %v525 = vmul.f32 %v523, %v293
    %v526 = vmul.f32 %v524, %v397
    %v527 = vmul.f32 %v525, %v501
    %v528 = vmul.f32 %v64, %v64
    %v529 = vmul.f32 %v65, %v65
    %v530 = vmul.f32 %v528, 0.083333336
    %v531 = vmul.f32 %v529, 0.083333336
    %v532 = vmul.f32 %v67, %v67
    %v533 = vmul.f32 %v68, %v68
    %v534 = vmul.f32 %v532, 0.083333336
    %v535 = vmul.f32 %v533, 0.083333336
    %v536 = vand.u32 2147483647, %v70
    %vm537 = vcmp.le.f32.partialorder %v536, 0.7853982
    %vm538 = vcmp.lt.s32.totalorder %v70, 0
    %v539 = vand.u32 %v70, 2139095040
    %v540 = vshrl.u32 %v539, 23
    %v541 = vsub.s32 %v540, 127
    %v542 = vand.u32 2147483647, %v70
    %v543 = vand.u32 %v542, 8388607
    %v544 = vor.u32 %v543, 8388608
    %v545 = vsub.s32 0, %v544
    %v546 = vadd.s32 %v541, 1
    %vm547 = vcmp.gt.s32.totalorder %v546, 0
    %v548 = vsel %vm547, %v546, 0
    %v549 = vshrl.u32 %v548, 5
    %v550 = vand.u32 %v548, 31
    %v551 = vsub.s32 32, %v550
    %v552 = vshrl.u32 683565275, %v551
    %v553 = vshll.u32 683565275, %v550
    %v554 = vshrl.u32 2475754826, %v551
    %v555 = vor.u32 %v553, %v554
    %v556 = vshll.u32 2475754826, %v550
    %v557 = vshrl.u32 2131351028, %v551
    %v558 = vor.u32 %v556, %v557
    %v559 = vshll.u32 2131351028, %v550
    %v560 = vshrl.u32 2102212464, %v551
    %v561 = vor.u32 %v559, %v560
    %v562 = vshll.u32 2102212464, %v550
    %v563 = vshrl.u32 920167782, %v551
    %v564 = vor.u32 %v562, %v563
    %v565 = vshll.u32 920167782, %v550
    %v566 = vshrl.u32 1326507024, %v551
    %v567 = vor.u32 %v565, %v566
    %vm568 = vcmp.lt.s32.totalorder %v549, 1
    %vm569 = vcmp.lt.s32.totalorder %v549, 2
    %vm570 = vcmp.lt.s32.totalorder %v549, 3
    %vm571 = vcmp.lt.s32.totalorder %v549, 4
    %v572 = vsel %vm568, %v552, %v555
    %v573 = vsel %vm571, %v561, 2102212464
    %v574 = vsel %vm570, %v558, %v573
    %v575 = vsel %vm569, %v572, %v574
    %v576 = vsel %vm568, %v555, %v558
    %v577 = vsel %vm571, %v564, 920167782
    %v578 = vsel %vm570, %v561, %v577
    %v579 = vsel %vm569, %v576, %v578
    %v580 = vsel %vm568, %v558, %v561
    %v581 = vsel %vm571, %v567, 1326507024
    %v582 = vsel %vm570, %v564, %v581
    %v583 = vsel %vm569, %v580, %v582
    %v584 = vshll.u32 %v544, 8
    %v585 = vmul.u32.u64.compose %v584, %v583
    %v586 = vextract.low.u32 %v585
    %v587 = vextract.high.u32 %v585
    %v588 = vmul.u32.u64.compose %v584, %v579
    %v589 = vextract.low.u32 %v588
    %v590 = vextract.high.u32 %v588
    %v591 = vmul.u32 %v584, %v575
    %v592 = vadd.s32 %v587, %v589
    %vm593 = vc.u32 %v587, %v589
    %v594 = vadd.s32 %v590, 1
    %v595 = vsel %vm593, %v594, %v590
    %v596 = vadd.s32 %v591, %v595
    %v597 = vadd.s32 %v596, 536870912
    %v598 = vshrl.u32 %v597, 30
    %v599 = vshll.u32 %v598, 30
    %v600 = vsub.s32 %v596, %v599
    %vm601 = vcmp.lt.s32.totalorder %v600, 0
    %v602 = vsub.s32 0, %v600
    %v603 = vsel %vm601, %v602, %v600
    %v604 = vclz %v603
    %v605 = vsub.s32 %v604, 2
    %vm606 = vcmp.gt.s32.totalorder 0, %v605
    %v607 = vsel %vm606, 0, %v605
    %v608 = vsub.s32 32, %v607
    %v609 = vshll.u32 %v600, %v607
    %v610 = vshrl.u32 %v592, %v608
    %v611 = vor.u32 %v609, %v610
    %v612 = vsub.s32 4294967266, %v607
    %v613 = vadd.s32 %v612, 127
    %v614 = vshll.u32 %v613, 23
    %v615 = vor.u32 4788187, %v614
    %v616 = vand.u32 2147483647, %v615
    %v618 = vcvt.s32.f32 %v611
    %v619 = vmul.f32 %v618, %v616
    %v620 = vxor.u32 %v619, 2147483648
    %v621 = vsel %vm538, %v620, %v619
    %v622 = vsub.s32 4, %v598
    %v623 = vsel %vm538, %v622, %v598
    %v624 = vsel %vm537, %v70, %v621
    %v625 = vsel %vm537, 0, %v623
    %v626 = vcosq.f32.pop %v624
    %v627 = vsinq.f32.pop %v624
    %vm628 = vweird.f32 %v70
    %v629 = vand.u32 %v625, 3
    %vm630 = vcmp.lt.s32.totalorder %v629, 2
    %vm631 = vcmp.eq.s32.totalorder %v629, 0
    %v632 = vxor.u32 %v627, 2147483648
    %v633 = vsel %vm631, %v626, %v632
    %vm634 = vcmp.eq.s32.totalorder %v629, 2
    %v635 = vxor.u32 %v626, 2147483648
    %v636 = vsel %vm634, %v635, %v627
    %v637 = vsel %vm630, %v633, %v636
    %v638 = vsel %vm628, nan, %v637
    %v639 = vand.u32 2147483647, %v71
    %vm640 = vcmp.le.f32.partialorder %v639, 0.7853982
    %vm641 = vcmp.lt.s32.totalorder %v71, 0
    %v642 = vand.u32 %v71, 2139095040
    %v643 = vshrl.u32 %v642, 23
    %v644 = vsub.s32 %v643, 127
    %v645 = vand.u32 2147483647, %v71
    %v646 = vand.u32 %v645, 8388607
    %v647 = vor.u32 %v646, 8388608
    %v648 = vsub.s32 0, %v647
    %v649 = vadd.s32 %v644, 1
    %vm650 = vcmp.gt.s32.totalorder %v649, 0
    %v651 = vsel %vm650, %v649, 0
    %v652 = vshrl.u32 %v651, 5
    %v653 = vand.u32 %v651, 31
    %v654 = vsub.s32 32, %v653
    %v655 = vshrl.u32 683565275, %v654
    %v656 = vshll.u32 683565275, %v653
    %v657 = vshrl.u32 2475754826, %v654
    %v658 = vor.u32 %v656, %v657
    %v659 = vshll.u32 2475754826, %v653
    %v660 = vshrl.u32 2131351028, %v654
    %v661 = vor.u32 %v659, %v660
    %v662 = vshll.u32 2131351028, %v653
    %v663 = vshrl.u32 2102212464, %v654
    %v664 = vor.u32 %v662, %v663
    %v665 = vshll.u32 2102212464, %v653
    %v666 = vshrl.u32 920167782, %v654
    %v667 = vor.u32 %v665, %v666
    %v668 = vshll.u32 920167782, %v653
    %v669 = vshrl.u32 1326507024, %v654
    %v670 = vor.u32 %v668, %v669
    %vm671 = vcmp.lt.s32.totalorder %v652, 1
    %vm672 = vcmp.lt.s32.totalorder %v652, 2
    %vm673 = vcmp.lt.s32.totalorder %v652, 3
    %vm674 = vcmp.lt.s32.totalorder %v652, 4
    %v675 = vsel %vm671, %v655, %v658
    %v676 = vsel %vm674, %v664, 2102212464
    %v677 = vsel %vm673, %v661, %v676
    %v678 = vsel %vm672, %v675, %v677
    %v679 = vsel %vm671, %v658, %v661
    %v680 = vsel %vm674, %v667, 920167782
    %v681 = vsel %vm673, %v664, %v680
    %v682 = vsel %vm672, %v679, %v681
    %v683 = vsel %vm671, %v661, %v664
    %v684 = vsel %vm674, %v670, 1326507024
    %v685 = vsel %vm673, %v667, %v684
    %v686 = vsel %vm672, %v683, %v685
    %v687 = vshll.u32 %v647, 8
    %v688 = vmul.u32.u64.compose %v687, %v686
    %v689 = vextract.low.u32 %v688
    %v690 = vextract.high.u32 %v688
    %v691 = vmul.u32.u64.compose %v687, %v682
    %v692 = vextract.low.u32 %v691
    %v693 = vextract.high.u32 %v691
    %v694 = vmul.u32 %v687, %v678
    %v695 = vadd.s32 %v690, %v692
    %vm696 = vc.u32 %v690, %v692
    %v697 = vadd.s32 %v693, 1
    %v698 = vsel %vm696, %v697, %v693
    %v699 = vadd.s32 %v694, %v698
    %v700 = vadd.s32 %v699, 536870912
    %v701 = vshrl.u32 %v700, 30
    %v702 = vshll.u32 %v701, 30
    %v703 = vsub.s32 %v699, %v702
    %vm704 = vcmp.lt.s32.totalorder %v703, 0
    %v705 = vsub.s32 0, %v703
    %v706 = vsel %vm704, %v705, %v703
    %v707 = vclz %v706
    %v708 = vsub.s32 %v707, 2
    %vm709 = vcmp.gt.s32.totalorder 0, %v708
    %v710 = vsel %vm709, 0, %v708
    %v711 = vsub.s32 32, %v710
    %v712 = vshll.u32 %v703, %v710
    %v713 = vshrl.u32 %v695, %v711
    %v714 = vor.u32 %v712, %v713
    %v715 = vsub.s32 4294967266, %v710
    %v716 = vadd.s32 %v715, 127
    %v717 = vshll.u32 %v716, 23
    %v718 = vor.u32 4788187, %v717
    %v719 = vand.u32 2147483647, %v718
    %v721 = vcvt.s32.f32 %v714
    %v722 = vmul.f32 %v721, %v719
    %v723 = vxor.u32 %v722, 2147483648
    %v724 = vsel %vm641, %v723, %v722
    %v725 = vsub.s32 4, %v701
    %v726 = vsel %vm641, %v725, %v701
    %v727 = vsel %vm640, %v71, %v724
    %v728 = vsel %vm640, 0, %v726
    %v729 = vcosq.f32.pop %v727
    %v730 = vsinq.f32.pop %v727
    %vm731 = vweird.f32 %v71
    %v732 = vand.u32 %v728, 3
    %vm733 = vcmp.lt.s32.totalorder %v732, 2
    %vm734 = vcmp.eq.s32.totalorder %v732, 0
    %v735 = vxor.u32 %v730, 2147483648
    %v736 = vsel %vm734, %v729, %v735
    %vm737 = vcmp.eq.s32.totalorder %v732, 2
    %v738 = vxor.u32 %v729, 2147483648
    %v739 = vsel %vm737, %v738, %v730
    %v740 = vsel %vm733, %v736, %v739
    %v741 = vsel %vm731, nan, %v740
    %v742 = vand.u32 2147483647, %v70
    %vm743 = vcmp.le.f32.partialorder %v742, 0.7853982
    %vm744 = vcmp.lt.s32.totalorder %v70, 0
    %v745 = vand.u32 %v70, 2139095040
    %v746 = vshrl.u32 %v745, 23
    %v747 = vsub.s32 %v746, 127
    %v748 = vand.u32 2147483647, %v70
    %v749 = vand.u32 %v748, 8388607
    %v750 = vor.u32 %v749, 8388608
    %v751 = vsub.s32 0, %v750
    %v752 = vadd.s32 %v747, 1
    %vm753 = vcmp.gt.s32.totalorder %v752, 0
    %v754 = vsel %vm753, %v752, 0
    %v755 = vshrl.u32 %v754, 5
    %v756 = vand.u32 %v754, 31
    %v757 = vsub.s32 32, %v756
    %v758 = vshrl.u32 683565275, %v757
    %v759 = vshll.u32 683565275, %v756
    %v760 = vshrl.u32 2475754826, %v757
    %v761 = vor.u32 %v759, %v760
    %v762 = vshll.u32 2475754826, %v756
    %v763 = vshrl.u32 2131351028, %v757
    %v764 = vor.u32 %v762, %v763
    %v765 = vshll.u32 2131351028, %v756
    %v766 = vshrl.u32 2102212464, %v757
    %v767 = vor.u32 %v765, %v766
    %v768 = vshll.u32 2102212464, %v756
    %v769 = vshrl.u32 920167782, %v757
    %v770 = vor.u32 %v768, %v769
    %v771 = vshll.u32 920167782, %v756
    %v772 = vshrl.u32 1326507024, %v757
    %v773 = vor.u32 %v771, %v772
    %vm774 = vcmp.lt.s32.totalorder %v755, 1
    %vm775 = vcmp.lt.s32.totalorder %v755, 2
    %vm776 = vcmp.lt.s32.totalorder %v755, 3
    %vm777 = vcmp.lt.s32.totalorder %v755, 4
    %v778 = vsel %vm774, %v758, %v761
    %v779 = vsel %vm777, %v767, 2102212464
    %v780 = vsel %vm776, %v764, %v779
    %v781 = vsel %vm775, %v778, %v780
    %v782 = vsel %vm774, %v761, %v764
    %v783 = vsel %vm777, %v770, 920167782
    %v784 = vsel %vm776, %v767, %v783
    %v785 = vsel %vm775, %v782, %v784
    %v786 = vsel %vm774, %v764, %v767
    %v787 = vsel %vm777, %v773, 1326507024
    %v788 = vsel %vm776, %v770, %v787
    %v789 = vsel %vm775, %v786, %v788
    %v790 = vshll.u32 %v750, 8
    %v791 = vmul.u32.u64.compose %v790, %v789
    %v792 = vextract.low.u32 %v791
    %v793 = vextract.high.u32 %v791
    %v794 = vmul.u32.u64.compose %v790, %v785
    %v795 = vextract.low.u32 %v794
    %v796 = vextract.high.u32 %v794
    %v797 = vmul.u32 %v790, %v781
    %v798 = vadd.s32 %v793, %v795
    %vm799 = vc.u32 %v793, %v795
    %v800 = vadd.s32 %v796, 1
    %v801 = vsel %vm799, %v800, %v796
    %v802 = vadd.s32 %v797, %v801
    %v803 = vadd.s32 %v802, 536870912
    %v804 = vshrl.u32 %v803, 30
    %v805 = vshll.u32 %v804, 30
    %v806 = vsub.s32 %v802, %v805
    %vm807 = vcmp.lt.s32.totalorder %v806, 0
    %v808 = vsub.s32 0, %v806
    %v809 = vsel %vm807, %v808, %v806
    %v810 = vclz %v809
    %v811 = vsub.s32 %v810, 2
    %vm812 = vcmp.gt.s32.totalorder 0, %v811
    %v813 = vsel %vm812, 0, %v811
    %v814 = vsub.s32 32, %v813
    %v815 = vshll.u32 %v806, %v813
    %v816 = vshrl.u32 %v798, %v814
    %v817 = vor.u32 %v815, %v816
    %v818 = vsub.s32 4294967266, %v813
    %v819 = vadd.s32 %v818, 127
    %v820 = vshll.u32 %v819, 23
    %v821 = vor.u32 4788187, %v820
    %v822 = vand.u32 2147483647, %v821
    %v824 = vcvt.s32.f32 %v817
    %v825 = vmul.f32 %v824, %v822
    %v826 = vxor.u32 %v825, 2147483648
    %v827 = vsel %vm744, %v826, %v825
    %v828 = vsub.s32 4, %v804
    %v829 = vsel %vm744, %v828, %v804
    %v830 = vsel %vm743, %v70, %v827
    %v831 = vsel %vm743, 0, %v829
    %v832 = vcosq.f32.pop %v830
    %v833 = vsinq.f32.pop %v830
    %vm834 = vweird.f32 %v70
    %v835 = vadd.s32 %v831, 3
    %v836 = vand.u32 %v835, 3
    %vm837 = vcmp.lt.s32.totalorder %v836, 2
    %vm838 = vcmp.eq.s32.totalorder %v836, 0
    %v839 = vxor.u32 %v833, 2147483648
    %v840 = vsel %vm838, %v832, %v839
    %vm841 = vcmp.eq.s32.totalorder %v836, 2
    %v842 = vxor.u32 %v832, 2147483648
    %v843 = vsel %vm841, %v842, %v833
    %v844 = vsel %vm837, %v840, %v843
    %v845 = vsel %vm834, nan, %v844
    %v846 = vand.u32 2147483647, %v71
    %vm847 = vcmp.le.f32.partialorder %v846, 0.7853982
    %vm848 = vcmp.lt.s32.totalorder %v71, 0
    %v849 = vand.u32 %v71, 2139095040
    %v850 = vshrl.u32 %v849, 23
    %v851 = vsub.s32 %v850, 127
    %v852 = vand.u32 2147483647, %v71
    %v853 = vand.u32 %v852, 8388607
    %v854 = vor.u32 %v853, 8388608
    %v855 = vsub.s32 0, %v854
    %v856 = vadd.s32 %v851, 1
    %vm857 = vcmp.gt.s32.totalorder %v856, 0
    %v858 = vsel %vm857, %v856, 0
    %v859 = vshrl.u32 %v858, 5
    %v860 = vand.u32 %v858, 31
    %v861 = vsub.s32 32, %v860
    %v862 = vshrl.u32 683565275, %v861
    %v863 = vshll.u32 683565275, %v860
    %v864 = vshrl.u32 2475754826, %v861
    %v865 = vor.u32 %v863, %v864
    %v866 = vshll.u32 2475754826, %v860
    %v867 = vshrl.u32 2131351028, %v861
    %v868 = vor.u32 %v866, %v867
    %v869 = vshll.u32 2131351028, %v860
    %v870 = vshrl.u32 2102212464, %v861
    %v871 = vor.u32 %v869, %v870
    %v872 = vshll.u32 2102212464, %v860
    %v873 = vshrl.u32 920167782, %v861
    %v874 = vor.u32 %v872, %v873
    %v875 = vshll.u32 920167782, %v860
    %v876 = vshrl.u32 1326507024, %v861
    %v877 = vor.u32 %v875, %v876
    %vm878 = vcmp.lt.s32.totalorder %v859, 1
    %vm879 = vcmp.lt.s32.totalorder %v859, 2
    %vm880 = vcmp.lt.s32.totalorder %v859, 3
    %vm881 = vcmp.lt.s32.totalorder %v859, 4
    %v882 = vsel %vm878, %v862, %v865
    %v883 = vsel %vm881, %v871, 2102212464
    %v884 = vsel %vm880, %v868, %v883
    %v885 = vsel %vm879, %v882, %v884
    %v886 = vsel %vm878, %v865, %v868
    %v887 = vsel %vm881, %v874, 920167782
    %v888 = vsel %vm880, %v871, %v887
    %v889 = vsel %vm879, %v886, %v888
    %v890 = vsel %vm878, %v868, %v871
    %v891 = vsel %vm881, %v877, 1326507024
    %v892 = vsel %vm880, %v874, %v891
    %v893 = vsel %vm879, %v890, %v892
    %v894 = vshll.u32 %v854, 8
    %v895 = vmul.u32.u64.compose %v894, %v893
    %v896 = vextract.low.u32 %v895
    %v897 = vextract.high.u32 %v895
    %v898 = vmul.u32.u64.compose %v894, %v889
    %v899 = vextract.low.u32 %v898
    %v900 = vextract.high.u32 %v898
    %v901 = vmul.u32 %v894, %v885
    %v902 = vadd.s32 %v897, %v899
    %vm903 = vc.u32 %v897, %v899
    %v904 = vadd.s32 %v900, 1
    %v905 = vsel %vm903, %v904, %v900
    %v906 = vadd.s32 %v901, %v905
    %v907 = vadd.s32 %v906, 536870912
    %v908 = vshrl.u32 %v907, 30
    %v909 = vshll.u32 %v908, 30
    %v910 = vsub.s32 %v906, %v909
    %vm911 = vcmp.lt.s32.totalorder %v910, 0
    %v912 = vsub.s32 0, %v910
    %v913 = vsel %vm911, %v912, %v910
    %v914 = vclz %v913
    %v915 = vsub.s32 %v914, 2
    %vm916 = vcmp.gt.s32.totalorder 0, %v915
    %v917 = vsel %vm916, 0, %v915
    %v918 = vsub.s32 32, %v917
    %v919 = vshll.u32 %v910, %v917
    %v920 = vshrl.u32 %v902, %v918
    %v921 = vor.u32 %v919, %v920
    %v922 = vsub.s32 4294967266, %v917
    %v923 = vadd.s32 %v922, 127
    %v924 = vshll.u32 %v923, 23
    %v925 = vor.u32 4788187, %v924
    %v926 = vand.u32 2147483647, %v925
    %v928 = vcvt.s32.f32 %v921
    %v929 = vmul.f32 %v928, %v926
    %v930 = vxor.u32 %v929, 2147483648
    %v931 = vsel %vm848, %v930, %v929
    %v932 = vsub.s32 4, %v908
    %v933 = vsel %vm848, %v932, %v908
    %v934 = vsel %vm847, %v71, %v931
    %v935 = vsel %vm847, 0, %v933
    %v936 = vcosq.f32.pop %v934
    %v937 = vsinq.f32.pop %v934
    %vm938 = vweird.f32 %v71
    %v939 = vadd.s32 %v935, 3
    %v940 = vand.u32 %v939, 3
    %vm941 = vcmp.lt.s32.totalorder %v940, 2
    %vm942 = vcmp.eq.s32.totalorder %v940, 0
    %v943 = vxor.u32 %v937, 2147483648
    %v944 = vsel %vm942, %v936, %v943
    %vm945 = vcmp.eq.s32.totalorder %v940, 2
    %v946 = vxor.u32 %v936, 2147483648
    %v947 = vsel %vm945, %v946, %v937
    %v948 = vsel %vm941, %v944, %v947
    %v949 = vsel %vm938, nan, %v948
    %v950 = vmul.f32 %v530, %v638
    %v951 = vmul.f32 %v531, %v741
    %v952 = vmul.f32 %v950, %v638
    %v953 = vmul.f32 %v951, %v741
    %v954 = vmul.f32 %v534, %v845
    %v955 = vmul.f32 %v535, %v949
    %v956 = vmul.f32 %v954, %v845
    %v957 = vmul.f32 %v955, %v949
    %v958 = vadd.f32 %v952, %v956
    %v959 = vadd.f32 %v953, %v957
    %v960 = vmul.f32 %v530, %v845
    %v961 = vmul.f32 %v531, %v949
    %v962 = vmul.f32 %v960, %v845
    %v963 = vmul.f32 %v961, %v949
    %v964 = vmul.f32 %v534, %v638
    %v965 = vmul.f32 %v535, %v741
    %v966 = vmul.f32 %v964, %v638
    %v967 = vmul.f32 %v965, %v741
    %v968 = vadd.f32 %v962, %v966
    %v969 = vadd.f32 %v963, %v967
    %v970 = vsub.f32 %v530, %v534
    %v971 = vsub.f32 %v531, %v535
    %v972 = vmul.f32 %v970, %v638
    %v973 = vmul.f32 %v971, %v741
    %v974 = vmul.f32 %v972, %v845
    %v975 = vmul.f32 %v973, %v949
    %v976 = vadd.f32 %v510, %v958
    %v977 = vadd.f32 %v511, %v959
    %v978 = vadd.f32 %v520, %v968
    %v979 = vadd.f32 %v521, %v969
    %v980 = vadd.f32 %v526, %v974
    %v981 = vadd.f32 %v527, %v975
    %v982 = vsub.f32 %v41, %v58
    %v983 = vsub.f32 %v42, %v59
    %v984 = vsub.f32 %v44, %v61
    %v985 = vsub.f32 %v45, %v62
    %v986 = vmul.f32 %v976, %v978
    %v987 = vmul.f32 %v977, %v979
    %v988 = vmul.f32 %v980, %v980
    %v989 = vmul.f32 %v981, %v981
    %v990 = vsub.f32 %v986, %v988
    %v991 = vsub.f32 %v987, %v989
    %v992 = vadd.f32 %v990, 1e-07
    %v993 = vadd.f32 %v991, 1e-07
    %v994 = vrcp.pop %v992
    %v995 = vrcp.pop %v993
    %v996 = vmul.f32 %v976, %v984
    %v997 = vmul.f32 %v977, %v985
    %v998 = vmul.f32 %v996, %v984
    %v999 = vmul.f32 %v997, %v985
    %v1000 = vmul.f32 %v978, %v982
    %v1001 = vmul.f32 %v979, %v983
    %v1002 = vmul.f32 %v1000, %v982
    %v1003 = vmul.f32 %v1001, %v983
    %v1004 = vadd.f32 %v998, %v1002
    %v1005 = vadd.f32 %v999, %v1003
    %v1006 = vmul.f32 %v994, 0.25
    %v1007 = vmul.f32 %v995, 0.25
    %v1008 = vmul.f32 %v1004, %v1006
    %v1009 = vmul.f32 %v1005, %v1007
    %v1010 = vsub.f32 0.0, %v982
    %v1011 = vsub.f32 0.0, %v983
    %v1012 = vmul.f32 %v980, %v1010
    %v1013 = vmul.f32 %v981, %v1011
    %v1014 = vmul.f32 %v1012, %v984
    %v1015 = vmul.f32 %v1013, %v985
    %v1016 = vmul.f32 %v994, 0.5
    %v1017 = vmul.f32 %v995, 0.5
    %v1018 = vmul.f32 %v1014, %v1016
    %v1019 = vmul.f32 %v1015, %v1017
    %v1020 = vmul.f32 %v510, %v520
    %v1021 = vmul.f32 %v511, %v521
    %v1022 = vmul.f32 %v526, %v526
    %v1023 = vmul.f32 %v527, %v527
    %v1024 = vsub.f32 %v1020, %v1022
    %v1025 = vsub.f32 %v1021, %v1023
    %v1026 = vmax.f32 %v1024, 0.0
    %v1027 = vmax.f32 %v1025, 0.0
    %v1028 = vmul.f32 %v958, %v968
    %v1029 = vmul.f32 %v959, %v969
    %v1030 = vmul.f32 %v974, %v974
    %v1031 = vmul.f32 %v975, %v975
    %v1032 = vsub.f32 %v1028, %v1030
    %v1033 = vsub.f32 %v1029, %v1031
    %v1034 = vmax.f32 %v1032, 0.0
    %v1035 = vmax.f32 %v1033, 0.0
    %v1036 = vmul.f32 %v1026, %v1034
    %v1037 = vmul.f32 %v1027, %v1035
    %v1038 = vrsqrt.pop %v1036
    %v1039 = vmul.f32 %v1036, %v1038
    %vm1040 = vcmp.eq.f32.partialorder %v1036, inf
    %v1041 = vsel %vm1040, %v1036, %v1039
    %vm1042 = vcmp.eq.f32.partialorder %v1036, 0.0
    %v1043 = vand.u32 %v1036, 2147483648
    %v1044 = vsel %vm1042, %v1043, %v1041
    %v1045 = vrsqrt.pop %v1037
    %v1046 = vmul.f32 %v1037, %v1045
    %vm1047 = vcmp.eq.f32.partialorder %v1037, inf
    %v1048 = vsel %vm1047, %v1037, %v1046
    %vm1049 = vcmp.eq.f32.partialorder %v1037, 0.0
    %v1050 = vand.u32 %v1037, 2147483648
    %v1051 = vsel %vm1049, %v1050, %v1048
    %v1052 = vmul.f32 %v1044, 4.0
    %v1053 = vmul.f32 %v1051, 4.0
    %v1054 = vadd.f32 %v1052, 1e-07
    %v1055 = vadd.f32 %v1053, 1e-07
    %v1056 = vrcp.pop %v1054
    %v1057 = vmul.f32 %v990, %v1056
    %v1058 = vrcp.pop %v1055
    %v1059 = vmul.f32 %v991, %v1058
    %v1060 = vadd.f32 %v1057, 1e-07
    %v1061 = vadd.f32 %v1059, 1e-07
    %v1062 = vlog2.pop %v1060
    %v1063 = vmul.f32 %v1062, 0.6931472
    %v1064 = vlog2.pop %v1061
    %v1065 = vmul.f32 %v1064, 0.6931472
    %v1066 = vmul.f32 %v1063, 0.5
    %v1067 = vmul.f32 %v1065, 0.5
    %v1068 = vadd.f32 %v1008, %v1018
    %v1069 = vadd.f32 %v1009, %v1019
    %v1070 = vadd.f32 %v1068, %v1066
    %v1071 = vadd.f32 %v1069, %v1067
    %v1072 = vmax.f32 %v1070, 1e-07
    %v1073 = vmax.f32 %v1071, 1e-07
    %v1074 = vmin.f32 %v1072, 100.0
    %v1075 = vmin.f32 %v1073, 100.0
    %v1076 = vsub.f32 0.0, %v1074
    %v1077 = vsub.f32 0.0, %v1075
    %v1078 = vmul.f32 %v1076, 1.442695
    %v1079 = vpow.pop %v1078
    %v1080 = vmul.f32 %v1077, 1.442695
    %v1081 = vpow.pop %v1080
    %v1082 = vsub.f32 1.0, %v1079
    %v1083 = vsub.f32 1.0, %v1081
    %v1084 = vadd.f32 %v1082, 1e-07
    %v1085 = vadd.f32 %v1083, 1e-07
    %v1086 = vrsqrt.pop %v1084
    %v1087 = vmul.f32 %v1084, %v1086
    %vm1088 = vcmp.eq.f32.partialorder %v1084, inf
    %v1089 = vsel %vm1088, %v1084, %v1087
    %vm1090 = vcmp.eq.f32.partialorder %v1084, 0.0
    %v1091 = vand.u32 %v1084, 2147483648
    %v1092 = vsel %vm1090, %v1091, %v1089
    %v1093 = vrsqrt.pop %v1085
    %v1094 = vmul.f32 %v1085, %v1093
    %vm1095 = vcmp.eq.f32.partialorder %v1085, inf
    %v1096 = vsel %vm1095, %v1085, %v1094
    %vm1097 = vcmp.eq.f32.partialorder %v1085, 0.0
    %v1098 = vand.u32 %v1085, 2147483648
    %v1099 = vsel %vm1097, %v1098, %v1096
    %v1100 = vsub.f32 1.0, %v1092
    %v1101 = vsub.f32 1.0, %v1099
    %v1102 = vsub.f32 1.0, %v1100
    %v1103 = vsub.f32 1.0, %v1101
    %v1104 = vmul.f32 %v1102, %v39
    %v1105 = vmul.f32 %v1103, %v40
    %v1106 = vsel %vm37, %v1104, 0.0
    %v1107 = vsel %vm38, %v1105, 0.0
    %v1108 = vadd.f32 %v1106, 0.0
    %v1109 = vadd.f32 %v1107, 0.0
    %v1110 = vmul.f32 %v64, 0.5
    %v1111 = vmul.f32 %v65, 0.5
    %v1112 = vmul.f32 %v67, 0.5
    %v1113 = vmul.f32 %v68, 0.5
    %v1114 = vsub.f32 %v58, %v1110
    %v1115 = vsub.f32 %v59, %v1111
    %v1116 = vsub.f32 %v74, %v1114
    %v1117 = vsub.f32 %v75, %v1115
    %v1118 = vsub.f32 %v61, %v1112
    %v1119 = vsub.f32 %v62, %v1113
    %v1120 = vsub.f32 %v78, %v1118
    %v1121 = vsub.f32 %v79, %v1119
    %v1122 = vadd.f32 %v58, %v1110
    %v1123 = vadd.f32 %v59, %v1111
    %v1124 = vsub.f32 %v1122, %v74
    %v1125 = vsub.f32 %v1123, %v75
    %v1126 = vadd.f32 %v61, %v1112
    %v1127 = vadd.f32 %v62, %v1113
    %v1128 = vsub.f32 %v1126, %v78
    %v1129 = vsub.f32 %v1127, %v79
    %v1130 = vmax.f32 %v1116, 0.0
    %v1131 = vmax.f32 %v1117, 0.0
    %v1132 = vmin.f32 %v1130, 14.99
    %v1133 = vmin.f32 %v1131, 14.99
    %v1134 = vld [vmem:[%s1] sm:$0xf]
    %v1135 = vld [vmem:[%s1 + $0x4] sm:$0xf]
    %v1136 = vunpack.c.l.bf16 %v1134
    %v1137 = vunpack.c.l.bf16 %v1135
    %s1138 = sadd.s32 0, 2
    %s1139 = smul.addr %s1138, 4
    %s1140 = scalar_lea.vmem %s1, %s1139
    %v1141 = vld [vmem:[%s1140] sm:$0xf]
    %v1142 = vld [vmem:[%s1140 + $0x4] sm:$0xf]
    %v1143 = vunpack.c.l.bf16 %v1141
    %v1144 = vunpack.c.l.bf16 %v1142
    %v1145 = vmax.f32 %v1136, %v1143
    %v1146 = vmax.f32 %v1137, %v1144
    %s1147 = sadd.s32 0, 4
    %s1148 = smul.addr %s1147, 4
    %s1149 = scalar_lea.vmem %s1, %s1148
    %v1150 = vld [vmem:[%s1149] sm:$0xf]
    %v1151 = vld [vmem:[%s1149 + $0x4] sm:$0xf]
    %v1152 = vunpack.c.l.bf16 %v1150
    %v1153 = vunpack.c.l.bf16 %v1151
    %v1154 = vmax.f32 %v1145, %v1152
    %v1155 = vmax.f32 %v1146, %v1153
    %s1156 = sadd.s32 0, 6
    %s1157 = smul.addr %s1156, 4
    %s1158 = scalar_lea.vmem %s1, %s1157
    %v1159 = vld [vmem:[%s1158] sm:$0xf]
    %v1160 = vld [vmem:[%s1158 + $0x4] sm:$0xf]
    %v1161 = vunpack.c.l.bf16 %v1159
    %v1162 = vunpack.c.l.bf16 %v1160
    %v1163 = vmax.f32 %v1154, %v1161
    %v1164 = vmax.f32 %v1155, %v1162
    %s1165 = sadd.s32 0, 8
    %s1166 = smul.addr %s1165, 4
    %s1167 = scalar_lea.vmem %s1, %s1166
    %v1168 = vld [vmem:[%s1167] sm:$0xf]
    %v1169 = vld [vmem:[%s1167 + $0x4] sm:$0xf]
    %v1170 = vunpack.c.l.bf16 %v1168
    %v1171 = vunpack.c.l.bf16 %v1169
    %v1172 = vmax.f32 %v1163, %v1170
    %v1173 = vmax.f32 %v1164, %v1171
    %s1174 = sadd.s32 0, 10
    %s1175 = smul.addr %s1174, 4
    %s1176 = scalar_lea.vmem %s1, %s1175
    %v1177 = vld [vmem:[%s1176] sm:$0xf]
    %v1178 = vld [vmem:[%s1176 + $0x4] sm:$0xf]
    %v1179 = vunpack.c.l.bf16 %v1177
    %v1180 = vunpack.c.l.bf16 %v1178
    %v1181 = vmax.f32 %v1172, %v1179
    %v1182 = vmax.f32 %v1173, %v1180
    %s1183 = sadd.s32 0, 12
    %s1184 = smul.addr %s1183, 4
    %s1185 = scalar_lea.vmem %s1, %s1184
    %v1186 = vld [vmem:[%s1185] sm:$0xf]
    %v1187 = vld [vmem:[%s1185 + $0x4] sm:$0xf]
    %v1188 = vunpack.c.l.bf16 %v1186
    %v1189 = vunpack.c.l.bf16 %v1187
    %v1190 = vmax.f32 %v1181, %v1188
    %v1191 = vmax.f32 %v1182, %v1189
    %s1192 = sadd.s32 0, 14
    %s1193 = smul.addr %s1192, 4
    %s1194 = scalar_lea.vmem %s1, %s1193
    %v1195 = vld [vmem:[%s1194] sm:$0xf]
    %v1196 = vld [vmem:[%s1194 + $0x4] sm:$0xf]
    %v1197 = vunpack.c.l.bf16 %v1195
    %v1198 = vunpack.c.l.bf16 %v1196
    %v1199 = vmax.f32 %v1190, %v1197
    %v1200 = vmax.f32 %v1191, %v1198
    %s1201 = sadd.s32 0, 16
    %s1202 = smul.addr %s1201, 4
    %s1203 = scalar_lea.vmem %s1, %s1202
    %v1204 = vld [vmem:[%s1203] sm:$0xf]
    %v1205 = vld [vmem:[%s1203 + $0x4] sm:$0xf]
    %v1206 = vunpack.c.l.bf16 %v1204
    %v1207 = vunpack.c.l.bf16 %v1205
    %v1208 = vmax.f32 %v1199, %v1206
    %v1209 = vmax.f32 %v1200, %v1207
    %s1210 = sadd.s32 0, 18
    %s1211 = smul.addr %s1210, 4
    %s1212 = scalar_lea.vmem %s1, %s1211
    %v1213 = vld [vmem:[%s1212] sm:$0xf]
    %v1214 = vld [vmem:[%s1212 + $0x4] sm:$0xf]
    %v1215 = vunpack.c.l.bf16 %v1213
    %v1216 = vunpack.c.l.bf16 %v1214
    %v1217 = vmax.f32 %v1208, %v1215
    %v1218 = vmax.f32 %v1209, %v1216
    %s1219 = sadd.s32 0, 20
    %s1220 = smul.addr %s1219, 4
    %s1221 = scalar_lea.vmem %s1, %s1220
    %v1222 = vld [vmem:[%s1221] sm:$0xf]
    %v1223 = vld [vmem:[%s1221 + $0x4] sm:$0xf]
    %v1224 = vunpack.c.l.bf16 %v1222
    %v1225 = vunpack.c.l.bf16 %v1223
    %v1226 = vmax.f32 %v1217, %v1224
    %v1227 = vmax.f32 %v1218, %v1225
    %s1228 = sadd.s32 0, 22
    %s1229 = smul.addr %s1228, 4
    %s1230 = scalar_lea.vmem %s1, %s1229
    %v1231 = vld [vmem:[%s1230] sm:$0xf]
    %v1232 = vld [vmem:[%s1230 + $0x4] sm:$0xf]
    %v1233 = vunpack.c.l.bf16 %v1231
    %v1234 = vunpack.c.l.bf16 %v1232
    %v1235 = vmax.f32 %v1226, %v1233
    %v1236 = vmax.f32 %v1227, %v1234
    %s1237 = sadd.s32 0, 24
    %s1238 = smul.addr %s1237, 4
    %s1239 = scalar_lea.vmem %s1, %s1238
    %v1240 = vld [vmem:[%s1239] sm:$0xf]
    %v1241 = vld [vmem:[%s1239 + $0x4] sm:$0xf]
    %v1242 = vunpack.c.l.bf16 %v1240
    %v1243 = vunpack.c.l.bf16 %v1241
    %v1244 = vmax.f32 %v1235, %v1242
    %v1245 = vmax.f32 %v1236, %v1243
    %s1246 = sadd.s32 0, 26
    %s1247 = smul.addr %s1246, 4
    %s1248 = scalar_lea.vmem %s1, %s1247
    %v1249 = vld [vmem:[%s1248] sm:$0xf]
    %v1250 = vld [vmem:[%s1248 + $0x4] sm:$0xf]
    %v1251 = vunpack.c.l.bf16 %v1249
    %v1252 = vunpack.c.l.bf16 %v1250
    %v1253 = vmax.f32 %v1244, %v1251
    %v1254 = vmax.f32 %v1245, %v1252
    %s1255 = sadd.s32 0, 28
    %s1256 = smul.addr %s1255, 4
    %s1257 = scalar_lea.vmem %s1, %s1256
    %v1258 = vld [vmem:[%s1257] sm:$0xf]
    %v1259 = vld [vmem:[%s1257 + $0x4] sm:$0xf]
    %v1260 = vunpack.c.l.bf16 %v1258
    %v1261 = vunpack.c.l.bf16 %v1259
    %v1262 = vmax.f32 %v1253, %v1260
    %v1263 = vmax.f32 %v1254, %v1261
    %s1264 = sadd.s32 0, 30
    %s1265 = smul.addr %s1264, 4
    %s1266 = scalar_lea.vmem %s1, %s1265
    %v1267 = vld [vmem:[%s1266] sm:$0xf]
    %v1268 = vld [vmem:[%s1266 + $0x4] sm:$0xf]
    %v1269 = vunpack.c.l.bf16 %v1267
    %v1270 = vunpack.c.l.bf16 %v1268
    %v1271 = vmax.f32 %v1262, %v1269
    %v1272 = vmax.f32 %v1263, %v1270
    %v1273 = vsub.f32 %v1136, %v1271
    %v1274 = vsub.f32 %v1137, %v1272
    %v1275 = vmul.f32 %v1273, 1.442695
    %v1276 = vpow.pop %v1275
    %v1277 = vmul.f32 %v1274, 1.442695
    %v1278 = vpow.pop %v1277
    %v1279 = vadd.f32 %v1276, 0.0
    %v1280 = vadd.f32 %v1278, 0.0
    %v1281 = vand.u32 2147483647, %v1132
    %v1282 = vand.u32 2147483647, %v1133
    %v1283 = vsub.f32 1.0, %v1281
    %v1284 = vsub.f32 1.0, %v1282
    %v1285 = vmax.f32 %v1283, 0.0
    %v1286 = vmax.f32 %v1284, 0.0
    %v1287 = vmul.f32 %v1136, %v1285
    %v1288 = vmul.f32 %v1137, %v1286
    %v1289 = vadd.f32 %v1287, 0.0
    %v1290 = vadd.f32 %v1288, 0.0
    %v1291 = vsub.f32 %v1143, %v1271
    %v1292 = vsub.f32 %v1144, %v1272
    %v1293 = vmul.f32 %v1291, 1.442695
    %v1294 = vpow.pop %v1293
    %v1295 = vmul.f32 %v1292, 1.442695
    %v1296 = vpow.pop %v1295
    %v1297 = vadd.f32 %v1279, %v1294
    %v1298 = vadd.f32 %v1280, %v1296
    %v1299 = vsub.f32 %v1132, 1.0
    %v1300 = vsub.f32 %v1133, 1.0
    %v1301 = vand.u32 2147483647, %v1299
    %v1302 = vand.u32 2147483647, %v1300
    %v1303 = vsub.f32 1.0, %v1301
    %v1304 = vsub.f32 1.0, %v1302
    %v1305 = vmax.f32 %v1303, 0.0
    %v1306 = vmax.f32 %v1304, 0.0
    %v1307 = vmul.f32 %v1143, %v1305
    %v1308 = vmul.f32 %v1144, %v1306
    %v1309 = vadd.f32 %v1289, %v1307
    %v1310 = vadd.f32 %v1290, %v1308
    %v1311 = vsub.f32 %v1152, %v1271
    %v1312 = vsub.f32 %v1153, %v1272
    %v1313 = vmul.f32 %v1311, 1.442695
    %v1314 = vpow.pop %v1313
    %v1315 = vmul.f32 %v1312, 1.442695
    %v1316 = vpow.pop %v1315
    %v1317 = vadd.f32 %v1297, %v1314
    %v1318 = vadd.f32 %v1298, %v1316
    %v1319 = vsub.f32 %v1132, 2.0
    %v1320 = vsub.f32 %v1133, 2.0
    %v1321 = vand.u32 2147483647, %v1319
    %v1322 = vand.u32 2147483647, %v1320
    %v1323 = vsub.f32 1.0, %v1321
    %v1324 = vsub.f32 1.0, %v1322
    %v1325 = vmax.f32 %v1323, 0.0
    %v1326 = vmax.f32 %v1324, 0.0
    %v1327 = vmul.f32 %v1152, %v1325
    %v1328 = vmul.f32 %v1153, %v1326
    %v1329 = vadd.f32 %v1309, %v1327
    %v1330 = vadd.f32 %v1310, %v1328
    %v1331 = vsub.f32 %v1161, %v1271
    %v1332 = vsub.f32 %v1162, %v1272
    %v1333 = vmul.f32 %v1331, 1.442695
    %v1334 = vpow.pop %v1333
    %v1335 = vmul.f32 %v1332, 1.442695
    %v1336 = vpow.pop %v1335
    %v1337 = vadd.f32 %v1317, %v1334
    %v1338 = vadd.f32 %v1318, %v1336
    %v1339 = vsub.f32 %v1132, 3.0
    %v1340 = vsub.f32 %v1133, 3.0
    %v1341 = vand.u32 2147483647, %v1339
    %v1342 = vand.u32 2147483647, %v1340
    %v1343 = vsub.f32 1.0, %v1341
    %v1344 = vsub.f32 1.0, %v1342
    %v1345 = vmax.f32 %v1343, 0.0
    %v1346 = vmax.f32 %v1344, 0.0
    %v1347 = vmul.f32 %v1161, %v1345
    %v1348 = vmul.f32 %v1162, %v1346
    %v1349 = vadd.f32 %v1329, %v1347
    %v1350 = vadd.f32 %v1330, %v1348
    %v1351 = vsub.f32 %v1170, %v1271
    %v1352 = vsub.f32 %v1171, %v1272
    %v1353 = vmul.f32 %v1351, 1.442695
    %v1354 = vpow.pop %v1353
    %v1355 = vmul.f32 %v1352, 1.442695
    %v1356 = vpow.pop %v1355
    %v1357 = vadd.f32 %v1337, %v1354
    %v1358 = vadd.f32 %v1338, %v1356
    %v1359 = vsub.f32 %v1132, 4.0
    %v1360 = vsub.f32 %v1133, 4.0
    %v1361 = vand.u32 2147483647, %v1359
    %v1362 = vand.u32 2147483647, %v1360
    %v1363 = vsub.f32 1.0, %v1361
    %v1364 = vsub.f32 1.0, %v1362
    %v1365 = vmax.f32 %v1363, 0.0
    %v1366 = vmax.f32 %v1364, 0.0
    %v1367 = vmul.f32 %v1170, %v1365
    %v1368 = vmul.f32 %v1171, %v1366
    %v1369 = vadd.f32 %v1349, %v1367
    %v1370 = vadd.f32 %v1350, %v1368
    %v1371 = vsub.f32 %v1179, %v1271
    %v1372 = vsub.f32 %v1180, %v1272
    %v1373 = vmul.f32 %v1371, 1.442695
    %v1374 = vpow.pop %v1373
    %v1375 = vmul.f32 %v1372, 1.442695
    %v1376 = vpow.pop %v1375
    %v1377 = vadd.f32 %v1357, %v1374
    %v1378 = vadd.f32 %v1358, %v1376
    %v1379 = vsub.f32 %v1132, 5.0
    %v1380 = vsub.f32 %v1133, 5.0
    %v1381 = vand.u32 2147483647, %v1379
    %v1382 = vand.u32 2147483647, %v1380
    %v1383 = vsub.f32 1.0, %v1381
    %v1384 = vsub.f32 1.0, %v1382
    %v1385 = vmax.f32 %v1383, 0.0
    %v1386 = vmax.f32 %v1384, 0.0
    %v1387 = vmul.f32 %v1179, %v1385
    %v1388 = vmul.f32 %v1180, %v1386
    %v1389 = vadd.f32 %v1369, %v1387
    %v1390 = vadd.f32 %v1370, %v1388
    %v1391 = vsub.f32 %v1188, %v1271
    %v1392 = vsub.f32 %v1189, %v1272
    %v1393 = vmul.f32 %v1391, 1.442695
    %v1394 = vpow.pop %v1393
    %v1395 = vmul.f32 %v1392, 1.442695
    %v1396 = vpow.pop %v1395
    %v1397 = vadd.f32 %v1377, %v1394
    %v1398 = vadd.f32 %v1378, %v1396
    %v1399 = vsub.f32 %v1132, 6.0
    %v1400 = vsub.f32 %v1133, 6.0
    %v1401 = vand.u32 2147483647, %v1399
    %v1402 = vand.u32 2147483647, %v1400
    %v1403 = vsub.f32 1.0, %v1401
    %v1404 = vsub.f32 1.0, %v1402
    %v1405 = vmax.f32 %v1403, 0.0
    %v1406 = vmax.f32 %v1404, 0.0
    %v1407 = vmul.f32 %v1188, %v1405
    %v1408 = vmul.f32 %v1189, %v1406
    %v1409 = vadd.f32 %v1389, %v1407
    %v1410 = vadd.f32 %v1390, %v1408
    %v1411 = vsub.f32 %v1197, %v1271
    %v1412 = vsub.f32 %v1198, %v1272
    %v1413 = vmul.f32 %v1411, 1.442695
    %v1414 = vpow.pop %v1413
    %v1415 = vmul.f32 %v1412, 1.442695
    %v1416 = vpow.pop %v1415
    %v1417 = vadd.f32 %v1397, %v1414
    %v1418 = vadd.f32 %v1398, %v1416
    %v1419 = vsub.f32 %v1132, 7.0
    %v1420 = vsub.f32 %v1133, 7.0
    %v1421 = vand.u32 2147483647, %v1419
    %v1422 = vand.u32 2147483647, %v1420
    %v1423 = vsub.f32 1.0, %v1421
    %v1424 = vsub.f32 1.0, %v1422
    %v1425 = vmax.f32 %v1423, 0.0
    %v1426 = vmax.f32 %v1424, 0.0
    %v1427 = vmul.f32 %v1197, %v1425
    %v1428 = vmul.f32 %v1198, %v1426
    %v1429 = vadd.f32 %v1409, %v1427
    %v1430 = vadd.f32 %v1410, %v1428
    %v1431 = vsub.f32 %v1206, %v1271
    %v1432 = vsub.f32 %v1207, %v1272
    %v1433 = vmul.f32 %v1431, 1.442695
    %v1434 = vpow.pop %v1433
    %v1435 = vmul.f32 %v1432, 1.442695
    %v1436 = vpow.pop %v1435
    %v1437 = vadd.f32 %v1417, %v1434
    %v1438 = vadd.f32 %v1418, %v1436
    %v1439 = vsub.f32 %v1132, 8.0
    %v1440 = vsub.f32 %v1133, 8.0
    %v1441 = vand.u32 2147483647, %v1439
    %v1442 = vand.u32 2147483647, %v1440
    %v1443 = vsub.f32 1.0, %v1441
    %v1444 = vsub.f32 1.0, %v1442
    %v1445 = vmax.f32 %v1443, 0.0
    %v1446 = vmax.f32 %v1444, 0.0
    %v1447 = vmul.f32 %v1206, %v1445
    %v1448 = vmul.f32 %v1207, %v1446
    %v1449 = vadd.f32 %v1429, %v1447
    %v1450 = vadd.f32 %v1430, %v1448
    %v1451 = vsub.f32 %v1215, %v1271
    %v1452 = vsub.f32 %v1216, %v1272
    %v1453 = vmul.f32 %v1451, 1.442695
    %v1454 = vpow.pop %v1453
    %v1455 = vmul.f32 %v1452, 1.442695
    %v1456 = vpow.pop %v1455
    %v1457 = vadd.f32 %v1437, %v1454
    %v1458 = vadd.f32 %v1438, %v1456
    %v1459 = vsub.f32 %v1132, 9.0
    %v1460 = vsub.f32 %v1133, 9.0
    %v1461 = vand.u32 2147483647, %v1459
    %v1462 = vand.u32 2147483647, %v1460
    %v1463 = vsub.f32 1.0, %v1461
    %v1464 = vsub.f32 1.0, %v1462
    %v1465 = vmax.f32 %v1463, 0.0
    %v1466 = vmax.f32 %v1464, 0.0
    %v1467 = vmul.f32 %v1215, %v1465
    %v1468 = vmul.f32 %v1216, %v1466
    %v1469 = vadd.f32 %v1449, %v1467
    %v1470 = vadd.f32 %v1450, %v1468
    %v1471 = vsub.f32 %v1224, %v1271
    %v1472 = vsub.f32 %v1225, %v1272
    %v1473 = vmul.f32 %v1471, 1.442695
    %v1474 = vpow.pop %v1473
    %v1475 = vmul.f32 %v1472, 1.442695
    %v1476 = vpow.pop %v1475
    %v1477 = vadd.f32 %v1457, %v1474
    %v1478 = vadd.f32 %v1458, %v1476
    %v1479 = vsub.f32 %v1132, 10.0
    %v1480 = vsub.f32 %v1133, 10.0
    %v1481 = vand.u32 2147483647, %v1479
    %v1482 = vand.u32 2147483647, %v1480
    %v1483 = vsub.f32 1.0, %v1481
    %v1484 = vsub.f32 1.0, %v1482
    %v1485 = vmax.f32 %v1483, 0.0
    %v1486 = vmax.f32 %v1484, 0.0
    %v1487 = vmul.f32 %v1224, %v1485
    %v1488 = vmul.f32 %v1225, %v1486
    %v1489 = vadd.f32 %v1469, %v1487
    %v1490 = vadd.f32 %v1470, %v1488
    %v1491 = vsub.f32 %v1233, %v1271
    %v1492 = vsub.f32 %v1234, %v1272
    %v1493 = vmul.f32 %v1491, 1.442695
    %v1494 = vpow.pop %v1493
    %v1495 = vmul.f32 %v1492, 1.442695
    %v1496 = vpow.pop %v1495
    %v1497 = vadd.f32 %v1477, %v1494
    %v1498 = vadd.f32 %v1478, %v1496
    %v1499 = vsub.f32 %v1132, 11.0
    %v1500 = vsub.f32 %v1133, 11.0
    %v1501 = vand.u32 2147483647, %v1499
    %v1502 = vand.u32 2147483647, %v1500
    %v1503 = vsub.f32 1.0, %v1501
    %v1504 = vsub.f32 1.0, %v1502
    %v1505 = vmax.f32 %v1503, 0.0
    %v1506 = vmax.f32 %v1504, 0.0
    %v1507 = vmul.f32 %v1233, %v1505
    %v1508 = vmul.f32 %v1234, %v1506
    %v1509 = vadd.f32 %v1489, %v1507
    %v1510 = vadd.f32 %v1490, %v1508
    %v1511 = vsub.f32 %v1242, %v1271
    %v1512 = vsub.f32 %v1243, %v1272
    %v1513 = vmul.f32 %v1511, 1.442695
    %v1514 = vpow.pop %v1513
    %v1515 = vmul.f32 %v1512, 1.442695
    %v1516 = vpow.pop %v1515
    %v1517 = vadd.f32 %v1497, %v1514
    %v1518 = vadd.f32 %v1498, %v1516
    %v1519 = vsub.f32 %v1132, 12.0
    %v1520 = vsub.f32 %v1133, 12.0
    %v1521 = vand.u32 2147483647, %v1519
    %v1522 = vand.u32 2147483647, %v1520
    %v1523 = vsub.f32 1.0, %v1521
    %v1524 = vsub.f32 1.0, %v1522
    %v1525 = vmax.f32 %v1523, 0.0
    %v1526 = vmax.f32 %v1524, 0.0
    %v1527 = vmul.f32 %v1242, %v1525
    %v1528 = vmul.f32 %v1243, %v1526
    %v1529 = vadd.f32 %v1509, %v1527
    %v1530 = vadd.f32 %v1510, %v1528
    %v1531 = vsub.f32 %v1251, %v1271
    %v1532 = vsub.f32 %v1252, %v1272
    %v1533 = vmul.f32 %v1531, 1.442695
    %v1534 = vpow.pop %v1533
    %v1535 = vmul.f32 %v1532, 1.442695
    %v1536 = vpow.pop %v1535
    %v1537 = vadd.f32 %v1517, %v1534
    %v1538 = vadd.f32 %v1518, %v1536
    %v1539 = vsub.f32 %v1132, 13.0
    %v1540 = vsub.f32 %v1133, 13.0
    %v1541 = vand.u32 2147483647, %v1539
    %v1542 = vand.u32 2147483647, %v1540
    %v1543 = vsub.f32 1.0, %v1541
    %v1544 = vsub.f32 1.0, %v1542
    %v1545 = vmax.f32 %v1543, 0.0
    %v1546 = vmax.f32 %v1544, 0.0
    %v1547 = vmul.f32 %v1251, %v1545
    %v1548 = vmul.f32 %v1252, %v1546
    %v1549 = vadd.f32 %v1529, %v1547
    %v1550 = vadd.f32 %v1530, %v1548
    %v1551 = vsub.f32 %v1260, %v1271
    %v1552 = vsub.f32 %v1261, %v1272
    %v1553 = vmul.f32 %v1551, 1.442695
    %v1554 = vpow.pop %v1553
    %v1555 = vmul.f32 %v1552, 1.442695
    %v1556 = vpow.pop %v1555
    %v1557 = vadd.f32 %v1537, %v1554
    %v1558 = vadd.f32 %v1538, %v1556
    %v1559 = vsub.f32 %v1132, 14.0
    %v1560 = vsub.f32 %v1133, 14.0
    %v1561 = vand.u32 2147483647, %v1559
    %v1562 = vand.u32 2147483647, %v1560
    %v1563 = vsub.f32 1.0, %v1561
    %v1564 = vsub.f32 1.0, %v1562
    %v1565 = vmax.f32 %v1563, 0.0
    %v1566 = vmax.f32 %v1564, 0.0
    %v1567 = vmul.f32 %v1260, %v1565
    %v1568 = vmul.f32 %v1261, %v1566
    %v1569 = vadd.f32 %v1549, %v1567
    %v1570 = vadd.f32 %v1550, %v1568
    %v1571 = vsub.f32 %v1269, %v1271
    %v1572 = vsub.f32 %v1270, %v1272
    %v1573 = vmul.f32 %v1571, 1.442695
    %v1574 = vpow.pop %v1573
    %v1575 = vmul.f32 %v1572, 1.442695
    %v1576 = vpow.pop %v1575
    %v1577 = vadd.f32 %v1557, %v1574
    %v1578 = vadd.f32 %v1558, %v1576
    %v1579 = vsub.f32 %v1132, 15.0
    %v1580 = vsub.f32 %v1133, 15.0
    %v1581 = vand.u32 2147483647, %v1579
    %v1582 = vand.u32 2147483647, %v1580
    %v1583 = vsub.f32 1.0, %v1581
    %v1584 = vsub.f32 1.0, %v1582
    %v1585 = vmax.f32 %v1583, 0.0
    %v1586 = vmax.f32 %v1584, 0.0
    %v1587 = vmul.f32 %v1269, %v1585
    %v1588 = vmul.f32 %v1270, %v1586
    %v1589 = vadd.f32 %v1569, %v1587
    %v1590 = vadd.f32 %v1570, %v1588
    %v1591 = vlog2.pop %v1577
    %v1592 = vmul.f32 %v1591, 0.6931472
    %v1593 = vlog2.pop %v1578
    %v1594 = vmul.f32 %v1593, 0.6931472
    %v1595 = vadd.f32 %v1592, %v1271
    %v1596 = vadd.f32 %v1594, %v1272
    %v1597 = vsub.f32 %v1595, %v1589
    %v1598 = vsub.f32 %v1596, %v1590
    %v1599 = vadd.f32 %v1597, 0.0
    %v1600 = vadd.f32 %v1598, 0.0
    %v1601 = vmax.f32 %v1120, 0.0
    %v1602 = vmax.f32 %v1121, 0.0
    %v1603 = vmin.f32 %v1601, 14.99
    %v1604 = vmin.f32 %v1602, 14.99
    %s1605 = sadd.s32 0, 32
    %s1606 = smul.addr %s1605, 4
    %s1607 = scalar_lea.vmem %s1, %s1606
    %v1608 = vld [vmem:[%s1607] sm:$0xf]
    %v1609 = vld [vmem:[%s1607 + $0x4] sm:$0xf]
    %v1610 = vunpack.c.l.bf16 %v1608
    %v1611 = vunpack.c.l.bf16 %v1609
    %s1612 = sadd.s32 %s1138, 32
    %s1613 = smul.addr %s1612, 4
    %s1614 = scalar_lea.vmem %s1, %s1613
    %v1615 = vld [vmem:[%s1614] sm:$0xf]
    %v1616 = vld [vmem:[%s1614 + $0x4] sm:$0xf]
    %v1617 = vunpack.c.l.bf16 %v1615
    %v1618 = vunpack.c.l.bf16 %v1616
    %v1619 = vmax.f32 %v1610, %v1617
    %v1620 = vmax.f32 %v1611, %v1618
    %s1621 = sadd.s32 %s1147, 32
    %s1622 = smul.addr %s1621, 4
    %s1623 = scalar_lea.vmem %s1, %s1622
    %v1624 = vld [vmem:[%s1623] sm:$0xf]
    %v1625 = vld [vmem:[%s1623 + $0x4] sm:$0xf]
    %v1626 = vunpack.c.l.bf16 %v1624
    %v1627 = vunpack.c.l.bf16 %v1625
    %v1628 = vmax.f32 %v1619, %v1626
    %v1629 = vmax.f32 %v1620, %v1627
    %s1630 = sadd.s32 %s1156, 32
    %s1631 = smul.addr %s1630, 4
    %s1632 = scalar_lea.vmem %s1, %s1631
    %v1633 = vld [vmem:[%s1632] sm:$0xf]
    %v1634 = vld [vmem:[%s1632 + $0x4] sm:$0xf]
    %v1635 = vunpack.c.l.bf16 %v1633
    %v1636 = vunpack.c.l.bf16 %v1634
    %v1637 = vmax.f32 %v1628, %v1635
    %v1638 = vmax.f32 %v1629, %v1636
    %s1639 = sadd.s32 %s1165, 32
    %s1640 = smul.addr %s1639, 4
    %s1641 = scalar_lea.vmem %s1, %s1640
    %v1642 = vld [vmem:[%s1641] sm:$0xf]
    %v1643 = vld [vmem:[%s1641 + $0x4] sm:$0xf]
    %v1644 = vunpack.c.l.bf16 %v1642
    %v1645 = vunpack.c.l.bf16 %v1643
    %v1646 = vmax.f32 %v1637, %v1644
    %v1647 = vmax.f32 %v1638, %v1645
    %s1648 = sadd.s32 %s1174, 32
    %s1649 = smul.addr %s1648, 4
    %s1650 = scalar_lea.vmem %s1, %s1649
    %v1651 = vld [vmem:[%s1650] sm:$0xf]
    %v1652 = vld [vmem:[%s1650 + $0x4] sm:$0xf]
    %v1653 = vunpack.c.l.bf16 %v1651
    %v1654 = vunpack.c.l.bf16 %v1652
    %v1655 = vmax.f32 %v1646, %v1653
    %v1656 = vmax.f32 %v1647, %v1654
    %s1657 = sadd.s32 %s1183, 32
    %s1658 = smul.addr %s1657, 4
    %s1659 = scalar_lea.vmem %s1, %s1658
    %v1660 = vld [vmem:[%s1659] sm:$0xf]
    %v1661 = vld [vmem:[%s1659 + $0x4] sm:$0xf]
    %v1662 = vunpack.c.l.bf16 %v1660
    %v1663 = vunpack.c.l.bf16 %v1661
    %v1664 = vmax.f32 %v1655, %v1662
    %v1665 = vmax.f32 %v1656, %v1663
    %s1666 = sadd.s32 %s1192, 32
    %s1667 = smul.addr %s1666, 4
    %s1668 = scalar_lea.vmem %s1, %s1667
    %v1669 = vld [vmem:[%s1668] sm:$0xf]
    %v1670 = vld [vmem:[%s1668 + $0x4] sm:$0xf]
    %v1671 = vunpack.c.l.bf16 %v1669
    %v1672 = vunpack.c.l.bf16 %v1670
    %v1673 = vmax.f32 %v1664, %v1671
    %v1674 = vmax.f32 %v1665, %v1672
    %s1675 = sadd.s32 %s1201, 32
    %s1676 = smul.addr %s1675, 4
    %s1677 = scalar_lea.vmem %s1, %s1676
    %v1678 = vld [vmem:[%s1677] sm:$0xf]
    %v1679 = vld [vmem:[%s1677 + $0x4] sm:$0xf]
    %v1680 = vunpack.c.l.bf16 %v1678
    %v1681 = vunpack.c.l.bf16 %v1679
    %v1682 = vmax.f32 %v1673, %v1680
    %v1683 = vmax.f32 %v1674, %v1681
    %s1684 = sadd.s32 %s1210, 32
    %s1685 = smul.addr %s1684, 4
    %s1686 = scalar_lea.vmem %s1, %s1685
    %v1687 = vld [vmem:[%s1686] sm:$0xf]
    %v1688 = vld [vmem:[%s1686 + $0x4] sm:$0xf]
    %v1689 = vunpack.c.l.bf16 %v1687
    %v1690 = vunpack.c.l.bf16 %v1688
    %v1691 = vmax.f32 %v1682, %v1689
    %v1692 = vmax.f32 %v1683, %v1690
    %s1693 = sadd.s32 %s1219, 32
    %s1694 = smul.addr %s1693, 4
    %s1695 = scalar_lea.vmem %s1, %s1694
    %v1696 = vld [vmem:[%s1695] sm:$0xf]
    %v1697 = vld [vmem:[%s1695 + $0x4] sm:$0xf]
    %v1698 = vunpack.c.l.bf16 %v1696
    %v1699 = vunpack.c.l.bf16 %v1697
    %v1700 = vmax.f32 %v1691, %v1698
    %v1701 = vmax.f32 %v1692, %v1699
    %s1702 = sadd.s32 %s1228, 32
    %s1703 = smul.addr %s1702, 4
    %s1704 = scalar_lea.vmem %s1, %s1703
    %v1705 = vld [vmem:[%s1704] sm:$0xf]
    %v1706 = vld [vmem:[%s1704 + $0x4] sm:$0xf]
    %v1707 = vunpack.c.l.bf16 %v1705
    %v1708 = vunpack.c.l.bf16 %v1706
    %v1709 = vmax.f32 %v1700, %v1707
    %v1710 = vmax.f32 %v1701, %v1708
    %s1711 = sadd.s32 %s1237, 32
    %s1712 = smul.addr %s1711, 4
    %s1713 = scalar_lea.vmem %s1, %s1712
    %v1714 = vld [vmem:[%s1713] sm:$0xf]
    %v1715 = vld [vmem:[%s1713 + $0x4] sm:$0xf]
    %v1716 = vunpack.c.l.bf16 %v1714
    %v1717 = vunpack.c.l.bf16 %v1715
    %v1718 = vmax.f32 %v1709, %v1716
    %v1719 = vmax.f32 %v1710, %v1717
    %s1720 = sadd.s32 %s1246, 32
    %s1721 = smul.addr %s1720, 4
    %s1722 = scalar_lea.vmem %s1, %s1721
    %v1723 = vld [vmem:[%s1722] sm:$0xf]
    %v1724 = vld [vmem:[%s1722 + $0x4] sm:$0xf]
    %v1725 = vunpack.c.l.bf16 %v1723
    %v1726 = vunpack.c.l.bf16 %v1724
    %v1727 = vmax.f32 %v1718, %v1725
    %v1728 = vmax.f32 %v1719, %v1726
    %s1729 = sadd.s32 %s1255, 32
    %s1730 = smul.addr %s1729, 4
    %s1731 = scalar_lea.vmem %s1, %s1730
    %v1732 = vld [vmem:[%s1731] sm:$0xf]
    %v1733 = vld [vmem:[%s1731 + $0x4] sm:$0xf]
    %v1734 = vunpack.c.l.bf16 %v1732
    %v1735 = vunpack.c.l.bf16 %v1733
    %v1736 = vmax.f32 %v1727, %v1734
    %v1737 = vmax.f32 %v1728, %v1735
    %s1738 = sadd.s32 %s1264, 32
    %s1739 = smul.addr %s1738, 4
    %s1740 = scalar_lea.vmem %s1, %s1739
    %v1741 = vld [vmem:[%s1740] sm:$0xf]
    %v1742 = vld [vmem:[%s1740 + $0x4] sm:$0xf]
    %v1743 = vunpack.c.l.bf16 %v1741
    %v1744 = vunpack.c.l.bf16 %v1742
    %v1745 = vmax.f32 %v1736, %v1743
    %v1746 = vmax.f32 %v1737, %v1744
    %v1747 = vsub.f32 %v1610, %v1745
    %v1748 = vsub.f32 %v1611, %v1746
    %v1749 = vmul.f32 %v1747, 1.442695
    %v1750 = vpow.pop %v1749
    %v1751 = vmul.f32 %v1748, 1.442695
    %v1752 = vpow.pop %v1751
    %v1753 = vadd.f32 %v1750, 0.0
    %v1754 = vadd.f32 %v1752, 0.0
    %v1755 = vand.u32 2147483647, %v1603
    %v1756 = vand.u32 2147483647, %v1604
    %v1757 = vsub.f32 1.0, %v1755
    %v1758 = vsub.f32 1.0, %v1756
    %v1759 = vmax.f32 %v1757, 0.0
    %v1760 = vmax.f32 %v1758, 0.0
    %v1761 = vmul.f32 %v1610, %v1759
    %v1762 = vmul.f32 %v1611, %v1760
    %v1763 = vadd.f32 %v1761, 0.0
    %v1764 = vadd.f32 %v1762, 0.0
    %v1765 = vsub.f32 %v1617, %v1745
    %v1766 = vsub.f32 %v1618, %v1746
    %v1767 = vmul.f32 %v1765, 1.442695
    %v1768 = vpow.pop %v1767
    %v1769 = vmul.f32 %v1766, 1.442695
    %v1770 = vpow.pop %v1769
    %v1771 = vadd.f32 %v1753, %v1768
    %v1772 = vadd.f32 %v1754, %v1770
    %v1773 = vsub.f32 %v1603, 1.0
    %v1774 = vsub.f32 %v1604, 1.0
    %v1775 = vand.u32 2147483647, %v1773
    %v1776 = vand.u32 2147483647, %v1774
    %v1777 = vsub.f32 1.0, %v1775
    %v1778 = vsub.f32 1.0, %v1776
    %v1779 = vmax.f32 %v1777, 0.0
    %v1780 = vmax.f32 %v1778, 0.0
    %v1781 = vmul.f32 %v1617, %v1779
    %v1782 = vmul.f32 %v1618, %v1780
    %v1783 = vadd.f32 %v1763, %v1781
    %v1784 = vadd.f32 %v1764, %v1782
    %v1785 = vsub.f32 %v1626, %v1745
    %v1786 = vsub.f32 %v1627, %v1746
    %v1787 = vmul.f32 %v1785, 1.442695
    %v1788 = vpow.pop %v1787
    %v1789 = vmul.f32 %v1786, 1.442695
    %v1790 = vpow.pop %v1789
    %v1791 = vadd.f32 %v1771, %v1788
    %v1792 = vadd.f32 %v1772, %v1790
    %v1793 = vsub.f32 %v1603, 2.0
    %v1794 = vsub.f32 %v1604, 2.0
    %v1795 = vand.u32 2147483647, %v1793
    %v1796 = vand.u32 2147483647, %v1794
    %v1797 = vsub.f32 1.0, %v1795
    %v1798 = vsub.f32 1.0, %v1796
    %v1799 = vmax.f32 %v1797, 0.0
    %v1800 = vmax.f32 %v1798, 0.0
    %v1801 = vmul.f32 %v1626, %v1799
    %v1802 = vmul.f32 %v1627, %v1800
    %v1803 = vadd.f32 %v1783, %v1801
    %v1804 = vadd.f32 %v1784, %v1802
    %v1805 = vsub.f32 %v1635, %v1745
    %v1806 = vsub.f32 %v1636, %v1746
    %v1807 = vmul.f32 %v1805, 1.442695
    %v1808 = vpow.pop %v1807
    %v1809 = vmul.f32 %v1806, 1.442695
    %v1810 = vpow.pop %v1809
    %v1811 = vadd.f32 %v1791, %v1808
    %v1812 = vadd.f32 %v1792, %v1810
    %v1813 = vsub.f32 %v1603, 3.0
    %v1814 = vsub.f32 %v1604, 3.0
    %v1815 = vand.u32 2147483647, %v1813
    %v1816 = vand.u32 2147483647, %v1814
    %v1817 = vsub.f32 1.0, %v1815
    %v1818 = vsub.f32 1.0, %v1816
    %v1819 = vmax.f32 %v1817, 0.0
    %v1820 = vmax.f32 %v1818, 0.0
    %v1821 = vmul.f32 %v1635, %v1819
    %v1822 = vmul.f32 %v1636, %v1820
    %v1823 = vadd.f32 %v1803, %v1821
    %v1824 = vadd.f32 %v1804, %v1822
    %v1825 = vsub.f32 %v1644, %v1745
    %v1826 = vsub.f32 %v1645, %v1746
    %v1827 = vmul.f32 %v1825, 1.442695
    %v1828 = vpow.pop %v1827
    %v1829 = vmul.f32 %v1826, 1.442695
    %v1830 = vpow.pop %v1829
    %v1831 = vadd.f32 %v1811, %v1828
    %v1832 = vadd.f32 %v1812, %v1830
    %v1833 = vsub.f32 %v1603, 4.0
    %v1834 = vsub.f32 %v1604, 4.0
    %v1835 = vand.u32 2147483647, %v1833
    %v1836 = vand.u32 2147483647, %v1834
    %v1837 = vsub.f32 1.0, %v1835
    %v1838 = vsub.f32 1.0, %v1836
    %v1839 = vmax.f32 %v1837, 0.0
    %v1840 = vmax.f32 %v1838, 0.0
    %v1841 = vmul.f32 %v1644, %v1839
    %v1842 = vmul.f32 %v1645, %v1840
    %v1843 = vadd.f32 %v1823, %v1841
    %v1844 = vadd.f32 %v1824, %v1842
    %v1845 = vsub.f32 %v1653, %v1745
    %v1846 = vsub.f32 %v1654, %v1746
    %v1847 = vmul.f32 %v1845, 1.442695
    %v1848 = vpow.pop %v1847
    %v1849 = vmul.f32 %v1846, 1.442695
    %v1850 = vpow.pop %v1849
    %v1851 = vadd.f32 %v1831, %v1848
    %v1852 = vadd.f32 %v1832, %v1850
    %v1853 = vsub.f32 %v1603, 5.0
    %v1854 = vsub.f32 %v1604, 5.0
    %v1855 = vand.u32 2147483647, %v1853
    %v1856 = vand.u32 2147483647, %v1854
    %v1857 = vsub.f32 1.0, %v1855
    %v1858 = vsub.f32 1.0, %v1856
    %v1859 = vmax.f32 %v1857, 0.0
    %v1860 = vmax.f32 %v1858, 0.0
    %v1861 = vmul.f32 %v1653, %v1859
    %v1862 = vmul.f32 %v1654, %v1860
    %v1863 = vadd.f32 %v1843, %v1861
    %v1864 = vadd.f32 %v1844, %v1862
    %v1865 = vsub.f32 %v1662, %v1745
    %v1866 = vsub.f32 %v1663, %v1746
    %v1867 = vmul.f32 %v1865, 1.442695
    %v1868 = vpow.pop %v1867
    %v1869 = vmul.f32 %v1866, 1.442695
    %v1870 = vpow.pop %v1869
    %v1871 = vadd.f32 %v1851, %v1868
    %v1872 = vadd.f32 %v1852, %v1870
    %v1873 = vsub.f32 %v1603, 6.0
    %v1874 = vsub.f32 %v1604, 6.0
    %v1875 = vand.u32 2147483647, %v1873
    %v1876 = vand.u32 2147483647, %v1874
    %v1877 = vsub.f32 1.0, %v1875
    %v1878 = vsub.f32 1.0, %v1876
    %v1879 = vmax.f32 %v1877, 0.0
    %v1880 = vmax.f32 %v1878, 0.0
    %v1881 = vmul.f32 %v1662, %v1879
    %v1882 = vmul.f32 %v1663, %v1880
    %v1883 = vadd.f32 %v1863, %v1881
    %v1884 = vadd.f32 %v1864, %v1882
    %v1885 = vsub.f32 %v1671, %v1745
    %v1886 = vsub.f32 %v1672, %v1746
    %v1887 = vmul.f32 %v1885, 1.442695
    %v1888 = vpow.pop %v1887
    %v1889 = vmul.f32 %v1886, 1.442695
    %v1890 = vpow.pop %v1889
    %v1891 = vadd.f32 %v1871, %v1888
    %v1892 = vadd.f32 %v1872, %v1890
    %v1893 = vsub.f32 %v1603, 7.0
    %v1894 = vsub.f32 %v1604, 7.0
    %v1895 = vand.u32 2147483647, %v1893
    %v1896 = vand.u32 2147483647, %v1894
    %v1897 = vsub.f32 1.0, %v1895
    %v1898 = vsub.f32 1.0, %v1896
    %v1899 = vmax.f32 %v1897, 0.0
    %v1900 = vmax.f32 %v1898, 0.0
    %v1901 = vmul.f32 %v1671, %v1899
    %v1902 = vmul.f32 %v1672, %v1900
    %v1903 = vadd.f32 %v1883, %v1901
    %v1904 = vadd.f32 %v1884, %v1902
    %v1905 = vsub.f32 %v1680, %v1745
    %v1906 = vsub.f32 %v1681, %v1746
    %v1907 = vmul.f32 %v1905, 1.442695
    %v1908 = vpow.pop %v1907
    %v1909 = vmul.f32 %v1906, 1.442695
    %v1910 = vpow.pop %v1909
    %v1911 = vadd.f32 %v1891, %v1908
    %v1912 = vadd.f32 %v1892, %v1910
    %v1913 = vsub.f32 %v1603, 8.0
    %v1914 = vsub.f32 %v1604, 8.0
    %v1915 = vand.u32 2147483647, %v1913
    %v1916 = vand.u32 2147483647, %v1914
    %v1917 = vsub.f32 1.0, %v1915
    %v1918 = vsub.f32 1.0, %v1916
    %v1919 = vmax.f32 %v1917, 0.0
    %v1920 = vmax.f32 %v1918, 0.0
    %v1921 = vmul.f32 %v1680, %v1919
    %v1922 = vmul.f32 %v1681, %v1920
    %v1923 = vadd.f32 %v1903, %v1921
    %v1924 = vadd.f32 %v1904, %v1922
    %v1925 = vsub.f32 %v1689, %v1745
    %v1926 = vsub.f32 %v1690, %v1746
    %v1927 = vmul.f32 %v1925, 1.442695
    %v1928 = vpow.pop %v1927
    %v1929 = vmul.f32 %v1926, 1.442695
    %v1930 = vpow.pop %v1929
    %v1931 = vadd.f32 %v1911, %v1928
    %v1932 = vadd.f32 %v1912, %v1930
    %v1933 = vsub.f32 %v1603, 9.0
    %v1934 = vsub.f32 %v1604, 9.0
    %v1935 = vand.u32 2147483647, %v1933
    %v1936 = vand.u32 2147483647, %v1934
    %v1937 = vsub.f32 1.0, %v1935
    %v1938 = vsub.f32 1.0, %v1936
    %v1939 = vmax.f32 %v1937, 0.0
    %v1940 = vmax.f32 %v1938, 0.0
    %v1941 = vmul.f32 %v1689, %v1939
    %v1942 = vmul.f32 %v1690, %v1940
    %v1943 = vadd.f32 %v1923, %v1941
    %v1944 = vadd.f32 %v1924, %v1942
    %v1945 = vsub.f32 %v1698, %v1745
    %v1946 = vsub.f32 %v1699, %v1746
    %v1947 = vmul.f32 %v1945, 1.442695
    %v1948 = vpow.pop %v1947
    %v1949 = vmul.f32 %v1946, 1.442695
    %v1950 = vpow.pop %v1949
    %v1951 = vadd.f32 %v1931, %v1948
    %v1952 = vadd.f32 %v1932, %v1950
    %v1953 = vsub.f32 %v1603, 10.0
    %v1954 = vsub.f32 %v1604, 10.0
    %v1955 = vand.u32 2147483647, %v1953
    %v1956 = vand.u32 2147483647, %v1954
    %v1957 = vsub.f32 1.0, %v1955
    %v1958 = vsub.f32 1.0, %v1956
    %v1959 = vmax.f32 %v1957, 0.0
    %v1960 = vmax.f32 %v1958, 0.0
    %v1961 = vmul.f32 %v1698, %v1959
    %v1962 = vmul.f32 %v1699, %v1960
    %v1963 = vadd.f32 %v1943, %v1961
    %v1964 = vadd.f32 %v1944, %v1962
    %v1965 = vsub.f32 %v1707, %v1745
    %v1966 = vsub.f32 %v1708, %v1746
    %v1967 = vmul.f32 %v1965, 1.442695
    %v1968 = vpow.pop %v1967
    %v1969 = vmul.f32 %v1966, 1.442695
    %v1970 = vpow.pop %v1969
    %v1971 = vadd.f32 %v1951, %v1968
    %v1972 = vadd.f32 %v1952, %v1970
    %v1973 = vsub.f32 %v1603, 11.0
    %v1974 = vsub.f32 %v1604, 11.0
    %v1975 = vand.u32 2147483647, %v1973
    %v1976 = vand.u32 2147483647, %v1974
    %v1977 = vsub.f32 1.0, %v1975
    %v1978 = vsub.f32 1.0, %v1976
    %v1979 = vmax.f32 %v1977, 0.0
    %v1980 = vmax.f32 %v1978, 0.0
    %v1981 = vmul.f32 %v1707, %v1979
    %v1982 = vmul.f32 %v1708, %v1980
    %v1983 = vadd.f32 %v1963, %v1981
    %v1984 = vadd.f32 %v1964, %v1982
    %v1985 = vsub.f32 %v1716, %v1745
    %v1986 = vsub.f32 %v1717, %v1746
    %v1987 = vmul.f32 %v1985, 1.442695
    %v1988 = vpow.pop %v1987
    %v1989 = vmul.f32 %v1986, 1.442695
    %v1990 = vpow.pop %v1989
    %v1991 = vadd.f32 %v1971, %v1988
    %v1992 = vadd.f32 %v1972, %v1990
    %v1993 = vsub.f32 %v1603, 12.0
    %v1994 = vsub.f32 %v1604, 12.0
    %v1995 = vand.u32 2147483647, %v1993
    %v1996 = vand.u32 2147483647, %v1994
    %v1997 = vsub.f32 1.0, %v1995
    %v1998 = vsub.f32 1.0, %v1996
    %v1999 = vmax.f32 %v1997, 0.0
    %v2000 = vmax.f32 %v1998, 0.0
    %v2001 = vmul.f32 %v1716, %v1999
    %v2002 = vmul.f32 %v1717, %v2000
    %v2003 = vadd.f32 %v1983, %v2001
    %v2004 = vadd.f32 %v1984, %v2002
    %v2005 = vsub.f32 %v1725, %v1745
    %v2006 = vsub.f32 %v1726, %v1746
    %v2007 = vmul.f32 %v2005, 1.442695
    %v2008 = vpow.pop %v2007
    %v2009 = vmul.f32 %v2006, 1.442695
    %v2010 = vpow.pop %v2009
    %v2011 = vadd.f32 %v1991, %v2008
    %v2012 = vadd.f32 %v1992, %v2010
    %v2013 = vsub.f32 %v1603, 13.0
    %v2014 = vsub.f32 %v1604, 13.0
    %v2015 = vand.u32 2147483647, %v2013
    %v2016 = vand.u32 2147483647, %v2014
    %v2017 = vsub.f32 1.0, %v2015
    %v2018 = vsub.f32 1.0, %v2016
    %v2019 = vmax.f32 %v2017, 0.0
    %v2020 = vmax.f32 %v2018, 0.0
    %v2021 = vmul.f32 %v1725, %v2019
    %v2022 = vmul.f32 %v1726, %v2020
    %v2023 = vadd.f32 %v2003, %v2021
    %v2024 = vadd.f32 %v2004, %v2022
    %v2025 = vsub.f32 %v1734, %v1745
    %v2026 = vsub.f32 %v1735, %v1746
    %v2027 = vmul.f32 %v2025, 1.442695
    %v2028 = vpow.pop %v2027
    %v2029 = vmul.f32 %v2026, 1.442695
    %v2030 = vpow.pop %v2029
    %v2031 = vadd.f32 %v2011, %v2028
    %v2032 = vadd.f32 %v2012, %v2030
    %v2033 = vsub.f32 %v1603, 14.0
    %v2034 = vsub.f32 %v1604, 14.0
    %v2035 = vand.u32 2147483647, %v2033
    %v2036 = vand.u32 2147483647, %v2034
    %v2037 = vsub.f32 1.0, %v2035
    %v2038 = vsub.f32 1.0, %v2036
    %v2039 = vmax.f32 %v2037, 0.0
    %v2040 = vmax.f32 %v2038, 0.0
    %v2041 = vmul.f32 %v1734, %v2039
    %v2042 = vmul.f32 %v1735, %v2040
    %v2043 = vadd.f32 %v2023, %v2041
    %v2044 = vadd.f32 %v2024, %v2042
    %v2045 = vsub.f32 %v1743, %v1745
    %v2046 = vsub.f32 %v1744, %v1746
    %v2047 = vmul.f32 %v2045, 1.442695
    %v2048 = vpow.pop %v2047
    %v2049 = vmul.f32 %v2046, 1.442695
    %v2050 = vpow.pop %v2049
    %v2051 = vadd.f32 %v2031, %v2048
    %v2052 = vadd.f32 %v2032, %v2050
    %v2053 = vsub.f32 %v1603, 15.0
    %v2054 = vsub.f32 %v1604, 15.0
    %v2055 = vand.u32 2147483647, %v2053
    %v2056 = vand.u32 2147483647, %v2054
    %v2057 = vsub.f32 1.0, %v2055
    %v2058 = vsub.f32 1.0, %v2056
    %v2059 = vmax.f32 %v2057, 0.0
    %v2060 = vmax.f32 %v2058, 0.0
    %v2061 = vmul.f32 %v1743, %v2059
    %v2062 = vmul.f32 %v1744, %v2060
    %v2063 = vadd.f32 %v2043, %v2061
    %v2064 = vadd.f32 %v2044, %v2062
    %v2065 = vlog2.pop %v2051
    %v2066 = vmul.f32 %v2065, 0.6931472
    %v2067 = vlog2.pop %v2052
    %v2068 = vmul.f32 %v2067, 0.6931472
    %v2069 = vadd.f32 %v2066, %v1745
    %v2070 = vadd.f32 %v2068, %v1746
    %v2071 = vsub.f32 %v2069, %v2063
    %v2072 = vsub.f32 %v2070, %v2064
    %v2073 = vadd.f32 %v1599, %v2071
    %v2074 = vadd.f32 %v1600, %v2072
    %v2075 = vmax.f32 %v1124, 0.0
    %v2076 = vmax.f32 %v1125, 0.0
    %v2077 = vmin.f32 %v2075, 14.99
    %v2078 = vmin.f32 %v2076, 14.99
    %s2079 = sadd.s32 0, 64
    %s2080 = smul.addr %s2079, 4
    %s2081 = scalar_lea.vmem %s1, %s2080
    %v2082 = vld [vmem:[%s2081] sm:$0xf]
    %v2083 = vld [vmem:[%s2081 + $0x4] sm:$0xf]
    %v2084 = vunpack.c.l.bf16 %v2082
    %v2085 = vunpack.c.l.bf16 %v2083
    %s2086 = sadd.s32 %s1138, 64
    %s2087 = smul.addr %s2086, 4
    %s2088 = scalar_lea.vmem %s1, %s2087
    %v2089 = vld [vmem:[%s2088] sm:$0xf]
    %v2090 = vld [vmem:[%s2088 + $0x4] sm:$0xf]
    %v2091 = vunpack.c.l.bf16 %v2089
    %v2092 = vunpack.c.l.bf16 %v2090
    %v2093 = vmax.f32 %v2084, %v2091
    %v2094 = vmax.f32 %v2085, %v2092
    %s2095 = sadd.s32 %s1147, 64
    %s2096 = smul.addr %s2095, 4
    %s2097 = scalar_lea.vmem %s1, %s2096
    %v2098 = vld [vmem:[%s2097] sm:$0xf]
    %v2099 = vld [vmem:[%s2097 + $0x4] sm:$0xf]
    %v2100 = vunpack.c.l.bf16 %v2098
    %v2101 = vunpack.c.l.bf16 %v2099
    %v2102 = vmax.f32 %v2093, %v2100
    %v2103 = vmax.f32 %v2094, %v2101
    %s2104 = sadd.s32 %s1156, 64
    %s2105 = smul.addr %s2104, 4
    %s2106 = scalar_lea.vmem %s1, %s2105
    %v2107 = vld [vmem:[%s2106] sm:$0xf]
    %v2108 = vld [vmem:[%s2106 + $0x4] sm:$0xf]
    %v2109 = vunpack.c.l.bf16 %v2107
    %v2110 = vunpack.c.l.bf16 %v2108
    %v2111 = vmax.f32 %v2102, %v2109
    %v2112 = vmax.f32 %v2103, %v2110
    %s2113 = sadd.s32 %s1165, 64
    %s2114 = smul.addr %s2113, 4
    %s2115 = scalar_lea.vmem %s1, %s2114
    %v2116 = vld [vmem:[%s2115] sm:$0xf]
    %v2117 = vld [vmem:[%s2115 + $0x4] sm:$0xf]
    %v2118 = vunpack.c.l.bf16 %v2116
    %v2119 = vunpack.c.l.bf16 %v2117
    %v2120 = vmax.f32 %v2111, %v2118
    %v2121 = vmax.f32 %v2112, %v2119
    %s2122 = sadd.s32 %s1174, 64
    %s2123 = smul.addr %s2122, 4
    %s2124 = scalar_lea.vmem %s1, %s2123
    %v2125 = vld [vmem:[%s2124] sm:$0xf]
    %v2126 = vld [vmem:[%s2124 + $0x4] sm:$0xf]
    %v2127 = vunpack.c.l.bf16 %v2125
    %v2128 = vunpack.c.l.bf16 %v2126
    %v2129 = vmax.f32 %v2120, %v2127
    %v2130 = vmax.f32 %v2121, %v2128
    %s2131 = sadd.s32 %s1183, 64
    %s2132 = smul.addr %s2131, 4
    %s2133 = scalar_lea.vmem %s1, %s2132
    %v2134 = vld [vmem:[%s2133] sm:$0xf]
    %v2135 = vld [vmem:[%s2133 + $0x4] sm:$0xf]
    %v2136 = vunpack.c.l.bf16 %v2134
    %v2137 = vunpack.c.l.bf16 %v2135
    %v2138 = vmax.f32 %v2129, %v2136
    %v2139 = vmax.f32 %v2130, %v2137
    %s2140 = sadd.s32 %s1192, 64
    %s2141 = smul.addr %s2140, 4
    %s2142 = scalar_lea.vmem %s1, %s2141
    %v2143 = vld [vmem:[%s2142] sm:$0xf]
    %v2144 = vld [vmem:[%s2142 + $0x4] sm:$0xf]
    %v2145 = vunpack.c.l.bf16 %v2143
    %v2146 = vunpack.c.l.bf16 %v2144
    %v2147 = vmax.f32 %v2138, %v2145
    %v2148 = vmax.f32 %v2139, %v2146
    %s2149 = sadd.s32 %s1201, 64
    %s2150 = smul.addr %s2149, 4
    %s2151 = scalar_lea.vmem %s1, %s2150
    %v2152 = vld [vmem:[%s2151] sm:$0xf]
    %v2153 = vld [vmem:[%s2151 + $0x4] sm:$0xf]
    %v2154 = vunpack.c.l.bf16 %v2152
    %v2155 = vunpack.c.l.bf16 %v2153
    %v2156 = vmax.f32 %v2147, %v2154
    %v2157 = vmax.f32 %v2148, %v2155
    %s2158 = sadd.s32 %s1210, 64
    %s2159 = smul.addr %s2158, 4
    %s2160 = scalar_lea.vmem %s1, %s2159
    %v2161 = vld [vmem:[%s2160] sm:$0xf]
    %v2162 = vld [vmem:[%s2160 + $0x4] sm:$0xf]
    %v2163 = vunpack.c.l.bf16 %v2161
    %v2164 = vunpack.c.l.bf16 %v2162
    %v2165 = vmax.f32 %v2156, %v2163
    %v2166 = vmax.f32 %v2157, %v2164
    %s2167 = sadd.s32 %s1219, 64
    %s2168 = smul.addr %s2167, 4
    %s2169 = scalar_lea.vmem %s1, %s2168
    %v2170 = vld [vmem:[%s2169] sm:$0xf]
    %v2171 = vld [vmem:[%s2169 + $0x4] sm:$0xf]
    %v2172 = vunpack.c.l.bf16 %v2170
    %v2173 = vunpack.c.l.bf16 %v2171
    %v2174 = vmax.f32 %v2165, %v2172
    %v2175 = vmax.f32 %v2166, %v2173
    %s2176 = sadd.s32 %s1228, 64
    %s2177 = smul.addr %s2176, 4
    %s2178 = scalar_lea.vmem %s1, %s2177
    %v2179 = vld [vmem:[%s2178] sm:$0xf]
    %v2180 = vld [vmem:[%s2178 + $0x4] sm:$0xf]
    %v2181 = vunpack.c.l.bf16 %v2179
    %v2182 = vunpack.c.l.bf16 %v2180
    %v2183 = vmax.f32 %v2174, %v2181
    %v2184 = vmax.f32 %v2175, %v2182
    %s2185 = sadd.s32 %s1237, 64
    %s2186 = smul.addr %s2185, 4
    %s2187 = scalar_lea.vmem %s1, %s2186
    %v2188 = vld [vmem:[%s2187] sm:$0xf]
    %v2189 = vld [vmem:[%s2187 + $0x4] sm:$0xf]
    %v2190 = vunpack.c.l.bf16 %v2188
    %v2191 = vunpack.c.l.bf16 %v2189
    %v2192 = vmax.f32 %v2183, %v2190
    %v2193 = vmax.f32 %v2184, %v2191
    %s2194 = sadd.s32 %s1246, 64
    %s2195 = smul.addr %s2194, 4
    %s2196 = scalar_lea.vmem %s1, %s2195
    %v2197 = vld [vmem:[%s2196] sm:$0xf]
    %v2198 = vld [vmem:[%s2196 + $0x4] sm:$0xf]
    %v2199 = vunpack.c.l.bf16 %v2197
    %v2200 = vunpack.c.l.bf16 %v2198
    %v2201 = vmax.f32 %v2192, %v2199
    %v2202 = vmax.f32 %v2193, %v2200
    %s2203 = sadd.s32 %s1255, 64
    %s2204 = smul.addr %s2203, 4
    %s2205 = scalar_lea.vmem %s1, %s2204
    %v2206 = vld [vmem:[%s2205] sm:$0xf]
    %v2207 = vld [vmem:[%s2205 + $0x4] sm:$0xf]
    %v2208 = vunpack.c.l.bf16 %v2206
    %v2209 = vunpack.c.l.bf16 %v2207
    %v2210 = vmax.f32 %v2201, %v2208
    %v2211 = vmax.f32 %v2202, %v2209
    %s2212 = sadd.s32 %s1264, 64
    %s2213 = smul.addr %s2212, 4
    %s2214 = scalar_lea.vmem %s1, %s2213
    %v2215 = vld [vmem:[%s2214] sm:$0xf]
    %v2216 = vld [vmem:[%s2214 + $0x4] sm:$0xf]
    %v2217 = vunpack.c.l.bf16 %v2215
    %v2218 = vunpack.c.l.bf16 %v2216
    %v2219 = vmax.f32 %v2210, %v2217
    %v2220 = vmax.f32 %v2211, %v2218
    %v2221 = vsub.f32 %v2084, %v2219
    %v2222 = vsub.f32 %v2085, %v2220
    %v2223 = vmul.f32 %v2221, 1.442695
    %v2224 = vpow.pop %v2223
    %v2225 = vmul.f32 %v2222, 1.442695
    %v2226 = vpow.pop %v2225
    %v2227 = vadd.f32 %v2224, 0.0
    %v2228 = vadd.f32 %v2226, 0.0
    %v2229 = vand.u32 2147483647, %v2077
    %v2230 = vand.u32 2147483647, %v2078
    %v2231 = vsub.f32 1.0, %v2229
    %v2232 = vsub.f32 1.0, %v2230
    %v2233 = vmax.f32 %v2231, 0.0
    %v2234 = vmax.f32 %v2232, 0.0
    %v2235 = vmul.f32 %v2084, %v2233
    %v2236 = vmul.f32 %v2085, %v2234
    %v2237 = vadd.f32 %v2235, 0.0
    %v2238 = vadd.f32 %v2236, 0.0
    %v2239 = vsub.f32 %v2091, %v2219
    %v2240 = vsub.f32 %v2092, %v2220
    %v2241 = vmul.f32 %v2239, 1.442695
    %v2242 = vpow.pop %v2241
    %v2243 = vmul.f32 %v2240, 1.442695
    %v2244 = vpow.pop %v2243
    %v2245 = vadd.f32 %v2227, %v2242
    %v2246 = vadd.f32 %v2228, %v2244
    %v2247 = vsub.f32 %v2077, 1.0
    %v2248 = vsub.f32 %v2078, 1.0
    %v2249 = vand.u32 2147483647, %v2247
    %v2250 = vand.u32 2147483647, %v2248
    %v2251 = vsub.f32 1.0, %v2249
    %v2252 = vsub.f32 1.0, %v2250
    %v2253 = vmax.f32 %v2251, 0.0
    %v2254 = vmax.f32 %v2252, 0.0
    %v2255 = vmul.f32 %v2091, %v2253
    %v2256 = vmul.f32 %v2092, %v2254
    %v2257 = vadd.f32 %v2237, %v2255
    %v2258 = vadd.f32 %v2238, %v2256
    %v2259 = vsub.f32 %v2100, %v2219
    %v2260 = vsub.f32 %v2101, %v2220
    %v2261 = vmul.f32 %v2259, 1.442695
    %v2262 = vpow.pop %v2261
    %v2263 = vmul.f32 %v2260, 1.442695
    %v2264 = vpow.pop %v2263
    %v2265 = vadd.f32 %v2245, %v2262
    %v2266 = vadd.f32 %v2246, %v2264
    %v2267 = vsub.f32 %v2077, 2.0
    %v2268 = vsub.f32 %v2078, 2.0
    %v2269 = vand.u32 2147483647, %v2267
    %v2270 = vand.u32 2147483647, %v2268
    %v2271 = vsub.f32 1.0, %v2269
    %v2272 = vsub.f32 1.0, %v2270
    %v2273 = vmax.f32 %v2271, 0.0
    %v2274 = vmax.f32 %v2272, 0.0
    %v2275 = vmul.f32 %v2100, %v2273
    %v2276 = vmul.f32 %v2101, %v2274
    %v2277 = vadd.f32 %v2257, %v2275
    %v2278 = vadd.f32 %v2258, %v2276
    %v2279 = vsub.f32 %v2109, %v2219
    %v2280 = vsub.f32 %v2110, %v2220
    %v2281 = vmul.f32 %v2279, 1.442695
    %v2282 = vpow.pop %v2281
    %v2283 = vmul.f32 %v2280, 1.442695
    %v2284 = vpow.pop %v2283
    %v2285 = vadd.f32 %v2265, %v2282
    %v2286 = vadd.f32 %v2266, %v2284
    %v2287 = vsub.f32 %v2077, 3.0
    %v2288 = vsub.f32 %v2078, 3.0
    %v2289 = vand.u32 2147483647, %v2287
    %v2290 = vand.u32 2147483647, %v2288
    %v2291 = vsub.f32 1.0, %v2289
    %v2292 = vsub.f32 1.0, %v2290
    %v2293 = vmax.f32 %v2291, 0.0
    %v2294 = vmax.f32 %v2292, 0.0
    %v2295 = vmul.f32 %v2109, %v2293
    %v2296 = vmul.f32 %v2110, %v2294
    %v2297 = vadd.f32 %v2277, %v2295
    %v2298 = vadd.f32 %v2278, %v2296
    %v2299 = vsub.f32 %v2118, %v2219
    %v2300 = vsub.f32 %v2119, %v2220
    %v2301 = vmul.f32 %v2299, 1.442695
    %v2302 = vpow.pop %v2301
    %v2303 = vmul.f32 %v2300, 1.442695
    %v2304 = vpow.pop %v2303
    %v2305 = vadd.f32 %v2285, %v2302
    %v2306 = vadd.f32 %v2286, %v2304
    %v2307 = vsub.f32 %v2077, 4.0
    %v2308 = vsub.f32 %v2078, 4.0
    %v2309 = vand.u32 2147483647, %v2307
    %v2310 = vand.u32 2147483647, %v2308
    %v2311 = vsub.f32 1.0, %v2309
    %v2312 = vsub.f32 1.0, %v2310
    %v2313 = vmax.f32 %v2311, 0.0
    %v2314 = vmax.f32 %v2312, 0.0
    %v2315 = vmul.f32 %v2118, %v2313
    %v2316 = vmul.f32 %v2119, %v2314
    %v2317 = vadd.f32 %v2297, %v2315
    %v2318 = vadd.f32 %v2298, %v2316
    %v2319 = vsub.f32 %v2127, %v2219
    %v2320 = vsub.f32 %v2128, %v2220
    %v2321 = vmul.f32 %v2319, 1.442695
    %v2322 = vpow.pop %v2321
    %v2323 = vmul.f32 %v2320, 1.442695
    %v2324 = vpow.pop %v2323
    %v2325 = vadd.f32 %v2305, %v2322
    %v2326 = vadd.f32 %v2306, %v2324
    %v2327 = vsub.f32 %v2077, 5.0
    %v2328 = vsub.f32 %v2078, 5.0
    %v2329 = vand.u32 2147483647, %v2327
    %v2330 = vand.u32 2147483647, %v2328
    %v2331 = vsub.f32 1.0, %v2329
    %v2332 = vsub.f32 1.0, %v2330
    %v2333 = vmax.f32 %v2331, 0.0
    %v2334 = vmax.f32 %v2332, 0.0
    %v2335 = vmul.f32 %v2127, %v2333
    %v2336 = vmul.f32 %v2128, %v2334
    %v2337 = vadd.f32 %v2317, %v2335
    %v2338 = vadd.f32 %v2318, %v2336
    %v2339 = vsub.f32 %v2136, %v2219
    %v2340 = vsub.f32 %v2137, %v2220
    %v2341 = vmul.f32 %v2339, 1.442695
    %v2342 = vpow.pop %v2341
    %v2343 = vmul.f32 %v2340, 1.442695
    %v2344 = vpow.pop %v2343
    %v2345 = vadd.f32 %v2325, %v2342
    %v2346 = vadd.f32 %v2326, %v2344
    %v2347 = vsub.f32 %v2077, 6.0
    %v2348 = vsub.f32 %v2078, 6.0
    %v2349 = vand.u32 2147483647, %v2347
    %v2350 = vand.u32 2147483647, %v2348
    %v2351 = vsub.f32 1.0, %v2349
    %v2352 = vsub.f32 1.0, %v2350
    %v2353 = vmax.f32 %v2351, 0.0
    %v2354 = vmax.f32 %v2352, 0.0
    %v2355 = vmul.f32 %v2136, %v2353
    %v2356 = vmul.f32 %v2137, %v2354
    %v2357 = vadd.f32 %v2337, %v2355
    %v2358 = vadd.f32 %v2338, %v2356
    %v2359 = vsub.f32 %v2145, %v2219
    %v2360 = vsub.f32 %v2146, %v2220
    %v2361 = vmul.f32 %v2359, 1.442695
    %v2362 = vpow.pop %v2361
    %v2363 = vmul.f32 %v2360, 1.442695
    %v2364 = vpow.pop %v2363
    %v2365 = vadd.f32 %v2345, %v2362
    %v2366 = vadd.f32 %v2346, %v2364
    %v2367 = vsub.f32 %v2077, 7.0
    %v2368 = vsub.f32 %v2078, 7.0
    %v2369 = vand.u32 2147483647, %v2367
    %v2370 = vand.u32 2147483647, %v2368
    %v2371 = vsub.f32 1.0, %v2369
    %v2372 = vsub.f32 1.0, %v2370
    %v2373 = vmax.f32 %v2371, 0.0
    %v2374 = vmax.f32 %v2372, 0.0
    %v2375 = vmul.f32 %v2145, %v2373
    %v2376 = vmul.f32 %v2146, %v2374
    %v2377 = vadd.f32 %v2357, %v2375
    %v2378 = vadd.f32 %v2358, %v2376
    %v2379 = vsub.f32 %v2154, %v2219
    %v2380 = vsub.f32 %v2155, %v2220
    %v2381 = vmul.f32 %v2379, 1.442695
    %v2382 = vpow.pop %v2381
    %v2383 = vmul.f32 %v2380, 1.442695
    %v2384 = vpow.pop %v2383
    %v2385 = vadd.f32 %v2365, %v2382
    %v2386 = vadd.f32 %v2366, %v2384
    %v2387 = vsub.f32 %v2077, 8.0
    %v2388 = vsub.f32 %v2078, 8.0
    %v2389 = vand.u32 2147483647, %v2387
    %v2390 = vand.u32 2147483647, %v2388
    %v2391 = vsub.f32 1.0, %v2389
    %v2392 = vsub.f32 1.0, %v2390
    %v2393 = vmax.f32 %v2391, 0.0
    %v2394 = vmax.f32 %v2392, 0.0
    %v2395 = vmul.f32 %v2154, %v2393
    %v2396 = vmul.f32 %v2155, %v2394
    %v2397 = vadd.f32 %v2377, %v2395
    %v2398 = vadd.f32 %v2378, %v2396
    %v2399 = vsub.f32 %v2163, %v2219
    %v2400 = vsub.f32 %v2164, %v2220
    %v2401 = vmul.f32 %v2399, 1.442695
    %v2402 = vpow.pop %v2401
    %v2403 = vmul.f32 %v2400, 1.442695
    %v2404 = vpow.pop %v2403
    %v2405 = vadd.f32 %v2385, %v2402
    %v2406 = vadd.f32 %v2386, %v2404
    %v2407 = vsub.f32 %v2077, 9.0
    %v2408 = vsub.f32 %v2078, 9.0
    %v2409 = vand.u32 2147483647, %v2407
    %v2410 = vand.u32 2147483647, %v2408
    %v2411 = vsub.f32 1.0, %v2409
    %v2412 = vsub.f32 1.0, %v2410
    %v2413 = vmax.f32 %v2411, 0.0
    %v2414 = vmax.f32 %v2412, 0.0
    %v2415 = vmul.f32 %v2163, %v2413
    %v2416 = vmul.f32 %v2164, %v2414
    %v2417 = vadd.f32 %v2397, %v2415
    %v2418 = vadd.f32 %v2398, %v2416
    %v2419 = vsub.f32 %v2172, %v2219
    %v2420 = vsub.f32 %v2173, %v2220
    %v2421 = vmul.f32 %v2419, 1.442695
    %v2422 = vpow.pop %v2421
    %v2423 = vmul.f32 %v2420, 1.442695
    %v2424 = vpow.pop %v2423
    %v2425 = vadd.f32 %v2405, %v2422
    %v2426 = vadd.f32 %v2406, %v2424
    %v2427 = vsub.f32 %v2077, 10.0
    %v2428 = vsub.f32 %v2078, 10.0
    %v2429 = vand.u32 2147483647, %v2427
    %v2430 = vand.u32 2147483647, %v2428
    %v2431 = vsub.f32 1.0, %v2429
    %v2432 = vsub.f32 1.0, %v2430
    %v2433 = vmax.f32 %v2431, 0.0
    %v2434 = vmax.f32 %v2432, 0.0
    %v2435 = vmul.f32 %v2172, %v2433
    %v2436 = vmul.f32 %v2173, %v2434
    %v2437 = vadd.f32 %v2417, %v2435
    %v2438 = vadd.f32 %v2418, %v2436
    %v2439 = vsub.f32 %v2181, %v2219
    %v2440 = vsub.f32 %v2182, %v2220
    %v2441 = vmul.f32 %v2439, 1.442695
    %v2442 = vpow.pop %v2441
    %v2443 = vmul.f32 %v2440, 1.442695
    %v2444 = vpow.pop %v2443
    %v2445 = vadd.f32 %v2425, %v2442
    %v2446 = vadd.f32 %v2426, %v2444
    %v2447 = vsub.f32 %v2077, 11.0
    %v2448 = vsub.f32 %v2078, 11.0
    %v2449 = vand.u32 2147483647, %v2447
    %v2450 = vand.u32 2147483647, %v2448
    %v2451 = vsub.f32 1.0, %v2449
    %v2452 = vsub.f32 1.0, %v2450
    %v2453 = vmax.f32 %v2451, 0.0
    %v2454 = vmax.f32 %v2452, 0.0
    %v2455 = vmul.f32 %v2181, %v2453
    %v2456 = vmul.f32 %v2182, %v2454
    %v2457 = vadd.f32 %v2437, %v2455
    %v2458 = vadd.f32 %v2438, %v2456
    %v2459 = vsub.f32 %v2190, %v2219
    %v2460 = vsub.f32 %v2191, %v2220
    %v2461 = vmul.f32 %v2459, 1.442695
    %v2462 = vpow.pop %v2461
    %v2463 = vmul.f32 %v2460, 1.442695
    %v2464 = vpow.pop %v2463
    %v2465 = vadd.f32 %v2445, %v2462
    %v2466 = vadd.f32 %v2446, %v2464
    %v2467 = vsub.f32 %v2077, 12.0
    %v2468 = vsub.f32 %v2078, 12.0
    %v2469 = vand.u32 2147483647, %v2467
    %v2470 = vand.u32 2147483647, %v2468
    %v2471 = vsub.f32 1.0, %v2469
    %v2472 = vsub.f32 1.0, %v2470
    %v2473 = vmax.f32 %v2471, 0.0
    %v2474 = vmax.f32 %v2472, 0.0
    %v2475 = vmul.f32 %v2190, %v2473
    %v2476 = vmul.f32 %v2191, %v2474
    %v2477 = vadd.f32 %v2457, %v2475
    %v2478 = vadd.f32 %v2458, %v2476
    %v2479 = vsub.f32 %v2199, %v2219
    %v2480 = vsub.f32 %v2200, %v2220
    %v2481 = vmul.f32 %v2479, 1.442695
    %v2482 = vpow.pop %v2481
    %v2483 = vmul.f32 %v2480, 1.442695
    %v2484 = vpow.pop %v2483
    %v2485 = vadd.f32 %v2465, %v2482
    %v2486 = vadd.f32 %v2466, %v2484
    %v2487 = vsub.f32 %v2077, 13.0
    %v2488 = vsub.f32 %v2078, 13.0
    %v2489 = vand.u32 2147483647, %v2487
    %v2490 = vand.u32 2147483647, %v2488
    %v2491 = vsub.f32 1.0, %v2489
    %v2492 = vsub.f32 1.0, %v2490
    %v2493 = vmax.f32 %v2491, 0.0
    %v2494 = vmax.f32 %v2492, 0.0
    %v2495 = vmul.f32 %v2199, %v2493
    %v2496 = vmul.f32 %v2200, %v2494
    %v2497 = vadd.f32 %v2477, %v2495
    %v2498 = vadd.f32 %v2478, %v2496
    %v2499 = vsub.f32 %v2208, %v2219
    %v2500 = vsub.f32 %v2209, %v2220
    %v2501 = vmul.f32 %v2499, 1.442695
    %v2502 = vpow.pop %v2501
    %v2503 = vmul.f32 %v2500, 1.442695
    %v2504 = vpow.pop %v2503
    %v2505 = vadd.f32 %v2485, %v2502
    %v2506 = vadd.f32 %v2486, %v2504
    %v2507 = vsub.f32 %v2077, 14.0
    %v2508 = vsub.f32 %v2078, 14.0
    %v2509 = vand.u32 2147483647, %v2507
    %v2510 = vand.u32 2147483647, %v2508
    %v2511 = vsub.f32 1.0, %v2509
    %v2512 = vsub.f32 1.0, %v2510
    %v2513 = vmax.f32 %v2511, 0.0
    %v2514 = vmax.f32 %v2512, 0.0
    %v2515 = vmul.f32 %v2208, %v2513
    %v2516 = vmul.f32 %v2209, %v2514
    %v2517 = vadd.f32 %v2497, %v2515
    %v2518 = vadd.f32 %v2498, %v2516
    %v2519 = vsub.f32 %v2217, %v2219
    %v2520 = vsub.f32 %v2218, %v2220
    %v2521 = vmul.f32 %v2519, 1.442695
    %v2522 = vpow.pop %v2521
    %v2523 = vmul.f32 %v2520, 1.442695
    %v2524 = vpow.pop %v2523
    %v2525 = vadd.f32 %v2505, %v2522
    %v2526 = vadd.f32 %v2506, %v2524
    %v2527 = vsub.f32 %v2077, 15.0
    %v2528 = vsub.f32 %v2078, 15.0
    %v2529 = vand.u32 2147483647, %v2527
    %v2530 = vand.u32 2147483647, %v2528
    %v2531 = vsub.f32 1.0, %v2529
    %v2532 = vsub.f32 1.0, %v2530
    %v2533 = vmax.f32 %v2531, 0.0
    %v2534 = vmax.f32 %v2532, 0.0
    %v2535 = vmul.f32 %v2217, %v2533
    %v2536 = vmul.f32 %v2218, %v2534
    %v2537 = vadd.f32 %v2517, %v2535
    %v2538 = vadd.f32 %v2518, %v2536
    %v2539 = vlog2.pop %v2525
    %v2540 = vmul.f32 %v2539, 0.6931472
    %v2541 = vlog2.pop %v2526
    %v2542 = vmul.f32 %v2541, 0.6931472
    %v2543 = vadd.f32 %v2540, %v2219
    %v2544 = vadd.f32 %v2542, %v2220
    %v2545 = vsub.f32 %v2543, %v2537
    %v2546 = vsub.f32 %v2544, %v2538
    %v2547 = vadd.f32 %v2073, %v2545
    %v2548 = vadd.f32 %v2074, %v2546
    %v2549 = vmax.f32 %v1128, 0.0
    %v2550 = vmax.f32 %v1129, 0.0
    %v2551 = vmin.f32 %v2549, 14.99
    %v2552 = vmin.f32 %v2550, 14.99
    %s2553 = sadd.s32 0, 96
    %s2554 = smul.addr %s2553, 4
    %s2555 = scalar_lea.vmem %s1, %s2554
    %v2556 = vld [vmem:[%s2555] sm:$0xf]
    %v2557 = vld [vmem:[%s2555 + $0x4] sm:$0xf]
    %v2558 = vunpack.c.l.bf16 %v2556
    %v2559 = vunpack.c.l.bf16 %v2557
    %s2560 = sadd.s32 %s1138, 96
    %s2561 = smul.addr %s2560, 4
    %s2562 = scalar_lea.vmem %s1, %s2561
    %v2563 = vld [vmem:[%s2562] sm:$0xf]
    %v2564 = vld [vmem:[%s2562 + $0x4] sm:$0xf]
    %v2565 = vunpack.c.l.bf16 %v2563
    %v2566 = vunpack.c.l.bf16 %v2564
    %v2567 = vmax.f32 %v2558, %v2565
    %v2568 = vmax.f32 %v2559, %v2566
    %s2569 = sadd.s32 %s1147, 96
    %s2570 = smul.addr %s2569, 4
    %s2571 = scalar_lea.vmem %s1, %s2570
    %v2572 = vld [vmem:[%s2571] sm:$0xf]
    %v2573 = vld [vmem:[%s2571 + $0x4] sm:$0xf]
    %v2574 = vunpack.c.l.bf16 %v2572
    %v2575 = vunpack.c.l.bf16 %v2573
    %v2576 = vmax.f32 %v2567, %v2574
    %v2577 = vmax.f32 %v2568, %v2575
    %s2578 = sadd.s32 %s1156, 96
    %s2579 = smul.addr %s2578, 4
    %s2580 = scalar_lea.vmem %s1, %s2579
    %v2581 = vld [vmem:[%s2580] sm:$0xf]
    %v2582 = vld [vmem:[%s2580 + $0x4] sm:$0xf]
    %v2583 = vunpack.c.l.bf16 %v2581
    %v2584 = vunpack.c.l.bf16 %v2582
    %v2585 = vmax.f32 %v2576, %v2583
    %v2586 = vmax.f32 %v2577, %v2584
    %s2587 = sadd.s32 %s1165, 96
    %s2588 = smul.addr %s2587, 4
    %s2589 = scalar_lea.vmem %s1, %s2588
    %v2590 = vld [vmem:[%s2589] sm:$0xf]
    %v2591 = vld [vmem:[%s2589 + $0x4] sm:$0xf]
    %v2592 = vunpack.c.l.bf16 %v2590
    %v2593 = vunpack.c.l.bf16 %v2591
    %v2594 = vmax.f32 %v2585, %v2592
    %v2595 = vmax.f32 %v2586, %v2593
    %s2596 = sadd.s32 %s1174, 96
    %s2597 = smul.addr %s2596, 4
    %s2598 = scalar_lea.vmem %s1, %s2597
    %v2599 = vld [vmem:[%s2598] sm:$0xf]
    %v2600 = vld [vmem:[%s2598 + $0x4] sm:$0xf]
    %v2601 = vunpack.c.l.bf16 %v2599
    %v2602 = vunpack.c.l.bf16 %v2600
    %v2603 = vmax.f32 %v2594, %v2601
    %v2604 = vmax.f32 %v2595, %v2602
    %s2605 = sadd.s32 %s1183, 96
    %s2606 = smul.addr %s2605, 4
    %s2607 = scalar_lea.vmem %s1, %s2606
    %v2608 = vld [vmem:[%s2607] sm:$0xf]
    %v2609 = vld [vmem:[%s2607 + $0x4] sm:$0xf]
    %v2610 = vunpack.c.l.bf16 %v2608
    %v2611 = vunpack.c.l.bf16 %v2609
    %v2612 = vmax.f32 %v2603, %v2610
    %v2613 = vmax.f32 %v2604, %v2611
    %s2614 = sadd.s32 %s1192, 96
    %s2615 = smul.addr %s2614, 4
    %s2616 = scalar_lea.vmem %s1, %s2615
    %v2617 = vld [vmem:[%s2616] sm:$0xf]
    %v2618 = vld [vmem:[%s2616 + $0x4] sm:$0xf]
    %v2619 = vunpack.c.l.bf16 %v2617
    %v2620 = vunpack.c.l.bf16 %v2618
    %v2621 = vmax.f32 %v2612, %v2619
    %v2622 = vmax.f32 %v2613, %v2620
    %s2623 = sadd.s32 %s1201, 96
    %s2624 = smul.addr %s2623, 4
    %s2625 = scalar_lea.vmem %s1, %s2624
    %v2626 = vld [vmem:[%s2625] sm:$0xf]
    %v2627 = vld [vmem:[%s2625 + $0x4] sm:$0xf]
    %v2628 = vunpack.c.l.bf16 %v2626
    %v2629 = vunpack.c.l.bf16 %v2627
    %v2630 = vmax.f32 %v2621, %v2628
    %v2631 = vmax.f32 %v2622, %v2629
    %s2632 = sadd.s32 %s1210, 96
    %s2633 = smul.addr %s2632, 4
    %s2634 = scalar_lea.vmem %s1, %s2633
    %v2635 = vld [vmem:[%s2634] sm:$0xf]
    %v2636 = vld [vmem:[%s2634 + $0x4] sm:$0xf]
    %v2637 = vunpack.c.l.bf16 %v2635
    %v2638 = vunpack.c.l.bf16 %v2636
    %v2639 = vmax.f32 %v2630, %v2637
    %v2640 = vmax.f32 %v2631, %v2638
    %s2641 = sadd.s32 %s1219, 96
    %s2642 = smul.addr %s2641, 4
    %s2643 = scalar_lea.vmem %s1, %s2642
    %v2644 = vld [vmem:[%s2643] sm:$0xf]
    %v2645 = vld [vmem:[%s2643 + $0x4] sm:$0xf]
    %v2646 = vunpack.c.l.bf16 %v2644
    %v2647 = vunpack.c.l.bf16 %v2645
    %v2648 = vmax.f32 %v2639, %v2646
    %v2649 = vmax.f32 %v2640, %v2647
    %s2650 = sadd.s32 %s1228, 96
    %s2651 = smul.addr %s2650, 4
    %s2652 = scalar_lea.vmem %s1, %s2651
    %v2653 = vld [vmem:[%s2652] sm:$0xf]
    %v2654 = vld [vmem:[%s2652 + $0x4] sm:$0xf]
    %v2655 = vunpack.c.l.bf16 %v2653
    %v2656 = vunpack.c.l.bf16 %v2654
    %v2657 = vmax.f32 %v2648, %v2655
    %v2658 = vmax.f32 %v2649, %v2656
    %s2659 = sadd.s32 %s1237, 96
    %s2660 = smul.addr %s2659, 4
    %s2661 = scalar_lea.vmem %s1, %s2660
    %v2662 = vld [vmem:[%s2661] sm:$0xf]
    %v2663 = vld [vmem:[%s2661 + $0x4] sm:$0xf]
    %v2664 = vunpack.c.l.bf16 %v2662
    %v2665 = vunpack.c.l.bf16 %v2663
    %v2666 = vmax.f32 %v2657, %v2664
    %v2667 = vmax.f32 %v2658, %v2665
    %s2668 = sadd.s32 %s1246, 96
    %s2669 = smul.addr %s2668, 4
    %s2670 = scalar_lea.vmem %s1, %s2669
    %v2671 = vld [vmem:[%s2670] sm:$0xf]
    %v2672 = vld [vmem:[%s2670 + $0x4] sm:$0xf]
    %v2673 = vunpack.c.l.bf16 %v2671
    %v2674 = vunpack.c.l.bf16 %v2672
    %v2675 = vmax.f32 %v2666, %v2673
    %v2676 = vmax.f32 %v2667, %v2674
    %s2677 = sadd.s32 %s1255, 96
    %s2678 = smul.addr %s2677, 4
    %s2679 = scalar_lea.vmem %s1, %s2678
    %v2680 = vld [vmem:[%s2679] sm:$0xf]
    %v2681 = vld [vmem:[%s2679 + $0x4] sm:$0xf]
    %v2682 = vunpack.c.l.bf16 %v2680
    %v2683 = vunpack.c.l.bf16 %v2681
    %v2684 = vmax.f32 %v2675, %v2682
    %v2685 = vmax.f32 %v2676, %v2683
    %s2686 = sadd.s32 %s1264, 96
    %s2687 = smul.addr %s2686, 4
    %s2688 = scalar_lea.vmem %s1, %s2687
    %v2689 = vld [vmem:[%s2688] sm:$0xf]
    %v2690 = vld [vmem:[%s2688 + $0x4] sm:$0xf]
    %v2691 = vunpack.c.l.bf16 %v2689
    %v2692 = vunpack.c.l.bf16 %v2690
    %v2693 = vmax.f32 %v2684, %v2691
    %v2694 = vmax.f32 %v2685, %v2692
    %v2695 = vsub.f32 %v2558, %v2693
    %v2696 = vsub.f32 %v2559, %v2694
    %v2697 = vmul.f32 %v2695, 1.442695
    %v2698 = vpow.pop %v2697
    %v2699 = vmul.f32 %v2696, 1.442695
    %v2700 = vpow.pop %v2699
    %v2701 = vadd.f32 %v2698, 0.0
    %v2702 = vadd.f32 %v2700, 0.0
    %v2703 = vand.u32 2147483647, %v2551
    %v2704 = vand.u32 2147483647, %v2552
    %v2705 = vsub.f32 1.0, %v2703
    %v2706 = vsub.f32 1.0, %v2704
    %v2707 = vmax.f32 %v2705, 0.0
    %v2708 = vmax.f32 %v2706, 0.0
    %v2709 = vmul.f32 %v2558, %v2707
    %v2710 = vmul.f32 %v2559, %v2708
    %v2711 = vadd.f32 %v2709, 0.0
    %v2712 = vadd.f32 %v2710, 0.0
    %v2713 = vsub.f32 %v2565, %v2693
    %v2714 = vsub.f32 %v2566, %v2694
    %v2715 = vmul.f32 %v2713, 1.442695
    %v2716 = vpow.pop %v2715
    %v2717 = vmul.f32 %v2714, 1.442695
    %v2718 = vpow.pop %v2717
    %v2719 = vadd.f32 %v2701, %v2716
    %v2720 = vadd.f32 %v2702, %v2718
    %v2721 = vsub.f32 %v2551, 1.0
    %v2722 = vsub.f32 %v2552, 1.0
    %v2723 = vand.u32 2147483647, %v2721
    %v2724 = vand.u32 2147483647, %v2722
    %v2725 = vsub.f32 1.0, %v2723
    %v2726 = vsub.f32 1.0, %v2724
    %v2727 = vmax.f32 %v2725, 0.0
    %v2728 = vmax.f32 %v2726, 0.0
    %v2729 = vmul.f32 %v2565, %v2727
    %v2730 = vmul.f32 %v2566, %v2728
    %v2731 = vadd.f32 %v2711, %v2729
    %v2732 = vadd.f32 %v2712, %v2730
    %v2733 = vsub.f32 %v2574, %v2693
    %v2734 = vsub.f32 %v2575, %v2694
    %v2735 = vmul.f32 %v2733, 1.442695
    %v2736 = vpow.pop %v2735
    %v2737 = vmul.f32 %v2734, 1.442695
    %v2738 = vpow.pop %v2737
    %v2739 = vadd.f32 %v2719, %v2736
    %v2740 = vadd.f32 %v2720, %v2738
    %v2741 = vsub.f32 %v2551, 2.0
    %v2742 = vsub.f32 %v2552, 2.0
    %v2743 = vand.u32 2147483647, %v2741
    %v2744 = vand.u32 2147483647, %v2742
    %v2745 = vsub.f32 1.0, %v2743
    %v2746 = vsub.f32 1.0, %v2744
    %v2747 = vmax.f32 %v2745, 0.0
    %v2748 = vmax.f32 %v2746, 0.0
    %v2749 = vmul.f32 %v2574, %v2747
    %v2750 = vmul.f32 %v2575, %v2748
    %v2751 = vadd.f32 %v2731, %v2749
    %v2752 = vadd.f32 %v2732, %v2750
    %v2753 = vsub.f32 %v2583, %v2693
    %v2754 = vsub.f32 %v2584, %v2694
    %v2755 = vmul.f32 %v2753, 1.442695
    %v2756 = vpow.pop %v2755
    %v2757 = vmul.f32 %v2754, 1.442695
    %v2758 = vpow.pop %v2757
    %v2759 = vadd.f32 %v2739, %v2756
    %v2760 = vadd.f32 %v2740, %v2758
    %v2761 = vsub.f32 %v2551, 3.0
    %v2762 = vsub.f32 %v2552, 3.0
    %v2763 = vand.u32 2147483647, %v2761
    %v2764 = vand.u32 2147483647, %v2762
    %v2765 = vsub.f32 1.0, %v2763
    %v2766 = vsub.f32 1.0, %v2764
    %v2767 = vmax.f32 %v2765, 0.0
    %v2768 = vmax.f32 %v2766, 0.0
    %v2769 = vmul.f32 %v2583, %v2767
    %v2770 = vmul.f32 %v2584, %v2768
    %v2771 = vadd.f32 %v2751, %v2769
    %v2772 = vadd.f32 %v2752, %v2770
    %v2773 = vsub.f32 %v2592, %v2693
    %v2774 = vsub.f32 %v2593, %v2694
    %v2775 = vmul.f32 %v2773, 1.442695
    %v2776 = vpow.pop %v2775
    %v2777 = vmul.f32 %v2774, 1.442695
    %v2778 = vpow.pop %v2777
    %v2779 = vadd.f32 %v2759, %v2776
    %v2780 = vadd.f32 %v2760, %v2778
    %v2781 = vsub.f32 %v2551, 4.0
    %v2782 = vsub.f32 %v2552, 4.0
    %v2783 = vand.u32 2147483647, %v2781
    %v2784 = vand.u32 2147483647, %v2782
    %v2785 = vsub.f32 1.0, %v2783
    %v2786 = vsub.f32 1.0, %v2784
    %v2787 = vmax.f32 %v2785, 0.0
    %v2788 = vmax.f32 %v2786, 0.0
    %v2789 = vmul.f32 %v2592, %v2787
    %v2790 = vmul.f32 %v2593, %v2788
    %v2791 = vadd.f32 %v2771, %v2789
    %v2792 = vadd.f32 %v2772, %v2790
    %v2793 = vsub.f32 %v2601, %v2693
    %v2794 = vsub.f32 %v2602, %v2694
    %v2795 = vmul.f32 %v2793, 1.442695
    %v2796 = vpow.pop %v2795
    %v2797 = vmul.f32 %v2794, 1.442695
    %v2798 = vpow.pop %v2797
    %v2799 = vadd.f32 %v2779, %v2796
    %v2800 = vadd.f32 %v2780, %v2798
    %v2801 = vsub.f32 %v2551, 5.0
    %v2802 = vsub.f32 %v2552, 5.0
    %v2803 = vand.u32 2147483647, %v2801
    %v2804 = vand.u32 2147483647, %v2802
    %v2805 = vsub.f32 1.0, %v2803
    %v2806 = vsub.f32 1.0, %v2804
    %v2807 = vmax.f32 %v2805, 0.0
    %v2808 = vmax.f32 %v2806, 0.0
    %v2809 = vmul.f32 %v2601, %v2807
    %v2810 = vmul.f32 %v2602, %v2808
    %v2811 = vadd.f32 %v2791, %v2809
    %v2812 = vadd.f32 %v2792, %v2810
    %v2813 = vsub.f32 %v2610, %v2693
    %v2814 = vsub.f32 %v2611, %v2694
    %v2815 = vmul.f32 %v2813, 1.442695
    %v2816 = vpow.pop %v2815
    %v2817 = vmul.f32 %v2814, 1.442695
    %v2818 = vpow.pop %v2817
    %v2819 = vadd.f32 %v2799, %v2816
    %v2820 = vadd.f32 %v2800, %v2818
    %v2821 = vsub.f32 %v2551, 6.0
    %v2822 = vsub.f32 %v2552, 6.0
    %v2823 = vand.u32 2147483647, %v2821
    %v2824 = vand.u32 2147483647, %v2822
    %v2825 = vsub.f32 1.0, %v2823
    %v2826 = vsub.f32 1.0, %v2824
    %v2827 = vmax.f32 %v2825, 0.0
    %v2828 = vmax.f32 %v2826, 0.0
    %v2829 = vmul.f32 %v2610, %v2827
    %v2830 = vmul.f32 %v2611, %v2828
    %v2831 = vadd.f32 %v2811, %v2829
    %v2832 = vadd.f32 %v2812, %v2830
    %v2833 = vsub.f32 %v2619, %v2693
    %v2834 = vsub.f32 %v2620, %v2694
    %v2835 = vmul.f32 %v2833, 1.442695
    %v2836 = vpow.pop %v2835
    %v2837 = vmul.f32 %v2834, 1.442695
    %v2838 = vpow.pop %v2837
    %v2839 = vadd.f32 %v2819, %v2836
    %v2840 = vadd.f32 %v2820, %v2838
    %v2841 = vsub.f32 %v2551, 7.0
    %v2842 = vsub.f32 %v2552, 7.0
    %v2843 = vand.u32 2147483647, %v2841
    %v2844 = vand.u32 2147483647, %v2842
    %v2845 = vsub.f32 1.0, %v2843
    %v2846 = vsub.f32 1.0, %v2844
    %v2847 = vmax.f32 %v2845, 0.0
    %v2848 = vmax.f32 %v2846, 0.0
    %v2849 = vmul.f32 %v2619, %v2847
    %v2850 = vmul.f32 %v2620, %v2848
    %v2851 = vadd.f32 %v2831, %v2849
    %v2852 = vadd.f32 %v2832, %v2850
    %v2853 = vsub.f32 %v2628, %v2693
    %v2854 = vsub.f32 %v2629, %v2694
    %v2855 = vmul.f32 %v2853, 1.442695
    %v2856 = vpow.pop %v2855
    %v2857 = vmul.f32 %v2854, 1.442695
    %v2858 = vpow.pop %v2857
    %v2859 = vadd.f32 %v2839, %v2856
    %v2860 = vadd.f32 %v2840, %v2858
    %v2861 = vsub.f32 %v2551, 8.0
    %v2862 = vsub.f32 %v2552, 8.0
    %v2863 = vand.u32 2147483647, %v2861
    %v2864 = vand.u32 2147483647, %v2862
    %v2865 = vsub.f32 1.0, %v2863
    %v2866 = vsub.f32 1.0, %v2864
    %v2867 = vmax.f32 %v2865, 0.0
    %v2868 = vmax.f32 %v2866, 0.0
    %v2869 = vmul.f32 %v2628, %v2867
    %v2870 = vmul.f32 %v2629, %v2868
    %v2871 = vadd.f32 %v2851, %v2869
    %v2872 = vadd.f32 %v2852, %v2870
    %v2873 = vsub.f32 %v2637, %v2693
    %v2874 = vsub.f32 %v2638, %v2694
    %v2875 = vmul.f32 %v2873, 1.442695
    %v2876 = vpow.pop %v2875
    %v2877 = vmul.f32 %v2874, 1.442695
    %v2878 = vpow.pop %v2877
    %v2879 = vadd.f32 %v2859, %v2876
    %v2880 = vadd.f32 %v2860, %v2878
    %v2881 = vsub.f32 %v2551, 9.0
    %v2882 = vsub.f32 %v2552, 9.0
    %v2883 = vand.u32 2147483647, %v2881
    %v2884 = vand.u32 2147483647, %v2882
    %v2885 = vsub.f32 1.0, %v2883
    %v2886 = vsub.f32 1.0, %v2884
    %v2887 = vmax.f32 %v2885, 0.0
    %v2888 = vmax.f32 %v2886, 0.0
    %v2889 = vmul.f32 %v2637, %v2887
    %v2890 = vmul.f32 %v2638, %v2888
    %v2891 = vadd.f32 %v2871, %v2889
    %v2892 = vadd.f32 %v2872, %v2890
    %v2893 = vsub.f32 %v2646, %v2693
    %v2894 = vsub.f32 %v2647, %v2694
    %v2895 = vmul.f32 %v2893, 1.442695
    %v2896 = vpow.pop %v2895
    %v2897 = vmul.f32 %v2894, 1.442695
    %v2898 = vpow.pop %v2897
    %v2899 = vadd.f32 %v2879, %v2896
    %v2900 = vadd.f32 %v2880, %v2898
    %v2901 = vsub.f32 %v2551, 10.0
    %v2902 = vsub.f32 %v2552, 10.0
    %v2903 = vand.u32 2147483647, %v2901
    %v2904 = vand.u32 2147483647, %v2902
    %v2905 = vsub.f32 1.0, %v2903
    %v2906 = vsub.f32 1.0, %v2904
    %v2907 = vmax.f32 %v2905, 0.0
    %v2908 = vmax.f32 %v2906, 0.0
    %v2909 = vmul.f32 %v2646, %v2907
    %v2910 = vmul.f32 %v2647, %v2908
    %v2911 = vadd.f32 %v2891, %v2909
    %v2912 = vadd.f32 %v2892, %v2910
    %v2913 = vsub.f32 %v2655, %v2693
    %v2914 = vsub.f32 %v2656, %v2694
    %v2915 = vmul.f32 %v2913, 1.442695
    %v2916 = vpow.pop %v2915
    %v2917 = vmul.f32 %v2914, 1.442695
    %v2918 = vpow.pop %v2917
    %v2919 = vadd.f32 %v2899, %v2916
    %v2920 = vadd.f32 %v2900, %v2918
    %v2921 = vsub.f32 %v2551, 11.0
    %v2922 = vsub.f32 %v2552, 11.0
    %v2923 = vand.u32 2147483647, %v2921
    %v2924 = vand.u32 2147483647, %v2922
    %v2925 = vsub.f32 1.0, %v2923
    %v2926 = vsub.f32 1.0, %v2924
    %v2927 = vmax.f32 %v2925, 0.0
    %v2928 = vmax.f32 %v2926, 0.0
    %v2929 = vmul.f32 %v2655, %v2927
    %v2930 = vmul.f32 %v2656, %v2928
    %v2931 = vadd.f32 %v2911, %v2929
    %v2932 = vadd.f32 %v2912, %v2930
    %v2933 = vsub.f32 %v2664, %v2693
    %v2934 = vsub.f32 %v2665, %v2694
    %v2935 = vmul.f32 %v2933, 1.442695
    %v2936 = vpow.pop %v2935
    %v2937 = vmul.f32 %v2934, 1.442695
    %v2938 = vpow.pop %v2937
    %v2939 = vadd.f32 %v2919, %v2936
    %v2940 = vadd.f32 %v2920, %v2938
    %v2941 = vsub.f32 %v2551, 12.0
    %v2942 = vsub.f32 %v2552, 12.0
    %v2943 = vand.u32 2147483647, %v2941
    %v2944 = vand.u32 2147483647, %v2942
    %v2945 = vsub.f32 1.0, %v2943
    %v2946 = vsub.f32 1.0, %v2944
    %v2947 = vmax.f32 %v2945, 0.0
    %v2948 = vmax.f32 %v2946, 0.0
    %v2949 = vmul.f32 %v2664, %v2947
    %v2950 = vmul.f32 %v2665, %v2948
    %v2951 = vadd.f32 %v2931, %v2949
    %v2952 = vadd.f32 %v2932, %v2950
    %v2953 = vsub.f32 %v2673, %v2693
    %v2954 = vsub.f32 %v2674, %v2694
    %v2955 = vmul.f32 %v2953, 1.442695
    %v2956 = vpow.pop %v2955
    %v2957 = vmul.f32 %v2954, 1.442695
    %v2958 = vpow.pop %v2957
    %v2959 = vadd.f32 %v2939, %v2956
    %v2960 = vadd.f32 %v2940, %v2958
    %v2961 = vsub.f32 %v2551, 13.0
    %v2962 = vsub.f32 %v2552, 13.0
    %v2963 = vand.u32 2147483647, %v2961
    %v2964 = vand.u32 2147483647, %v2962
    %v2965 = vsub.f32 1.0, %v2963
    %v2966 = vsub.f32 1.0, %v2964
    %v2967 = vmax.f32 %v2965, 0.0
    %v2968 = vmax.f32 %v2966, 0.0
    %v2969 = vmul.f32 %v2673, %v2967
    %v2970 = vmul.f32 %v2674, %v2968
    %v2971 = vadd.f32 %v2951, %v2969
    %v2972 = vadd.f32 %v2952, %v2970
    %v2973 = vsub.f32 %v2682, %v2693
    %v2974 = vsub.f32 %v2683, %v2694
    %v2975 = vmul.f32 %v2973, 1.442695
    %v2976 = vpow.pop %v2975
    %v2977 = vmul.f32 %v2974, 1.442695
    %v2978 = vpow.pop %v2977
    %v2979 = vadd.f32 %v2959, %v2976
    %v2980 = vadd.f32 %v2960, %v2978
    %v2981 = vsub.f32 %v2551, 14.0
    %v2982 = vsub.f32 %v2552, 14.0
    %v2983 = vand.u32 2147483647, %v2981
    %v2984 = vand.u32 2147483647, %v2982
    %v2985 = vsub.f32 1.0, %v2983
    %v2986 = vsub.f32 1.0, %v2984
    %v2987 = vmax.f32 %v2985, 0.0
    %v2988 = vmax.f32 %v2986, 0.0
    %v2989 = vmul.f32 %v2682, %v2987
    %v2990 = vmul.f32 %v2683, %v2988
    %v2991 = vadd.f32 %v2971, %v2989
    %v2992 = vadd.f32 %v2972, %v2990
    %v2993 = vsub.f32 %v2691, %v2693
    %v2994 = vsub.f32 %v2692, %v2694
    %v2995 = vmul.f32 %v2993, 1.442695
    %v2996 = vpow.pop %v2995
    %v2997 = vmul.f32 %v2994, 1.442695
    %v2998 = vpow.pop %v2997
    %v2999 = vadd.f32 %v2979, %v2996
    %v3000 = vadd.f32 %v2980, %v2998
    %v3001 = vsub.f32 %v2551, 15.0
    %v3002 = vsub.f32 %v2552, 15.0
    %v3003 = vand.u32 2147483647, %v3001
    %v3004 = vand.u32 2147483647, %v3002
    %v3005 = vsub.f32 1.0, %v3003
    %v3006 = vsub.f32 1.0, %v3004
    %v3007 = vmax.f32 %v3005, 0.0
    %v3008 = vmax.f32 %v3006, 0.0
    %v3009 = vmul.f32 %v2691, %v3007
    %v3010 = vmul.f32 %v2692, %v3008
    %v3011 = vadd.f32 %v2991, %v3009
    %v3012 = vadd.f32 %v2992, %v3010
    %v3013 = vlog2.pop %v2999
    %v3014 = vmul.f32 %v3013, 0.6931472
    %v3015 = vlog2.pop %v3000
    %v3016 = vmul.f32 %v3015, 0.6931472
    %v3017 = vadd.f32 %v3014, %v2693
    %v3018 = vadd.f32 %v3016, %v2694
    %v3019 = vsub.f32 %v3017, %v3011
    %v3020 = vsub.f32 %v3018, %v3012
    %v3021 = vadd.f32 %v2547, %v3019
    %v3022 = vadd.f32 %v2548, %v3020
    %v3023 = vmul.f32 %v3021, 0.25
    %v3024 = vmul.f32 %v3022, 0.25
    %v3025 = vmul.f32 %v3023, %v39
    %v3026 = vmul.f32 %v3024, %v40
    %v3027 = vsel %vm37, %v3025, 0.0
    %v3028 = vsel %vm38, %v3026, 0.0
    %v3029 = vadd.f32 %v3027, 0.0
    %v3030 = vadd.f32 %v3028, 0.0
    %3031 = vst [vmem:[%s5] sm:$0xff] %v1108
    %3032 = vst [vmem:[%s5 + $0x8] sm:$0xff] %v1109
    %s3033 = scalar_lea.vmem %s5, 16
    %3034 = vst [vmem:[%s3033] sm:$0xff] %v3029
    %3035 = vst [vmem:[%s3033 + $0x8] sm:$0xff] %v3030
  $region25: #{rotated_bbox_loss.1} parent=0 // pred_fallthru
    _
  // Predicated region
  $region26: #{rotated_bbox_loss.1} parent=0 // pred_check
    _
  $region27: #{rotated_bbox_loss.1} parent=0 // pred_check_branch
    %3037 = sbr.rel (0) target = $region29
  $region28: #{rotated_bbox_loss.1} parent=0 // pred_region
    _
  $region29: #{rotated_bbox_loss.1} parent=0 // pred_fallthru
    _
  // Predicated region
  $region30: #{rotated_bbox_loss.1} parent=0 // pred_check
    _
  $region31: #{rotated_bbox_loss.1} parent=0 // pred_check_branch
    %3039 = sbr.rel (0) target = $region33
  $region32: #{rotated_bbox_loss.1} parent=0 // pred_region
    _
  $region33: #{rotated_bbox_loss.1} parent=0 // pred_fallthru
    _

</llo_original>
